<compile_context>
chip_gen: v7x
topology: tpu7x:2x2x1
jax: 0.10.0
libtpu: 0.0.40
codegen_flags: <defaults>
</compile_context>

<pallas_src>
import functools

import jax
import jax.numpy as jnp
import numpy as np
from jax.experimental import pallas as pl
from jax.experimental.pallas import tpu as pltpu

LN_EPS = 1e-5  # PyTorch LayerNorm default


# ----------------------------- Pallas kernel ---------------------------------
def _nonlinear_fusion_kernel(
    t_ref, q_ref, a_ref,            # (TM, H) bf16 row tiles: text / quad / hier_attn features
    wt_ref, wq_ref, wa_ref,         # bf16 packed weights (H,2H), (H,2H), (H,5H), stored (in,out)
    bt_ref, bq_ref, ba_ref,         # f32 packed biases (1,2H), (1,2H), (1,5H)
    w1_ref, w2_ref,                 # bf16 fusion Linear(3H->4H) as (3H,4H); Linear(4H->3H) as (4H,3H)
    p3_ref, p4_ref,                 # f32 (5,3H): ln1_g, ln1_b, lnf2_g, lnf2_b, b2 ; (3,4H): lnf1_g, lnf1_b, b1
    o_ref,                          # (TM, 3H) f32 output tile
    *, H,
):
    f32 = jnp.float32
    bf16 = jnp.bfloat16

    def mm(x, w_ref):
        # bf16 operands, f32 accumulation on the MXU
        return jnp.dot(x.astype(bf16), w_ref[...], preferred_element_type=f32)

    def layernorm(x, g, b):
        # two-pass stats (mean, then centered variance) for precision
        d = x.shape[-1]
        mean = jnp.sum(x, axis=-1, keepdims=True) / d
        cent = x - mean
        var = jnp.sum(cent * cent, axis=-1, keepdims=True) / d
        return cent * jax.lax.rsqrt(var + LN_EPS) * g + b

    t = t_ref[...]
    q = q_ref[...]
    a = a_ref[...]

    # --- 3 wide projections replace 9 separate HxH Linears ---
    pt = mm(t, wt_ref) + bt_ref[...]     # (TM, 2H): [gate_text | transform_text]
    pq = mm(q, wq_ref) + bq_ref[...]     # (TM, 2H): [gate_quad | transform_quad]
    pa = mm(a, wa_ref) + ba_ref[...]     # (TM, 5H): [gate_attn | transform_attn | method | result | contribution]

    # --- aspect-gated fusion hoisted early so pa / t / q / a die before the big matmuls ---
    aspect = (jax.nn.sigmoid(pa[:, 2 * H:3 * H]) * t.astype(f32)     # 'method'       * text_features
              + jax.nn.sigmoid(pa[:, 3 * H:4 * H]) * q.astype(f32)   # 'result'       * quad_features
              + jax.nn.sigmoid(pa[:, 4 * H:5 * H]) * a.astype(f32))  # 'contribution' * hier_attn_features

    c0 = jax.nn.sigmoid(pt[:, 0:H]) * pt[:, H:2 * H]          # text_gated
    c1 = jax.nn.sigmoid(pq[:, 0:H]) * pq[:, H:2 * H]          # quad_gated
    c2 = jax.nn.sigmoid(pa[:, 0:H]) * pa[:, H:2 * H]          # attn_gated

    # param unpack
    ln1_g, ln1_b = p3_ref[0:1, :], p3_ref[1:2, :]
    lnf2_g, lnf2_b = p3_ref[2:3, :], p3_ref[3:4, :]
    b2 = p3_ref[4:5, :]
    lnf1_g, lnf1_b = p4_ref[0:1, :], p4_ref[1:2, :]
    b1 = p4_ref[2:3, :]

    # --- layer_norm over cat([text_gated, quad_gated, attn_gated]) (width 3H) ---
    combined = jnp.concatenate([c0, c1, c2], axis=-1)          # (TM, 3H)
    normalized = layernorm(combined, ln1_g, ln1_b)

    # --- fusion_layer pass 1: Linear(3H->4H), LN(4H), ReLU, Dropout(id), Linear(4H->3H), LN(3H) ---
    h1 = mm(normalized, w1_ref) + b1                           # single long-K matmul
    r1 = jnp.maximum(layernorm(h1, lnf1_g, lnf1_b), 0.0)
    h2 = mm(r1, w2_ref) + b2
    fused = layernorm(h2, lnf2_g, lnf2_b)                      # (TM, 3H)

    # --- fusion_layer pass 2 on cat([fused (3H), aspect (H)]) = 4H wide ---
    # TODO(synk): reference reuses fusion_layer whose first Linear expects 3H input and would
    # shape-error on this 4H concat; we skip that first Linear and run the remaining stack.
    cat2 = jnp.concatenate([fused, aspect], axis=-1)           # (TM, 4H)
    r2 = jnp.maximum(layernorm(cat2, lnf1_g, lnf1_b), 0.0)
    h3 = mm(r2, w2_ref) + b2
    o_ref[...] = layernorm(h3, lnf2_g, lnf2_b).astype(o_ref.dtype)


# ------------------------------- helpers --------------------------------------
def _round_up(x, m):
    return ((x + m - 1) // m) * m


def _tpu_vmem_capacity_bytes():
    """Physical VMEM per TensorCore; conservative 128 MiB default if the query fails."""
    try:
        info = pltpu.get_tpu_info()
        cap = getattr(info, "vmem_capacity_bytes", None)
        if cap:
            return int(cap)
    except Exception:
        pass
    return 128 * 1024 * 1024


def _choose_tile(n, tm_max):
    """Big row tiles (multiple of 8); keep >= 2 grid steps so both v7x TCs get work."""
    tm = min(tm_max, _round_up(n, 8))
    if n > 8 and (_round_up(n, tm) // tm) < 2:
        tm = _round_up(-(-n // 2), 8)
    return tm


def _vmem_limit_bytes(tm, H, cap, weight_bufs):
    """Budget from the actual footprint, clamped below physical VMEM (no 100 MiB asks on v7x)."""
    weights = weight_bufs * 33 * H * H * 2            # bf16 packed weights (2+2+5+12+12)*H^2
    small = weight_bufs * (9 * H + 15 * H + 12 * H) * 4  # packed biases + LN params (f32)
    act_in = 2 * 3 * tm * H * 2                       # double-buffered bf16 input row tiles
    act_out = 2 * tm * 3 * H * 4                      # double-buffered f32 output tile
    temps = 24 * tm * H * 4                           # live f32 temporaries headroom
    need = weights + small + act_in + act_out + temps
    return int(min(int(0.87 * cap), max(need, 16 * 1024 * 1024)))


# ------------------------------- wrapper --------------------------------------
def nonlinear_fusion(text, quad, hier, params, *, tm_max=None):
    """text/quad/hier: [B, S, H] float32. Returns [B, S, 3H] float32."""
    B, S, H = text.shape
    N = B * S
    wt, wq, wa, bt, bq, ba, w1, w2, p3, p4 = params

    cap = _tpu_vmem_capacity_bytes()
    if tm_max is None:
        # v7x has 64 MiB VMEM / TC -> smaller row tiles; v5e/v6e (128 MiB) keep tm=512.
        tm_max = 256 if cap <= 80 * 1024 * 1024 else 512

    tm = _choose_tile(N, tm_max)
    Np = _round_up(N, tm)
    grid = (Np // tm,)

    def flat_pad(x):
        # bf16 activation DMA: inputs are only used as bf16 MXU operands (aspect sum upcasts)
        x = x.reshape(N, H).astype(jnp.bfloat16)
        if Np != N:
            x = jnp.pad(x, ((0, Np - N), (0, 0)))   # zero rows are benign; sliced off below
        return x

    t2, q2, a2 = flat_pad(text), flat_pad(quad), flat_pad(hier)

    kernel = functools.partial(_nonlinear_fusion_kernel, H=H)
    row = lambda i: (i, 0)
    rep = lambda i: (0, 0)

    cost = pl.CostEstimate(
        flops=2 * 45 * H * H * Np,                                # 6 packed matmuls
        transcendentals=(6 * H + 5) * Np,                         # sigmoids + LN rsqrt
        bytes_accessed=3 * Np * H * 2 + Np * 3 * H * 4            # activations in (bf16) / out (f32)
        + 33 * H * H * 2 + 45 * H * 4,                            # one pass over weights + params
    )

    def run(weight_bufs):
        # Grid-invariant operands: single-buffer them (index_map is constant, so a second
        # buffer only wastes VMEM).  weight_bufs=2 is the no-pipeline_mode fallback.
        if weight_bufs == 1:
            wspec = lambda shape: pl.BlockSpec(shape, rep, pipeline_mode=pl.Buffered(1))
        else:
            wspec = lambda shape: pl.BlockSpec(shape, rep)
        return pl.pallas_call(
            kernel,
            out_shape=jax.ShapeDtypeStruct((Np, 3 * H), jnp.float32),
            grid_spec=pltpu.PrefetchScalarGridSpec(
                num_scalar_prefetch=0,
                grid=grid,
                in_specs=[
                    pl.BlockSpec((tm, H), row),          # text rows
                    pl.BlockSpec((tm, H), row),          # quad rows
                    pl.BlockSpec((tm, H), row),          # hier rows
                    wspec((H, 2 * H)),                   # wt
                    wspec((H, 2 * H)),                   # wq
                    wspec((H, 5 * H)),                   # wa
                    wspec((1, 2 * H)),                   # bt
                    wspec((1, 2 * H)),                   # bq
                    wspec((1, 5 * H)),                   # ba
                    wspec((3 * H, 4 * H)),               # w1
                    wspec((4 * H, 3 * H)),               # w2
                    wspec((5, 3 * H)),                   # p3
                    wspec((3, 4 * H)),                   # p4
                ],
                out_specs=pl.BlockSpec((tm, 3 * H), row),
            ),
            compiler_params=pltpu.CompilerParams(
                dimension_semantics=("parallel",),
                vmem_limit_bytes=_vmem_limit_bytes(tm, H, cap, weight_bufs),
            ),
            cost_estimate=cost,
        )(t2, q2, a2, wt, wq, wa, bt, bq, ba, w1, w2, p3, p4)

    try:
        out = run(1)
    except Exception:
        # Fallback for jax versions that reject pipeline_mode=pl.Buffered(1).
        out = run(2)
    return out[:N].reshape(B, S, 3 * H)


# ------------------------ deterministic parameter init -------------------------
def init_params(key, H):
    ks = jax.random.split(key, 16)
    f32, bf16 = jnp.float32, jnp.bfloat16
    # packed per-input projection weights, stored (in, out) i.e. transposed vs. PyTorch:
    #   wt = [gate_text | transform_text]                                        (H, 2H)
    #   wq = [gate_quad | transform_quad]                                        (H, 2H)
    #   wa = [gate_attn | transform_attn | aspect_method | aspect_result | aspect_contribution]  (H, 5H)
    wt = (0.05 * jax.random.normal(ks[0], (H, 2 * H), f32)).astype(bf16)
    wq = (0.05 * jax.random.normal(ks[1], (H, 2 * H), f32)).astype(bf16)
    wa = (0.05 * jax.random.normal(ks[2], (H, 5 * H), f32)).astype(bf16)
    bt = 0.02 * jax.random.normal(ks[3], (1, 2 * H), f32)
    bq = 0.02 * jax.random.normal(ks[4], (1, 2 * H), f32)
    ba = 0.02 * jax.random.normal(ks[5], (1, 5 * H), f32)
    w1 = (0.05 * jax.random.normal(ks[6], (3 * H, 4 * H), f32)).astype(bf16)
    w2 = (0.05 * jax.random.normal(ks[7], (4 * H, 3 * H), f32)).astype(bf16)
    b1 = 0.02 * jax.random.normal(ks[8], (4 * H,), f32)
    b2 = 0.02 * jax.random.normal(ks[9], (3 * H,), f32)
    ln1_g = 1.0 + 0.05 * jax.random.normal(ks[10], (3 * H,), f32)
    ln1_b = 0.02 * jax.random.normal(ks[11], (3 * H,), f32)
    lnf1_g = 1.0 + 0.05 * jax.random.normal(ks[12], (4 * H,), f32)
    lnf1_b = 0.02 * jax.random.normal(ks[13], (4 * H,), f32)
    lnf2_g = 1.0 + 0.05 * jax.random.normal(ks[14], (3 * H,), f32)
    lnf2_b = 0.02 * jax.random.normal(ks[15], (3 * H,), f32)
    p3 = jnp.stack([ln1_g, ln1_b, lnf2_g, lnf2_b, b2])   # (5, 3H) f32
    p4 = jnp.stack([lnf1_g, lnf1_b, b1])                 # (3, 4H) f32
    return (wt, wq, wa, bt, bq, ba, w1, w2, p3, p4)


# ------------------------------ pure-JAX reference -----------------------------
def reference(text, quad, hier, params):
    """Mixed-precision reference matching the kernel: bf16 activations/matmul operands,
    f32 accumulation and elementwise/LayerNorm math."""
    wt, wq, wa, bt, bq, ba, w1, w2, p3, p4 = params
    H = text.shape[-1]
    f32, bf16 = jnp.float32, jnp.bfloat16
    # mirror the kernel's bf16 activation DMA
    text = text.astype(bf16).astype(f32)
    quad = quad.astype(bf16).astype(f32)
    hier = hier.astype(bf16).astype(f32)
    ln1_g, ln1_b, lnf2_g, lnf2_b, b2 = (p3[i] for i in range(5))
    lnf1_g, lnf1_b, b1 = (p4[i] for i in range(3))

    def mm(x, w):
        return jnp.dot(x.astype(bf16), w.astype(bf16), preferred_element_type=f32)

    def ln(x, g, b):
        m = x.mean(-1, keepdims=True)
        v = ((x - m) ** 2).mean(-1, keepdims=True)
        return (x - m) / jnp.sqrt(v + LN_EPS) * g + b

    def fusion_tail(x4h):   # LN(4H) -> ReLU -> Linear(4H->3H) -> LN(3H)
        r = jnp.maximum(ln(x4h, lnf1_g, lnf1_b), 0.0)
        return ln(mm(r, w2) + b2, lnf2_g, lnf2_b)

    pt = mm(text, wt) + bt
    pq = mm(quad, wq) + bq
    pa = mm(hier, wa) + ba
    c0 = jax.nn.sigmoid(pt[..., 0:H]) * pt[..., H:2 * H]
    c1 = jax.nn.sigmoid(pq[..., 0:H]) * pq[..., H:2 * H]
    c2 = jax.nn.sigmoid(pa[..., 0:H]) * pa[..., H:2 * H]
    combined = jnp.concatenate([c0, c1, c2], axis=-1)
    normalized = ln(combined, ln1_g, ln1_b)
    fused = fusion_tail(mm(normalized, w1) + b1)
    aspect = (jax.nn.sigmoid(pa[..., 2 * H:3 * H]) * text
              + jax.nn.sigmoid(pa[..., 3 * H:4 * H]) * quad
              + jax.nn.sigmoid(pa[..., 4 * H:5 * H]) * hier)
    return fusion_tail(jnp.concatenate([fused, aspect], axis=-1))


# ----------------------------------- main --------------------------------------
if __name__ == "__main__":
    B, S, H = 2, 8, 32
    key = jax.random.PRNGKey(0)
    k_t, k_q, k_a, k_p = jax.random.split(key, 4)
    text = jax.random.normal(k_t, (B, S, H), jnp.float32)
    quad = jax.random.normal(k_q, (B, S, H), jnp.float32)
    hier = jax.random.normal(k_a, (B, S, H), jnp.float32)
    params = init_params(k_p, H)

    out = nonlinear_fusion(text, quad, hier, params)
    out = jax.block_until_ready(out)

    ref = reference(text, quad, hier, params)
    np.testing.assert_allclose(np.asarray(out), np.asarray(ref), rtol=2e-2, atol=2e-2)
    print("KERNEL_OK")
</pallas_src>

<mosaic_0001>
module attributes {stable_mosaic.version = 11 : i64} {
  func.func @_nonlinear_fusion_kernel(%arg0: i32, %arg1: memref<8x32xbf16, #tpu.memory_space<vmem>>, %arg2: memref<8x32xbf16, #tpu.memory_space<vmem>>, %arg3: memref<8x32xbf16, #tpu.memory_space<vmem>>, %arg4: memref<32x64xbf16, #tpu.memory_space<vmem>>, %arg5: memref<32x64xbf16, #tpu.memory_space<vmem>>, %arg6: memref<32x160xbf16, #tpu.memory_space<vmem>>, %arg7: memref<1x64xf32, #tpu.memory_space<vmem>>, %arg8: memref<1x64xf32, #tpu.memory_space<vmem>>, %arg9: memref<1x160xf32, #tpu.memory_space<vmem>>, %arg10: memref<96x128xbf16, #tpu.memory_space<vmem>>, %arg11: memref<128x96xbf16, #tpu.memory_space<vmem>>, %arg12: memref<5x96xf32, #tpu.memory_space<vmem>>, %arg13: memref<3x128xf32, #tpu.memory_space<vmem>>, %arg14: memref<8x96xf32, #tpu.memory_space<vmem>>) attributes {dimension_semantics = [#tpu.dimension_semantics<parallel>], iteration_bounds = array<i64: 2>, scalar_prefetch = 0 : i64, scratch_operands = 0 : i64, tpu.core_type = #tpu.core_type<tc>, window_params = [{transform_indices = @transform_0, window_bounds = array<i64: 8, 32>}, {transform_indices = @transform_1, window_bounds = array<i64: 8, 32>}, {transform_indices = @transform_2, window_bounds = array<i64: 8, 32>}, {pipeline_mode = #tpu.pipeline_mode<synchronous>, transform_indices = @transform_3, window_bounds = array<i64: 32, 64>}, {pipeline_mode = #tpu.pipeline_mode<synchronous>, transform_indices = @transform_4, window_bounds = array<i64: 32, 64>}, {pipeline_mode = #tpu.pipeline_mode<synchronous>, transform_indices = @transform_5, window_bounds = array<i64: 32, 160>}, {pipeline_mode = #tpu.pipeline_mode<synchronous>, transform_indices = @transform_6, window_bounds = array<i64: 1, 64>}, {pipeline_mode = #tpu.pipeline_mode<synchronous>, transform_indices = @transform_7, window_bounds = array<i64: 1, 64>}, {pipeline_mode = #tpu.pipeline_mode<synchronous>, transform_indices = @transform_8, window_bounds = array<i64: 1, 160>}, {pipeline_mode = #tpu.pipeline_mode<synchronous>, transform_indices = @transform_9, window_bounds = array<i64: 96, 128>}, {pipeline_mode = #tpu.pipeline_mode<synchronous>, transform_indices = @transform_10, window_bounds = array<i64: 128, 96>}, {pipeline_mode = #tpu.pipeline_mode<synchronous>, transform_indices = @transform_11, window_bounds = array<i64: 5, 96>}, {pipeline_mode = #tpu.pipeline_mode<synchronous>, transform_indices = @transform_12, window_bounds = array<i64: 3, 128>}, {transform_indices = @transform_13, window_bounds = array<i64: 8, 96>}]} {
    %c0 = arith.constant 0 : index
    %c0_0 = arith.constant 0 : index
    %0 = vector.load %arg1[%c0, %c0_0] : memref<8x32xbf16, #tpu.memory_space<vmem>>, vector<8x32xbf16>
    %c0_1 = arith.constant 0 : index
    %c0_2 = arith.constant 0 : index
    %1 = vector.load %arg2[%c0_1, %c0_2] : memref<8x32xbf16, #tpu.memory_space<vmem>>, vector<8x32xbf16>
    %c0_3 = arith.constant 0 : index
    %c0_4 = arith.constant 0 : index
    %2 = vector.load %arg3[%c0_3, %c0_4] : memref<8x32xbf16, #tpu.memory_space<vmem>>, vector<8x32xbf16>
    %c0_5 = arith.constant 0 : index
    %c0_6 = arith.constant 0 : index
    %3 = vector.load %arg4[%c0_5, %c0_6] : memref<32x64xbf16, #tpu.memory_space<vmem>>, vector<32x64xbf16>
    %cst = arith.constant dense<0.000000e+00> : vector<8x64xf32>
    %4 = tpu.matmul %0, %3, %cst {dimension_numbers = #tpu.dot_dimension_numbers<[1], [0], [0], [1], [0, 0, 1, 1], [], []>} : vector<8x32xbf16>, vector<32x64xbf16>, vector<8x64xf32> -> vector<8x64xf32>
    %c0_7 = arith.constant 0 : index
    %c0_8 = arith.constant 0 : index
    %5 = vector.load %arg7[%c0_7, %c0_8] : memref<1x64xf32, #tpu.memory_space<vmem>>, vector<1x64xf32>
    %6 = vector.broadcast %5 : vector<1x64xf32> to vector<8x64xf32>
    %7 = arith.addf %4, %6 : vector<8x64xf32>
    %c0_9 = arith.constant 0 : index
    %c0_10 = arith.constant 0 : index
    %8 = vector.load %arg5[%c0_9, %c0_10] : memref<32x64xbf16, #tpu.memory_space<vmem>>, vector<32x64xbf16>
    %cst_11 = arith.constant dense<0.000000e+00> : vector<8x64xf32>
    %9 = tpu.matmul %1, %8, %cst_11 {dimension_numbers = #tpu.dot_dimension_numbers<[1], [0], [0], [1], [0, 0, 1, 1], [], []>} : vector<8x32xbf16>, vector<32x64xbf16>, vector<8x64xf32> -> vector<8x64xf32>
    %c0_12 = arith.constant 0 : index
    %c0_13 = arith.constant 0 : index
    %10 = vector.load %arg8[%c0_12, %c0_13] : memref<1x64xf32, #tpu.memory_space<vmem>>, vector<1x64xf32>
    %11 = vector.broadcast %10 : vector<1x64xf32> to vector<8x64xf32>
    %12 = arith.addf %9, %11 : vector<8x64xf32>
    %c0_14 = arith.constant 0 : index
    %c0_15 = arith.constant 0 : index
    %13 = vector.load %arg6[%c0_14, %c0_15] : memref<32x160xbf16, #tpu.memory_space<vmem>>, vector<32x160xbf16>
    %cst_16 = arith.constant dense<0.000000e+00> : vector<8x160xf32>
    %14 = tpu.matmul %2, %13, %cst_16 {dimension_numbers = #tpu.dot_dimension_numbers<[1], [0], [0], [1], [0, 0, 1, 1], [], []>} : vector<8x32xbf16>, vector<32x160xbf16>, vector<8x160xf32> -> vector<8x160xf32>
    %c0_17 = arith.constant 0 : index
    %c0_18 = arith.constant 0 : index
    %15 = vector.load %arg9[%c0_17, %c0_18] : memref<1x160xf32, #tpu.memory_space<vmem>>, vector<1x160xf32>
    %16 = vector.broadcast %15 : vector<1x160xf32> to vector<8x160xf32>
    %17 = arith.addf %14, %16 : vector<8x160xf32>
    %18 = vector.extract_strided_slice %17 {offsets = [0, 64], sizes = [8, 32], strides = [1, 1]} : vector<8x160xf32> to vector<8x32xf32>
    %19 = arith.negf %18 : vector<8x32xf32>
    %20 = math.exp %19 : vector<8x32xf32>
    %cst_19 = arith.constant 1.000000e+00 : f32
    %21 = vector.broadcast %cst_19 : f32 to vector<8x32xf32>
    %22 = arith.addf %21, %20 : vector<8x32xf32>
    %23 = arith.divf %21, %22 : vector<8x32xf32>
    %24 = arith.extf %0 : vector<8x32xbf16> to vector<8x32xf32>
    %25 = arith.mulf %23, %24 : vector<8x32xf32>
    %26 = vector.extract_strided_slice %17 {offsets = [0, 96], sizes = [8, 32], strides = [1, 1]} : vector<8x160xf32> to vector<8x32xf32>
    %27 = arith.negf %26 : vector<8x32xf32>
    %28 = math.exp %27 : vector<8x32xf32>
    %cst_20 = arith.constant 1.000000e+00 : f32
    %29 = vector.broadcast %cst_20 : f32 to vector<8x32xf32>
    %30 = arith.addf %29, %28 : vector<8x32xf32>
    %31 = arith.divf %29, %30 : vector<8x32xf32>
    %32 = arith.extf %1 : vector<8x32xbf16> to vector<8x32xf32>
    %33 = arith.mulf %31, %32 : vector<8x32xf32>
    %34 = arith.addf %25, %33 : vector<8x32xf32>
    %35 = vector.extract_strided_slice %17 {offsets = [0, 128], sizes = [8, 32], strides = [1, 1]} : vector<8x160xf32> to vector<8x32xf32>
    %36 = arith.negf %35 : vector<8x32xf32>
    %37 = math.exp %36 : vector<8x32xf32>
    %cst_21 = arith.constant 1.000000e+00 : f32
    %38 = vector.broadcast %cst_21 : f32 to vector<8x32xf32>
    %39 = arith.addf %38, %37 : vector<8x32xf32>
    %40 = arith.divf %38, %39 : vector<8x32xf32>
    %41 = arith.extf %2 : vector<8x32xbf16> to vector<8x32xf32>
    %42 = arith.mulf %40, %41 : vector<8x32xf32>
    %43 = arith.addf %34, %42 : vector<8x32xf32>
    %44 = vector.extract_strided_slice %7 {offsets = [0, 0], sizes = [8, 32], strides = [1, 1]} : vector<8x64xf32> to vector<8x32xf32>
    %45 = arith.negf %44 : vector<8x32xf32>
    %46 = math.exp %45 : vector<8x32xf32>
    %cst_22 = arith.constant 1.000000e+00 : f32
    %47 = vector.broadcast %cst_22 : f32 to vector<8x32xf32>
    %48 = arith.addf %47, %46 : vector<8x32xf32>
    %49 = arith.divf %47, %48 : vector<8x32xf32>
    %50 = vector.extract_strided_slice %7 {offsets = [0, 32], sizes = [8, 32], strides = [1, 1]} : vector<8x64xf32> to vector<8x32xf32>
    %51 = arith.mulf %49, %50 : vector<8x32xf32>
    %52 = vector.extract_strided_slice %12 {offsets = [0, 0], sizes = [8, 32], strides = [1, 1]} : vector<8x64xf32> to vector<8x32xf32>
    %53 = arith.negf %52 : vector<8x32xf32>
    %54 = math.exp %53 : vector<8x32xf32>
    %cst_23 = arith.constant 1.000000e+00 : f32
    %55 = vector.broadcast %cst_23 : f32 to vector<8x32xf32>
    %56 = arith.addf %55, %54 : vector<8x32xf32>
    %57 = arith.divf %55, %56 : vector<8x32xf32>
    %58 = vector.extract_strided_slice %12 {offsets = [0, 32], sizes = [8, 32], strides = [1, 1]} : vector<8x64xf32> to vector<8x32xf32>
    %59 = arith.mulf %57, %58 : vector<8x32xf32>
    %60 = vector.extract_strided_slice %17 {offsets = [0, 0], sizes = [8, 32], strides = [1, 1]} : vector<8x160xf32> to vector<8x32xf32>
    %61 = arith.negf %60 : vector<8x32xf32>
    %62 = math.exp %61 : vector<8x32xf32>
    %cst_24 = arith.constant 1.000000e+00 : f32
    %63 = vector.broadcast %cst_24 : f32 to vector<8x32xf32>
    %64 = arith.addf %63, %62 : vector<8x32xf32>
    %65 = arith.divf %63, %64 : vector<8x32xf32>
    %66 = vector.extract_strided_slice %17 {offsets = [0, 32], sizes = [8, 32], strides = [1, 1]} : vector<8x160xf32> to vector<8x32xf32>
    %67 = arith.mulf %65, %66 : vector<8x32xf32>
    %c0_25 = arith.constant 0 : index
    %c0_26 = arith.constant 0 : index
    %68 = vector.load %arg12[%c0_25, %c0_26] : memref<5x96xf32, #tpu.memory_space<vmem>>, vector<1x96xf32>
    %c1 = arith.constant 1 : index
    %c0_27 = arith.constant 0 : index
    %69 = vector.load %arg12[%c1, %c0_27] : memref<5x96xf32, #tpu.memory_space<vmem>>, vector<1x96xf32>
    %c2 = arith.constant 2 : index
    %c0_28 = arith.constant 0 : index
    %70 = vector.load %arg12[%c2, %c0_28] : memref<5x96xf32, #tpu.memory_space<vmem>>, vector<1x96xf32>
    %c3 = arith.constant 3 : index
    %c0_29 = arith.constant 0 : index
    %71 = vector.load %arg12[%c3, %c0_29] : memref<5x96xf32, #tpu.memory_space<vmem>>, vector<1x96xf32>
    %c4 = arith.constant 4 : index
    %c0_30 = arith.constant 0 : index
    %72 = vector.load %arg12[%c4, %c0_30] : memref<5x96xf32, #tpu.memory_space<vmem>>, vector<1x96xf32>
    %c0_31 = arith.constant 0 : index
    %c0_32 = arith.constant 0 : index
    %73 = vector.load %arg13[%c0_31, %c0_32] : memref<3x128xf32, #tpu.memory_space<vmem>>, vector<1x128xf32>
    %c1_33 = arith.constant 1 : index
    %c0_34 = arith.constant 0 : index
    %74 = vector.load %arg13[%c1_33, %c0_34] : memref<3x128xf32, #tpu.memory_space<vmem>>, vector<1x128xf32>
    %c2_35 = arith.constant 2 : index
    %c0_36 = arith.constant 0 : index
    %75 = vector.load %arg13[%c2_35, %c0_36] : memref<3x128xf32, #tpu.memory_space<vmem>>, vector<1x128xf32>
    %76 = tpu.concatenate %51, %59, %67 in 1 : vector<8x32xf32>, vector<8x32xf32>, vector<8x32xf32> -> vector<8x96xf32>
    %cst_37 = arith.constant dense<0.000000e+00> : vector<8xf32>
    %77 = vector.multi_reduction <add>, %76, %cst_37 [1] : vector<8x96xf32> to vector<8xf32>
    %78 = vector.shape_cast %77 : vector<8xf32> to vector<8x1xf32>
    %cst_38 = arith.constant 9.600000e+01 : f32
    %79 = vector.broadcast %cst_38 : f32 to vector<8x1xf32>
    %80 = arith.divf %78, %79 : vector<8x1xf32>
    %81 = vector.broadcast %80 : vector<8x1xf32> to vector<8x96xf32>
    %82 = arith.subf %76, %81 : vector<8x96xf32>
    %83 = arith.mulf %82, %82 : vector<8x96xf32>
    %cst_39 = arith.constant dense<0.000000e+00> : vector<8xf32>
    %84 = vector.multi_reduction <add>, %83, %cst_39 [1] : vector<8x96xf32> to vector<8xf32>
    %85 = vector.shape_cast %84 : vector<8xf32> to vector<8x1xf32>
    %cst_40 = arith.constant 9.600000e+01 : f32
    %86 = vector.broadcast %cst_40 : f32 to vector<8x1xf32>
    %87 = arith.divf %85, %86 : vector<8x1xf32>
    %cst_41 = arith.constant 9.99999974E-6 : f32
    %88 = vector.broadcast %cst_41 : f32 to vector<8x1xf32>
    %89 = arith.addf %87, %88 : vector<8x1xf32>
    %90 = math.rsqrt %89 : vector<8x1xf32>
    %91 = vector.broadcast %90 : vector<8x1xf32> to vector<8x96xf32>
    %92 = arith.mulf %82, %91 : vector<8x96xf32>
    %93 = vector.broadcast %68 : vector<1x96xf32> to vector<8x96xf32>
    %94 = arith.mulf %92, %93 : vector<8x96xf32>
    %95 = vector.broadcast %69 : vector<1x96xf32> to vector<8x96xf32>
    %96 = arith.addf %94, %95 : vector<8x96xf32>
    %97 = arith.truncf %96 : vector<8x96xf32> to vector<8x96xbf16>
    %c0_42 = arith.constant 0 : index
    %c0_43 = arith.constant 0 : index
    %98 = vector.load %arg10[%c0_42, %c0_43] : memref<96x128xbf16, #tpu.memory_space<vmem>>, vector<96x128xbf16>
    %cst_44 = arith.constant dense<0.000000e+00> : vector<8x128xf32>
    %99 = tpu.matmul %97, %98, %cst_44 {dimension_numbers = #tpu.dot_dimension_numbers<[1], [0], [0], [1], [0, 0, 1, 1], [], []>} : vector<8x96xbf16>, vector<96x128xbf16>, vector<8x128xf32> -> vector<8x128xf32>
    %100 = vector.broadcast %75 : vector<1x128xf32> to vector<8x128xf32>
    %101 = arith.addf %99, %100 : vector<8x128xf32>
    %cst_45 = arith.constant dense<0.000000e+00> : vector<8xf32>
    %102 = vector.multi_reduction <add>, %101, %cst_45 [1] : vector<8x128xf32> to vector<8xf32>
    %103 = vector.shape_cast %102 : vector<8xf32> to vector<8x1xf32>
    %cst_46 = arith.constant 1.280000e+02 : f32
    %104 = vector.broadcast %cst_46 : f32 to vector<8x1xf32>
    %105 = arith.divf %103, %104 : vector<8x1xf32>
    %106 = vector.broadcast %105 : vector<8x1xf32> to vector<8x128xf32>
    %107 = arith.subf %101, %106 : vector<8x128xf32>
    %108 = arith.mulf %107, %107 : vector<8x128xf32>
    %cst_47 = arith.constant dense<0.000000e+00> : vector<8xf32>
    %109 = vector.multi_reduction <add>, %108, %cst_47 [1] : vector<8x128xf32> to vector<8xf32>
    %110 = vector.shape_cast %109 : vector<8xf32> to vector<8x1xf32>
    %cst_48 = arith.constant 1.280000e+02 : f32
    %111 = vector.broadcast %cst_48 : f32 to vector<8x1xf32>
    %112 = arith.divf %110, %111 : vector<8x1xf32>
    %cst_49 = arith.constant 9.99999974E-6 : f32
    %113 = vector.broadcast %cst_49 : f32 to vector<8x1xf32>
    %114 = arith.addf %112, %113 : vector<8x1xf32>
    %115 = math.rsqrt %114 : vector<8x1xf32>
    %116 = vector.broadcast %115 : vector<8x1xf32> to vector<8x128xf32>
    %117 = arith.mulf %107, %116 : vector<8x128xf32>
    %118 = vector.broadcast %73 : vector<1x128xf32> to vector<8x128xf32>
    %119 = arith.mulf %117, %118 : vector<8x128xf32>
    %120 = vector.broadcast %74 : vector<1x128xf32> to vector<8x128xf32>
    %121 = arith.addf %119, %120 : vector<8x128xf32>
    %cst_50 = arith.constant 0.000000e+00 : f32
    %122 = vector.broadcast %cst_50 : f32 to vector<8x128xf32>
    %123 = arith.maximumf %121, %122 : vector<8x128xf32>
    %124 = arith.truncf %123 : vector<8x128xf32> to vector<8x128xbf16>
    %c0_51 = arith.constant 0 : index
    %c0_52 = arith.constant 0 : index
    %125 = vector.load %arg11[%c0_51, %c0_52] : memref<128x96xbf16, #tpu.memory_space<vmem>>, vector<128x96xbf16>
    %cst_53 = arith.constant dense<0.000000e+00> : vector<8x96xf32>
    %126 = tpu.matmul %124, %125, %cst_53 {dimension_numbers = #tpu.dot_dimension_numbers<[1], [0], [0], [1], [0, 0, 1, 1], [], []>} : vector<8x128xbf16>, vector<128x96xbf16>, vector<8x96xf32> -> vector<8x96xf32>
    %127 = vector.broadcast %72 : vector<1x96xf32> to vector<8x96xf32>
    %128 = arith.addf %126, %127 : vector<8x96xf32>
    %cst_54 = arith.constant dense<0.000000e+00> : vector<8xf32>
    %129 = vector.multi_reduction <add>, %128, %cst_54 [1] : vector<8x96xf32> to vector<8xf32>
    %130 = vector.shape_cast %129 : vector<8xf32> to vector<8x1xf32>
    %cst_55 = arith.constant 9.600000e+01 : f32
    %131 = vector.broadcast %cst_55 : f32 to vector<8x1xf32>
    %132 = arith.divf %130, %131 : vector<8x1xf32>
    %133 = vector.broadcast %132 : vector<8x1xf32> to vector<8x96xf32>
    %134 = arith.subf %128, %133 : vector<8x96xf32>
    %135 = arith.mulf %134, %134 : vector<8x96xf32>
    %cst_56 = arith.constant dense<0.000000e+00> : vector<8xf32>
    %136 = vector.multi_reduction <add>, %135, %cst_56 [1] : vector<8x96xf32> to vector<8xf32>
    %137 = vector.shape_cast %136 : vector<8xf32> to vector<8x1xf32>
    %cst_57 = arith.constant 9.600000e+01 : f32
    %138 = vector.broadcast %cst_57 : f32 to vector<8x1xf32>
    %139 = arith.divf %137, %138 : vector<8x1xf32>
    %cst_58 = arith.constant 9.99999974E-6 : f32
    %140 = vector.broadcast %cst_58 : f32 to vector<8x1xf32>
    %141 = arith.addf %139, %140 : vector<8x1xf32>
    %142 = math.rsqrt %141 : vector<8x1xf32>
    %143 = vector.broadcast %142 : vector<8x1xf32> to vector<8x96xf32>
    %144 = arith.mulf %134, %143 : vector<8x96xf32>
    %145 = vector.broadcast %70 : vector<1x96xf32> to vector<8x96xf32>
    %146 = arith.mulf %144, %145 : vector<8x96xf32>
    %147 = vector.broadcast %71 : vector<1x96xf32> to vector<8x96xf32>
    %148 = arith.addf %146, %147 : vector<8x96xf32>
    %149 = tpu.concatenate %148, %43 in 1 : vector<8x96xf32>, vector<8x32xf32> -> vector<8x128xf32>
    %cst_59 = arith.constant dense<0.000000e+00> : vector<8xf32>
    %150 = vector.multi_reduction <add>, %149, %cst_59 [1] : vector<8x128xf32> to vector<8xf32>
    %151 = vector.shape_cast %150 : vector<8xf32> to vector<8x1xf32>
    %cst_60 = arith.constant 1.280000e+02 : f32
    %152 = vector.broadcast %cst_60 : f32 to vector<8x1xf32>
    %153 = arith.divf %151, %152 : vector<8x1xf32>
    %154 = vector.broadcast %153 : vector<8x1xf32> to vector<8x128xf32>
    %155 = arith.subf %149, %154 : vector<8x128xf32>
    %156 = arith.mulf %155, %155 : vector<8x128xf32>
    %cst_61 = arith.constant dense<0.000000e+00> : vector<8xf32>
    %157 = vector.multi_reduction <add>, %156, %cst_61 [1] : vector<8x128xf32> to vector<8xf32>
    %158 = vector.shape_cast %157 : vector<8xf32> to vector<8x1xf32>
    %cst_62 = arith.constant 1.280000e+02 : f32
    %159 = vector.broadcast %cst_62 : f32 to vector<8x1xf32>
    %160 = arith.divf %158, %159 : vector<8x1xf32>
    %cst_63 = arith.constant 9.99999974E-6 : f32
    %161 = vector.broadcast %cst_63 : f32 to vector<8x1xf32>
    %162 = arith.addf %160, %161 : vector<8x1xf32>
    %163 = math.rsqrt %162 : vector<8x1xf32>
    %164 = vector.broadcast %163 : vector<8x1xf32> to vector<8x128xf32>
    %165 = arith.mulf %155, %164 : vector<8x128xf32>
    %166 = vector.broadcast %73 : vector<1x128xf32> to vector<8x128xf32>
    %167 = arith.mulf %165, %166 : vector<8x128xf32>
    %168 = vector.broadcast %74 : vector<1x128xf32> to vector<8x128xf32>
    %169 = arith.addf %167, %168 : vector<8x128xf32>
    %cst_64 = arith.constant 0.000000e+00 : f32
    %170 = vector.broadcast %cst_64 : f32 to vector<8x128xf32>
    %171 = arith.maximumf %169, %170 : vector<8x128xf32>
    %172 = arith.truncf %171 : vector<8x128xf32> to vector<8x128xbf16>
    %c0_65 = arith.constant 0 : index
    %c0_66 = arith.constant 0 : index
    %173 = vector.load %arg11[%c0_65, %c0_66] : memref<128x96xbf16, #tpu.memory_space<vmem>>, vector<128x96xbf16>
    %cst_67 = arith.constant dense<0.000000e+00> : vector<8x96xf32>
    %174 = tpu.matmul %172, %173, %cst_67 {dimension_numbers = #tpu.dot_dimension_numbers<[1], [0], [0], [1], [0, 0, 1, 1], [], []>} : vector<8x128xbf16>, vector<128x96xbf16>, vector<8x96xf32> -> vector<8x96xf32>
    %175 = vector.broadcast %72 : vector<1x96xf32> to vector<8x96xf32>
    %176 = arith.addf %174, %175 : vector<8x96xf32>
    %cst_68 = arith.constant dense<0.000000e+00> : vector<8xf32>
    %177 = vector.multi_reduction <add>, %176, %cst_68 [1] : vector<8x96xf32> to vector<8xf32>
    %178 = vector.shape_cast %177 : vector<8xf32> to vector<8x1xf32>
    %cst_69 = arith.constant 9.600000e+01 : f32
    %179 = vector.broadcast %cst_69 : f32 to vector<8x1xf32>
    %180 = arith.divf %178, %179 : vector<8x1xf32>
    %181 = vector.broadcast %180 : vector<8x1xf32> to vector<8x96xf32>
    %182 = arith.subf %176, %181 : vector<8x96xf32>
    %183 = arith.mulf %182, %182 : vector<8x96xf32>
    %cst_70 = arith.constant dense<0.000000e+00> : vector<8xf32>
    %184 = vector.multi_reduction <add>, %183, %cst_70 [1] : vector<8x96xf32> to vector<8xf32>
    %185 = vector.shape_cast %184 : vector<8xf32> to vector<8x1xf32>
    %cst_71 = arith.constant 9.600000e+01 : f32
    %186 = vector.broadcast %cst_71 : f32 to vector<8x1xf32>
    %187 = arith.divf %185, %186 : vector<8x1xf32>
    %cst_72 = arith.constant 9.99999974E-6 : f32
    %188 = vector.broadcast %cst_72 : f32 to vector<8x1xf32>
    %189 = arith.addf %187, %188 : vector<8x1xf32>
    %190 = math.rsqrt %189 : vector<8x1xf32>
    %191 = vector.broadcast %190 : vector<8x1xf32> to vector<8x96xf32>
    %192 = arith.mulf %182, %191 : vector<8x96xf32>
    %193 = vector.broadcast %70 : vector<1x96xf32> to vector<8x96xf32>
    %194 = arith.mulf %192, %193 : vector<8x96xf32>
    %195 = vector.broadcast %71 : vector<1x96xf32> to vector<8x96xf32>
    %196 = arith.addf %194, %195 : vector<8x96xf32>
    %c0_73 = arith.constant 0 : index
    %c0_74 = arith.constant 0 : index
    %197 = vector.load %arg14[%c0_73, %c0_74] : memref<8x96xf32, #tpu.memory_space<vmem>>, vector<8x96xf32>
    tpu.vector_store %arg14[%c0_73, %c0_74], %196 {strides = array<i32>} : memref<8x96xf32, #tpu.memory_space<vmem>>, vector<8x96xf32>,
    return
  }
  func.func @transform_0(%arg0: i32) -> (i32, i32) {
    %c0_i32 = arith.constant 0 : i32
    %c0_i32_0 = arith.constant 0 : i32
    return %arg0, %c0_i32 : i32, i32
  }
  func.func @transform_1(%arg0: i32) -> (i32, i32) {
    %c0_i32 = arith.constant 0 : i32
    %c0_i32_0 = arith.constant 0 : i32
    return %arg0, %c0_i32 : i32, i32
  }
  func.func @transform_2(%arg0: i32) -> (i32, i32) {
    %c0_i32 = arith.constant 0 : i32
    %c0_i32_0 = arith.constant 0 : i32
    return %arg0, %c0_i32 : i32, i32
  }
  func.func @transform_3(%arg0: i32) -> (i32, i32) {
    %c0_i32 = arith.constant 0 : i32
    %c0_i32_0 = arith.constant 0 : i32
    %c0_i32_1 = arith.constant 0 : i32
    return %c0_i32, %c0_i32_0 : i32, i32
  }
  func.func @transform_4(%arg0: i32) -> (i32, i32) {
    %c0_i32 = arith.constant 0 : i32
    %c0_i32_0 = arith.constant 0 : i32
    %c0_i32_1 = arith.constant 0 : i32
    return %c0_i32, %c0_i32_0 : i32, i32
  }
  func.func @transform_5(%arg0: i32) -> (i32, i32) {
    %c0_i32 = arith.constant 0 : i32
    %c0_i32_0 = arith.constant 0 : i32
    %c0_i32_1 = arith.constant 0 : i32
    return %c0_i32, %c0_i32_0 : i32, i32
  }
  func.func @transform_6(%arg0: i32) -> (i32, i32) {
    %c0_i32 = arith.constant 0 : i32
    %c0_i32_0 = arith.constant 0 : i32
    %c0_i32_1 = arith.constant 0 : i32
    return %c0_i32, %c0_i32_0 : i32, i32
  }
  func.func @transform_7(%arg0: i32) -> (i32, i32) {
    %c0_i32 = arith.constant 0 : i32
    %c0_i32_0 = arith.constant 0 : i32
    %c0_i32_1 = arith.constant 0 : i32
    return %c0_i32, %c0_i32_0 : i32, i32
  }
  func.func @transform_8(%arg0: i32) -> (i32, i32) {
    %c0_i32 = arith.constant 0 : i32
    %c0_i32_0 = arith.constant 0 : i32
    %c0_i32_1 = arith.constant 0 : i32
    return %c0_i32, %c0_i32_0 : i32, i32
  }
  func.func @transform_9(%arg0: i32) -> (i32, i32) {
    %c0_i32 = arith.constant 0 : i32
    %c0_i32_0 = arith.constant 0 : i32
    %c0_i32_1 = arith.constant 0 : i32
    return %c0_i32, %c0_i32_0 : i32, i32
  }
  func.func @transform_10(%arg0: i32) -> (i32, i32) {
    %c0_i32 = arith.constant 0 : i32
    %c0_i32_0 = arith.constant 0 : i32
    %c0_i32_1 = arith.constant 0 : i32
    return %c0_i32, %c0_i32_0 : i32, i32
  }
  func.func @transform_11(%arg0: i32) -> (i32, i32) {
    %c0_i32 = arith.constant 0 : i32
    %c0_i32_0 = arith.constant 0 : i32
    %c0_i32_1 = arith.constant 0 : i32
    return %c0_i32, %c0_i32_0 : i32, i32
  }
  func.func @transform_12(%arg0: i32) -> (i32, i32) {
    %c0_i32 = arith.constant 0 : i32
    %c0_i32_0 = arith.constant 0 : i32
    %c0_i32_1 = arith.constant 0 : i32
    return %c0_i32, %c0_i32_0 : i32, i32
  }
  func.func @transform_13(%arg0: i32) -> (i32, i32) {
    %c0_i32 = arith.constant 0 : i32
    %c0_i32_0 = arith.constant 0 : i32
    return %arg0, %c0_i32 : i32, i32
  }
}

module attributes {stable_mosaic.version = 11 : i64} {
  func.func @_nonlinear_fusion_kernel(%arg0: i32, %arg1: memref<8x32xbf16, #tpu.memory_space<vmem>>, %arg2: memref<8x32xbf16, #tpu.memory_space<vmem>>, %arg3: memref<8x32xbf16, #tpu.memory_space<vmem>>, %arg4: memref<32x64xbf16, #tpu.memory_space<vmem>>, %arg5: memref<32x64xbf16, #tpu.memory_space<vmem>>, %arg6: memref<32x160xbf16, #tpu.memory_space<vmem>>, %arg7: memref<1x64xf32, #tpu.memory_space<vmem>>, %arg8: memref<1x64xf32, #tpu.memory_space<vmem>>, %arg9: memref<1x160xf32, #tpu.memory_space<vmem>>, %arg10: memref<96x128xbf16, #tpu.memory_space<vmem>>, %arg11: memref<128x96xbf16, #tpu.memory_space<vmem>>, %arg12: memref<5x96xf32, #tpu.memory_space<vmem>>, %arg13: memref<3x128xf32, #tpu.memory_space<vmem>>, %arg14: memref<8x96xf32, #tpu.memory_space<vmem>>) attributes {dimension_semantics = [#tpu.dimension_semantics<parallel>], iteration_bounds = array<i64: 2>, scalar_prefetch = 0 : i64, scratch_operands = 0 : i64, tpu.core_type = #tpu.core_type<tc>, window_params = [{transform_indices = @transform_0, window_bounds = array<i64: 8, 32>}, {transform_indices = @transform_1, window_bounds = array<i64: 8, 32>}, {transform_indices = @transform_2, window_bounds = array<i64: 8, 32>}, {pipeline_mode = #tpu.pipeline_mode<synchronous>, transform_indices = @transform_3, window_bounds = array<i64: 32, 64>}, {pipeline_mode = #tpu.pipeline_mode<synchronous>, transform_indices = @transform_4, window_bounds = array<i64: 32, 64>}, {pipeline_mode = #tpu.pipeline_mode<synchronous>, transform_indices = @transform_5, window_bounds = array<i64: 32, 160>}, {pipeline_mode = #tpu.pipeline_mode<synchronous>, transform_indices = @transform_6, window_bounds = array<i64: 1, 64>}, {pipeline_mode = #tpu.pipeline_mode<synchronous>, transform_indices = @transform_7, window_bounds = array<i64: 1, 64>}, {pipeline_mode = #tpu.pipeline_mode<synchronous>, transform_indices = @transform_8, window_bounds = array<i64: 1, 160>}, {pipeline_mode = #tpu.pipeline_mode<synchronous>, transform_indices = @transform_9, window_bounds = array<i64: 96, 128>}, {pipeline_mode = #tpu.pipeline_mode<synchronous>, transform_indices = @transform_10, window_bounds = array<i64: 128, 96>}, {pipeline_mode = #tpu.pipeline_mode<synchronous>, transform_indices = @transform_11, window_bounds = array<i64: 5, 96>}, {pipeline_mode = #tpu.pipeline_mode<synchronous>, transform_indices = @transform_12, window_bounds = array<i64: 3, 128>}, {transform_indices = @transform_13, window_bounds = array<i64: 8, 96>}]} {
    %c0 = arith.constant 0 : index
    %c0_0 = arith.constant 0 : index
    %0 = vector.load %arg1[%c0, %c0_0] : memref<8x32xbf16, #tpu.memory_space<vmem>>, vector<8x32xbf16>
    %c0_1 = arith.constant 0 : index
    %c0_2 = arith.constant 0 : index
    %1 = vector.load %arg2[%c0_1, %c0_2] : memref<8x32xbf16, #tpu.memory_space<vmem>>, vector<8x32xbf16>
    %c0_3 = arith.constant 0 : index
    %c0_4 = arith.constant 0 : index
    %2 = vector.load %arg3[%c0_3, %c0_4] : memref<8x32xbf16, #tpu.memory_space<vmem>>, vector<8x32xbf16>
    %c0_5 = arith.constant 0 : index
    %c0_6 = arith.constant 0 : index
    %3 = vector.load %arg4[%c0_5, %c0_6] : memref<32x64xbf16, #tpu.memory_space<vmem>>, vector<32x64xbf16>
    %cst = arith.constant dense<0.000000e+00> : vector<8x64xf32>
    %4 = tpu.matmul %0, %3, %cst {dimension_numbers = #tpu.dot_dimension_numbers<[1], [0], [0], [1], [0, 0, 1, 1], [], []>} : vector<8x32xbf16>, vector<32x64xbf16>, vector<8x64xf32> -> vector<8x64xf32>
    %c0_7 = arith.constant 0 : index
    %c0_8 = arith.constant 0 : index
    %5 = vector.load %arg7[%c0_7, %c0_8] : memref<1x64xf32, #tpu.memory_space<vmem>>, vector<1x64xf32>
    %6 = vector.broadcast %5 : vector<1x64xf32> to vector<8x64xf32>
    %7 = arith.addf %4, %6 : vector<8x64xf32>
    %c0_9 = arith.constant 0 : index
    %c0_10 = arith.constant 0 : index
    %8 = vector.load %arg5[%c0_9, %c0_10] : memref<32x64xbf16, #tpu.memory_space<vmem>>, vector<32x64xbf16>
    %cst_11 = arith.constant dense<0.000000e+00> : vector<8x64xf32>
    %9 = tpu.matmul %1, %8, %cst_11 {dimension_numbers = #tpu.dot_dimension_numbers<[1], [0], [0], [1], [0, 0, 1, 1], [], []>} : vector<8x32xbf16>, vector<32x64xbf16>, vector<8x64xf32> -> vector<8x64xf32>
    %c0_12 = arith.constant 0 : index
    %c0_13 = arith.constant 0 : index
    %10 = vector.load %arg8[%c0_12, %c0_13] : memref<1x64xf32, #tpu.memory_space<vmem>>, vector<1x64xf32>
    %11 = vector.broadcast %10 : vector<1x64xf32> to vector<8x64xf32>
    %12 = arith.addf %9, %11 : vector<8x64xf32>
    %c0_14 = arith.constant 0 : index
    %c0_15 = arith.constant 0 : index
    %13 = vector.load %arg6[%c0_14, %c0_15] : memref<32x160xbf16, #tpu.memory_space<vmem>>, vector<32x160xbf16>
    %cst_16 = arith.constant dense<0.000000e+00> : vector<8x160xf32>
    %14 = tpu.matmul %2, %13, %cst_16 {dimension_numbers = #tpu.dot_dimension_numbers<[1], [0], [0], [1], [0, 0, 1, 1], [], []>} : vector<8x32xbf16>, vector<32x160xbf16>, vector<8x160xf32> -> vector<8x160xf32>
    %c0_17 = arith.constant 0 : index
    %c0_18 = arith.constant 0 : index
    %15 = vector.load %arg9[%c0_17, %c0_18] : memref<1x160xf32, #tpu.memory_space<vmem>>, vector<1x160xf32>
    %16 = vector.broadcast %15 : vector<1x160xf32> to vector<8x160xf32>
    %17 = arith.addf %14, %16 : vector<8x160xf32>
    %18 = vector.extract_strided_slice %17 {offsets = [0, 64], sizes = [8, 32], strides = [1, 1]} : vector<8x160xf32> to vector<8x32xf32>
    %19 = arith.negf %18 : vector<8x32xf32>
    %20 = math.exp %19 : vector<8x32xf32>
    %cst_19 = arith.constant 1.000000e+00 : f32
    %21 = vector.broadcast %cst_19 : f32 to vector<8x32xf32>
    %22 = arith.addf %21, %20 : vector<8x32xf32>
    %23 = arith.divf %21, %22 : vector<8x32xf32>
    %24 = arith.extf %0 : vector<8x32xbf16> to vector<8x32xf32>
    %25 = arith.mulf %23, %24 : vector<8x32xf32>
    %26 = vector.extract_strided_slice %17 {offsets = [0, 96], sizes = [8, 32], strides = [1, 1]} : vector<8x160xf32> to vector<8x32xf32>
    %27 = arith.negf %26 : vector<8x32xf32>
    %28 = math.exp %27 : vector<8x32xf32>
    %cst_20 = arith.constant 1.000000e+00 : f32
    %29 = vector.broadcast %cst_20 : f32 to vector<8x32xf32>
    %30 = arith.addf %29, %28 : vector<8x32xf32>
    %31 = arith.divf %29, %30 : vector<8x32xf32>
    %32 = arith.extf %1 : vector<8x32xbf16> to vector<8x32xf32>
    %33 = arith.mulf %31, %32 : vector<8x32xf32>
    %34 = arith.addf %25, %33 : vector<8x32xf32>
    %35 = vector.extract_strided_slice %17 {offsets = [0, 128], sizes = [8, 32], strides = [1, 1]} : vector<8x160xf32> to vector<8x32xf32>
    %36 = arith.negf %35 : vector<8x32xf32>
    %37 = math.exp %36 : vector<8x32xf32>
    %cst_21 = arith.constant 1.000000e+00 : f32
    %38 = vector.broadcast %cst_21 : f32 to vector<8x32xf32>
    %39 = arith.addf %38, %37 : vector<8x32xf32>
    %40 = arith.divf %38, %39 : vector<8x32xf32>
    %41 = arith.extf %2 : vector<8x32xbf16> to vector<8x32xf32>
    %42 = arith.mulf %40, %41 : vector<8x32xf32>
    %43 = arith.addf %34, %42 : vector<8x32xf32>
    %44 = vector.extract_strided_slice %7 {offsets = [0, 0], sizes = [8, 32], strides = [1, 1]} : vector<8x64xf32> to vector<8x32xf32>
    %45 = arith.negf %44 : vector<8x32xf32>
    %46 = math.exp %45 : vector<8x32xf32>
    %cst_22 = arith.constant 1.000000e+00 : f32
    %47 = vector.broadcast %cst_22 : f32 to vector<8x32xf32>
    %48 = arith.addf %47, %46 : vector<8x32xf32>
    %49 = arith.divf %47, %48 : vector<8x32xf32>
    %50 = vector.extract_strided_slice %7 {offsets = [0, 32], sizes = [8, 32], strides = [1, 1]} : vector<8x64xf32> to vector<8x32xf32>
    %51 = arith.mulf %49, %50 : vector<8x32xf32>
    %52 = vector.extract_strided_slice %12 {offsets = [0, 0], sizes = [8, 32], strides = [1, 1]} : vector<8x64xf32> to vector<8x32xf32>
    %53 = arith.negf %52 : vector<8x32xf32>
    %54 = math.exp %53 : vector<8x32xf32>
    %cst_23 = arith.constant 1.000000e+00 : f32
    %55 = vector.broadcast %cst_23 : f32 to vector<8x32xf32>
    %56 = arith.addf %55, %54 : vector<8x32xf32>
    %57 = arith.divf %55, %56 : vector<8x32xf32>
    %58 = vector.extract_strided_slice %12 {offsets = [0, 32], sizes = [8, 32], strides = [1, 1]} : vector<8x64xf32> to vector<8x32xf32>
    %59 = arith.mulf %57, %58 : vector<8x32xf32>
    %60 = vector.extract_strided_slice %17 {offsets = [0, 0], sizes = [8, 32], strides = [1, 1]} : vector<8x160xf32> to vector<8x32xf32>
    %61 = arith.negf %60 : vector<8x32xf32>
    %62 = math.exp %61 : vector<8x32xf32>
    %cst_24 = arith.constant 1.000000e+00 : f32
    %63 = vector.broadcast %cst_24 : f32 to vector<8x32xf32>
    %64 = arith.addf %63, %62 : vector<8x32xf32>
    %65 = arith.divf %63, %64 : vector<8x32xf32>
    %66 = vector.extract_strided_slice %17 {offsets = [0, 32], sizes = [8, 32], strides = [1, 1]} : vector<8x160xf32> to vector<8x32xf32>
    %67 = arith.mulf %65, %66 : vector<8x32xf32>
    %c0_25 = arith.constant 0 : index
    %c0_26 = arith.constant 0 : index
    %68 = vector.load %arg12[%c0_25, %c0_26] : memref<5x96xf32, #tpu.memory_space<vmem>>, vector<1x96xf32>
    %c1 = arith.constant 1 : index
    %c0_27 = arith.constant 0 : index
    %69 = vector.load %arg12[%c1, %c0_27] : memref<5x96xf32, #tpu.memory_space<vmem>>, vector<1x96xf32>
    %c2 = arith.constant 2 : index
    %c0_28 = arith.constant 0 : index
    %70 = vector.load %arg12[%c2, %c0_28] : memref<5x96xf32, #tpu.memory_space<vmem>>, vector<1x96xf32>
    %c3 = arith.constant 3 : index
    %c0_29 = arith.constant 0 : index
    %71 = vector.load %arg12[%c3, %c0_29] : memref<5x96xf32, #tpu.memory_space<vmem>>, vector<1x96xf32>
    %c4 = arith.constant 4 : index
    %c0_30 = arith.constant 0 : index
    %72 = vector.load %arg12[%c4, %c0_30] : memref<5x96xf32, #tpu.memory_space<vmem>>, vector<1x96xf32>
    %c0_31 = arith.constant 0 : index
    %c0_32 = arith.constant 0 : index
    %73 = vector.load %arg13[%c0_31, %c0_32] : memref<3x128xf32, #tpu.memory_space<vmem>>, vector<1x128xf32>
    %c1_33 = arith.constant 1 : index
    %c0_34 = arith.constant 0 : index
    %74 = vector.load %arg13[%c1_33, %c0_34] : memref<3x128xf32, #tpu.memory_space<vmem>>, vector<1x128xf32>
    %c2_35 = arith.constant 2 : index
    %c0_36 = arith.constant 0 : index
    %75 = vector.load %arg13[%c2_35, %c0_36] : memref<3x128xf32, #tpu.memory_space<vmem>>, vector<1x128xf32>
    %76 = tpu.concatenate %51, %59, %67 in 1 : vector<8x32xf32>, vector<8x32xf32>, vector<8x32xf32> -> vector<8x96xf32>
    %cst_37 = arith.constant dense<0.000000e+00> : vector<8xf32>
    %77 = vector.multi_reduction <add>, %76, %cst_37 [1] : vector<8x96xf32> to vector<8xf32>
    %78 = vector.shape_cast %77 : vector<8xf32> to vector<8x1xf32>
    %cst_38 = arith.constant 9.600000e+01 : f32
    %79 = vector.broadcast %cst_38 : f32 to vector<8x1xf32>
    %80 = arith.divf %78, %79 : vector<8x1xf32>
    %81 = vector.broadcast %80 : vector<8x1xf32> to vector<8x96xf32>
    %82 = arith.subf %76, %81 : vector<8x96xf32>
    %83 = arith.mulf %82, %82 : vector<8x96xf32>
    %cst_39 = arith.constant dense<0.000000e+00> : vector<8xf32>
    %84 = vector.multi_reduction <add>, %83, %cst_39 [1] : vector<8x96xf32> to vector<8xf32>
    %85 = vector.shape_cast %84 : vector<8xf32> to vector<8x1xf32>
    %cst_40 = arith.constant 9.600000e+01 : f32
    %86 = vector.broadcast %cst_40 : f32 to vector<8x1xf32>
    %87 = arith.divf %85, %86 : vector<8x1xf32>
    %cst_41 = arith.constant 9.99999974E-6 : f32
    %88 = vector.broadcast %cst_41 : f32 to vector<8x1xf32>
    %89 = arith.addf %87, %88 : vector<8x1xf32>
    %90 = math.rsqrt %89 : vector<8x1xf32>
    %91 = vector.broadcast %90 : vector<8x1xf32> to vector<8x96xf32>
    %92 = arith.mulf %82, %91 : vector<8x96xf32>
    %93 = vector.broadcast %68 : vector<1x96xf32> to vector<8x96xf32>
    %94 = arith.mulf %92, %93 : vector<8x96xf32>
    %95 = vector.broadcast %69 : vector<1x96xf32> to vector<8x96xf32>
    %96 = arith.addf %94, %95 : vector<8x96xf32>
    %97 = arith.truncf %96 : vector<8x96xf32> to vector<8x96xbf16>
    %c0_42 = arith.constant 0 : index
    %c0_43 = arith.constant 0 : index
    %98 = vector.load %arg10[%c0_42, %c0_43] : memref<96x128xbf16, #tpu.memory_space<vmem>>, vector<96x128xbf16>
    %cst_44 = arith.constant dense<0.000000e+00> : vector<8x128xf32>
    %99 = tpu.matmul %97, %98, %cst_44 {dimension_numbers = #tpu.dot_dimension_numbers<[1], [0], [0], [1], [0, 0, 1, 1], [], []>} : vector<8x96xbf16>, vector<96x128xbf16>, vector<8x128xf32> -> vector<8x128xf32>
    %100 = vector.broadcast %75 : vector<1x128xf32> to vector<8x128xf32>
    %101 = arith.addf %99, %100 : vector<8x128xf32>
    %cst_45 = arith.constant dense<0.000000e+00> : vector<8xf32>
    %102 = vector.multi_reduction <add>, %101, %cst_45 [1] : vector<8x128xf32> to vector<8xf32>
    %103 = vector.shape_cast %102 : vector<8xf32> to vector<8x1xf32>
    %cst_46 = arith.constant 1.280000e+02 : f32
    %104 = vector.broadcast %cst_46 : f32 to vector<8x1xf32>
    %105 = arith.divf %103, %104 : vector<8x1xf32>
    %106 = vector.broadcast %105 : vector<8x1xf32> to vector<8x128xf32>
    %107 = arith.subf %101, %106 : vector<8x128xf32>
    %108 = arith.mulf %107, %107 : vector<8x128xf32>
    %cst_47 = arith.constant dense<0.000000e+00> : vector<8xf32>
    %109 = vector.multi_reduction <add>, %108, %cst_47 [1] : vector<8x128xf32> to vector<8xf32>
    %110 = vector.shape_cast %109 : vector<8xf32> to vector<8x1xf32>
    %cst_48 = arith.constant 1.280000e+02 : f32
    %111 = vector.broadcast %cst_48 : f32 to vector<8x1xf32>
    %112 = arith.divf %110, %111 : vector<8x1xf32>
    %cst_49 = arith.constant 9.99999974E-6 : f32
    %113 = vector.broadcast %cst_49 : f32 to vector<8x1xf32>
    %114 = arith.addf %112, %113 : vector<8x1xf32>
    %115 = math.rsqrt %114 : vector<8x1xf32>
    %116 = vector.broadcast %115 : vector<8x1xf32> to vector<8x128xf32>
    %117 = arith.mulf %107, %116 : vector<8x128xf32>
    %118 = vector.broadcast %73 : vector<1x128xf32> to vector<8x128xf32>
    %119 = arith.mulf %117, %118 : vector<8x128xf32>
    %120 = vector.broadcast %74 : vector<1x128xf32> to vector<8x128xf32>
    %121 = arith.addf %119, %120 : vector<8x128xf32>
    %cst_50 = arith.constant 0.000000e+00 : f32
    %122 = vector.broadcast %cst_50 : f32 to vector<8x128xf32>
    %123 = arith.maximumf %121, %122 : vector<8x128xf32>
    %124 = arith.truncf %123 : vector<8x128xf32> to vector<8x128xbf16>
    %c0_51 = arith.constant 0 : index
    %c0_52 = arith.constant 0 : index
    %125 = vector.load %arg11[%c0_51, %c0_52] : memref<128x96xbf16, #tpu.memory_space<vmem>>, vector<128x96xbf16>
    %cst_53 = arith.constant dense<0.000000e+00> : vector<8x96xf32>
    %126 = tpu.matmul %124, %125, %cst_53 {dimension_numbers = #tpu.dot_dimension_numbers<[1], [0], [0], [1], [0, 0, 1, 1], [], []>} : vector<8x128xbf16>, vector<128x96xbf16>, vector<8x96xf32> -> vector<8x96xf32>
    %127 = vector.broadcast %72 : vector<1x96xf32> to vector<8x96xf32>
    %128 = arith.addf %126, %127 : vector<8x96xf32>
    %cst_54 = arith.constant dense<0.000000e+00> : vector<8xf32>
    %129 = vector.multi_reduction <add>, %128, %cst_54 [1] : vector<8x96xf32> to vector<8xf32>
    %130 = vector.shape_cast %129 : vector<8xf32> to vector<8x1xf32>
    %cst_55 = arith.constant 9.600000e+01 : f32
    %131 = vector.broadcast %cst_55 : f32 to vector<8x1xf32>
    %132 = arith.divf %130, %131 : vector<8x1xf32>
    %133 = vector.broadcast %132 : vector<8x1xf32> to vector<8x96xf32>
    %134 = arith.subf %128, %133 : vector<8x96xf32>
    %135 = arith.mulf %134, %134 : vector<8x96xf32>
    %cst_56 = arith.constant dense<0.000000e+00> : vector<8xf32>
    %136 = vector.multi_reduction <add>, %135, %cst_56 [1] : vector<8x96xf32> to vector<8xf32>
    %137 = vector.shape_cast %136 : vector<8xf32> to vector<8x1xf32>
    %cst_57 = arith.constant 9.600000e+01 : f32
    %138 = vector.broadcast %cst_57 : f32 to vector<8x1xf32>
    %139 = arith.divf %137, %138 : vector<8x1xf32>
    %cst_58 = arith.constant 9.99999974E-6 : f32
    %140 = vector.broadcast %cst_58 : f32 to vector<8x1xf32>
    %141 = arith.addf %139, %140 : vector<8x1xf32>
    %142 = math.rsqrt %141 : vector<8x1xf32>
    %143 = vector.broadcast %142 : vector<8x1xf32> to vector<8x96xf32>
    %144 = arith.mulf %134, %143 : vector<8x96xf32>
    %145 = vector.broadcast %70 : vector<1x96xf32> to vector<8x96xf32>
    %146 = arith.mulf %144, %145 : vector<8x96xf32>
    %147 = vector.broadcast %71 : vector<1x96xf32> to vector<8x96xf32>
    %148 = arith.addf %146, %147 : vector<8x96xf32>
    %149 = tpu.concatenate %148, %43 in 1 : vector<8x96xf32>, vector<8x32xf32> -> vector<8x128xf32>
    %cst_59 = arith.constant dense<0.000000e+00> : vector<8xf32>
    %150 = vector.multi_reduction <add>, %149, %cst_59 [1] : vector<8x128xf32> to vector<8xf32>
    %151 = vector.shape_cast %150 : vector<8xf32> to vector<8x1xf32>
    %cst_60 = arith.constant 1.280000e+02 : f32
    %152 = vector.broadcast %cst_60 : f32 to vector<8x1xf32>
    %153 = arith.divf %151, %152 : vector<8x1xf32>
    %154 = vector.broadcast %153 : vector<8x1xf32> to vector<8x128xf32>
    %155 = arith.subf %149, %154 : vector<8x128xf32>
    %156 = arith.mulf %155, %155 : vector<8x128xf32>
    %cst_61 = arith.constant dense<0.000000e+00> : vector<8xf32>
    %157 = vector.multi_reduction <add>, %156, %cst_61 [1] : vector<8x128xf32> to vector<8xf32>
    %158 = vector.shape_cast %157 : vector<8xf32> to vector<8x1xf32>
    %cst_62 = arith.constant 1.280000e+02 : f32
    %159 = vector.broadcast %cst_62 : f32 to vector<8x1xf32>
    %160 = arith.divf %158, %159 : vector<8x1xf32>
    %cst_63 = arith.constant 9.99999974E-6 : f32
    %161 = vector.broadcast %cst_63 : f32 to vector<8x1xf32>
    %162 = arith.addf %160, %161 : vector<8x1xf32>
    %163 = math.rsqrt %162 : vector<8x1xf32>
    %164 = vector.broadcast %163 : vector<8x1xf32> to vector<8x128xf32>
    %165 = arith.mulf %155, %164 : vector<8x128xf32>
    %166 = vector.broadcast %73 : vector<1x128xf32> to vector<8x128xf32>
    %167 = arith.mulf %165, %166 : vector<8x128xf32>
    %168 = vector.broadcast %74 : vector<1x128xf32> to vector<8x128xf32>
    %169 = arith.addf %167, %168 : vector<8x128xf32>
    %cst_64 = arith.constant 0.000000e+00 : f32
    %170 = vector.broadcast %cst_64 : f32 to vector<8x128xf32>
    %171 = arith.maximumf %169, %170 : vector<8x128xf32>
    %172 = arith.truncf %171 : vector<8x128xf32> to vector<8x128xbf16>
    %c0_65 = arith.constant 0 : index
    %c0_66 = arith.constant 0 : index
    %173 = vector.load %arg11[%c0_65, %c0_66] : memref<128x96xbf16, #tpu.memory_space<vmem>>, vector<128x96xbf16>
    %cst_67 = arith.constant dense<0.000000e+00> : vector<8x96xf32>
    %174 = tpu.matmul %172, %173, %cst_67 {dimension_numbers = #tpu.dot_dimension_numbers<[1], [0], [0], [1], [0, 0, 1, 1], [], []>} : vector<8x128xbf16>, vector<128x96xbf16>, vector<8x96xf32> -> vector<8x96xf32>
    %175 = vector.broadcast %72 : vector<1x96xf32> to vector<8x96xf32>
    %176 = arith.addf %174, %175 : vector<8x96xf32>
    %cst_68 = arith.constant dense<0.000000e+00> : vector<8xf32>
    %177 = vector.multi_reduction <add>, %176, %cst_68 [1] : vector<8x96xf32> to vector<8xf32>
    %178 = vector.shape_cast %177 : vector<8xf32> to vector<8x1xf32>
    %cst_69 = arith.constant 9.600000e+01 : f32
    %179 = vector.broadcast %cst_69 : f32 to vector<8x1xf32>
    %180 = arith.divf %178, %179 : vector<8x1xf32>
    %181 = vector.broadcast %180 : vector<8x1xf32> to vector<8x96xf32>
    %182 = arith.subf %176, %181 : vector<8x96xf32>
    %183 = arith.mulf %182, %182 : vector<8x96xf32>
    %cst_70 = arith.constant dense<0.000000e+00> : vector<8xf32>
    %184 = vector.multi_reduction <add>, %183, %cst_70 [1] : vector<8x96xf32> to vector<8xf32>
    %185 = vector.shape_cast %184 : vector<8xf32> to vector<8x1xf32>
    %cst_71 = arith.constant 9.600000e+01 : f32
    %186 = vector.broadcast %cst_71 : f32 to vector<8x1xf32>
    %187 = arith.divf %185, %186 : vector<8x1xf32>
    %cst_72 = arith.constant 9.99999974E-6 : f32
    %188 = vector.broadcast %cst_72 : f32 to vector<8x1xf32>
    %189 = arith.addf %187, %188 : vector<8x1xf32>
    %190 = math.rsqrt %189 : vector<8x1xf32>
    %191 = vector.broadcast %190 : vector<8x1xf32> to vector<8x96xf32>
    %192 = arith.mulf %182, %191 : vector<8x96xf32>
    %193 = vector.broadcast %70 : vector<1x96xf32> to vector<8x96xf32>
    %194 = arith.mulf %192, %193 : vector<8x96xf32>
    %195 = vector.broadcast %71 : vector<1x96xf32> to vector<8x96xf32>
    %196 = arith.addf %194, %195 : vector<8x96xf32>
    %c0_73 = arith.constant 0 : index
    %c0_74 = arith.constant 0 : index
    %197 = vector.load %arg14[%c0_73, %c0_74] : memref<8x96xf32, #tpu.memory_space<vmem>>, vector<8x96xf32>
    tpu.vector_store %arg14[%c0_73, %c0_74], %196 {strides = array<i32>} : memref<8x96xf32, #tpu.memory_space<vmem>>, vector<8x96xf32>,
    return
  }
  func.func @transform_0(%arg0: i32) -> (i32, i32) {
    %c0_i32 = arith.constant 0 : i32
    %c0_i32_0 = arith.constant 0 : i32
    return %arg0, %c0_i32 : i32, i32
  }
  func.func @transform_1(%arg0: i32) -> (i32, i32) {
    %c0_i32 = arith.constant 0 : i32
    %c0_i32_0 = arith.constant 0 : i32
    return %arg0, %c0_i32 : i32, i32
  }
  func.func @transform_2(%arg0: i32) -> (i32, i32) {
    %c0_i32 = arith.constant 0 : i32
    %c0_i32_0 = arith.constant 0 : i32
    return %arg0, %c0_i32 : i32, i32
  }
  func.func @transform_3(%arg0: i32) -> (i32, i32) {
    %c0_i32 = arith.constant 0 : i32
    %c0_i32_0 = arith.constant 0 : i32
    %c0_i32_1 = arith.constant 0 : i32
    return %c0_i32, %c0_i32_0 : i32, i32
  }
  func.func @transform_4(%arg0: i32) -> (i32, i32) {
    %c0_i32 = arith.constant 0 : i32
    %c0_i32_0 = arith.constant 0 : i32
    %c0_i32_1 = arith.constant 0 : i32
    return %c0_i32, %c0_i32_0 : i32, i32
  }
  func.func @transform_5(%arg0: i32) -> (i32, i32) {
    %c0_i32 = arith.constant 0 : i32
    %c0_i32_0 = arith.constant 0 : i32
    %c0_i32_1 = arith.constant 0 : i32
    return %c0_i32, %c0_i32_0 : i32, i32
  }
  func.func @transform_6(%arg0: i32) -> (i32, i32) {
    %c0_i32 = arith.constant 0 : i32
    %c0_i32_0 = arith.constant 0 : i32
    %c0_i32_1 = arith.constant 0 : i32
    return %c0_i32, %c0_i32_0 : i32, i32
  }
  func.func @transform_7(%arg0: i32) -> (i32, i32) {
    %c0_i32 = arith.constant 0 : i32
    %c0_i32_0 = arith.constant 0 : i32
    %c0_i32_1 = arith.constant 0 : i32
    return %c0_i32, %c0_i32_0 : i32, i32
  }
  func.func @transform_8(%arg0: i32) -> (i32, i32) {
    %c0_i32 = arith.constant 0 : i32
    %c0_i32_0 = arith.constant 0 : i32
    %c0_i32_1 = arith.constant 0 : i32
    return %c0_i32, %c0_i32_0 : i32, i32
  }
  func.func @transform_9(%arg0: i32) -> (i32, i32) {
    %c0_i32 = arith.constant 0 : i32
    %c0_i32_0 = arith.constant 0 : i32
    %c0_i32_1 = arith.constant 0 : i32
    return %c0_i32, %c0_i32_0 : i32, i32
  }
  func.func @transform_10(%arg0: i32) -> (i32, i32) {
    %c0_i32 = arith.constant 0 : i32
    %c0_i32_0 = arith.constant 0 : i32
    %c0_i32_1 = arith.constant 0 : i32
    return %c0_i32, %c0_i32_0 : i32, i32
  }
  func.func @transform_11(%arg0: i32) -> (i32, i32) {
    %c0_i32 = arith.constant 0 : i32
    %c0_i32_0 = arith.constant 0 : i32
    %c0_i32_1 = arith.constant 0 : i32
    return %c0_i32, %c0_i32_0 : i32, i32
  }
  func.func @transform_12(%arg0: i32) -> (i32, i32) {
    %c0_i32 = arith.constant 0 : i32
    %c0_i32_0 = arith.constant 0 : i32
    %c0_i32_1 = arith.constant 0 : i32
    return %c0_i32, %c0_i32_0 : i32, i32
  }
  func.func @transform_13(%arg0: i32) -> (i32, i32) {
    %c0_i32 = arith.constant 0 : i32
    %c0_i32_0 = arith.constant 0 : i32
    return %arg0, %c0_i32 : i32, i32
  }
}

</mosaic_0001>

<llo_original>
// kernel: tpu_custom_call.1
$region0: #{tpu_custom_call.1}
  #allocation0 [shape = 'u32[]', space=smem, size = 0x4, offset = 0x4, fixed_abs, tag = 'smem constant byte address 0x4 - core index']
  #allocation1 [shape = 'u32[144,128]{1,0:T(1,128)}', space=vmem, size = 0x12000, scoped, tag = 'internal scratch']
  %s0 = inlined_call_operand.hbm [shape: bf16[16,32], index: 0, kind: input, shape index: {}]
  %s1 = inlined_call_operand.hbm [shape: bf16[16,32], index: 1, kind: input, shape index: {}]
  %s2 = inlined_call_operand.hbm [shape: bf16[16,32], index: 2, kind: input, shape index: {}]
  %s3 = inlined_call_operand.vmem [shape: bf16[32,64], index: 3, kind: input, shape index: {}]
  %s4 = inlined_call_operand.vmem [shape: bf16[32,64], index: 4, kind: input, shape index: {}]
  %s5 = inlined_call_operand.vmem [shape: bf16[32,160], index: 5, kind: input, shape index: {}]
  %s6 = inlined_call_operand.vmem [shape: f32[1,64], index: 6, kind: input, shape index: {}]
  %s7 = inlined_call_operand.vmem [shape: f32[1,64], index: 7, kind: input, shape index: {}]
  %s8 = inlined_call_operand.vmem [shape: f32[1,160], index: 8, kind: input, shape index: {}]
  %s9 = inlined_call_operand.vmem [shape: bf16[96,128], index: 9, kind: input, shape index: {}]
  %s10 = inlined_call_operand.vmem [shape: bf16[128,96], index: 10, kind: input, shape index: {}]
  %s11 = inlined_call_operand.vmem [shape: f32[5,96], index: 11, kind: input, shape index: {}]
  %s12 = inlined_call_operand.vmem [shape: f32[3,128], index: 12, kind: input, shape index: {}]
  %s13 = inlined_call_operand.hbm [shape: f32[16,96], index: 13, kind: output, shape index: {}]
  %s14 = sld [smem:[#allocation0]]
  $region97: #{tpu_custom_call.1} parent=0
    _
  %s16 = ssub.s32 1, %s14
  %s17 = scalar_select 0, %s16, %s14
  $region1: #{tpu_custom_call.1} parent=0
    #allocation2 [shape = 'u8[4096]{0}', space=vmem, size = 0x1000, scoped, tag = 'input window, operand 0']
    #allocation3 [shape = 's32[2]{0}', space=sflag, size = 0x8, scoped, tag = 'scoped memory for tpu_custom_call.1']
    #allocation4 [shape = 's32[2]{0}', space=sflag, size = 0x8, scoped, tag = 'scoped memory for tpu_custom_call.1']
    #allocation5 [shape = 'u8[4096]{0}', space=vmem, size = 0x1000, scoped, tag = 'input window, operand 1']
    #allocation6 [shape = 's32[2]{0}', space=sflag, size = 0x8, scoped, tag = 'scoped memory for tpu_custom_call.1']
    #allocation7 [shape = 'u8[4096]{0}', space=vmem, size = 0x1000, scoped, tag = 'input window, operand 2']
    #allocation8 [shape = 'u8[8192]{0}', space=vmem, size = 0x2000, scoped, tag = 'output window, operand 0']
    %18 = vsyncpa [#allocation3], 0
    %s19 = scalar_lea.sflag [#allocation3], 1
    %20 = vsyncpa %s19, 0
    %21 = vsyncpa [#allocation6], 0
    %s22 = scalar_lea.sflag [#allocation6], 1
    %23 = vsyncpa %s22, 0
    %24 = vsyncpa [#allocation4], 0
    %s25 = scalar_lea.sflag [#allocation4], 1
    %26 = vsyncpa %s25, 0
    loop: start=0, step=1, limit=4
    $region2: #{tpu_custom_call.1} parent=1 // loop_pre_header
      _
    $region3: #{tpu_custom_call.1} parent=1 // loop_header
      %s28 = sphi 0, %s32
      %p29 = scmp.ge.s32.totalorder %s28, 4
      %s38 = sphi 0, %s40
      %s41 = sphi 0, %s38
      %s42 = sphi 0, %s41
      %s58 = sphi 0, %s42
      %s64 = sphi 0, %s66
      %s67 = sphi 0, %s64
      %s68 = sphi 0, %s67
      %s84 = sphi 0, %s68
      %s90 = sphi 0, %s92
      %s93 = sphi 0, %s90
      %s94 = sphi 0, %s93
      %s110 = sphi 0, %s94
      %s114 = sphi 0, %s114
      %s116 = sphi 0, %s114
      %s117 = sphi 0, %s116
      %s131 = sphi 0, %s117
      %s135 = sphi 0, %s135
      %s137 = sphi 0, %s135
      %s138 = sphi 0, %s137
      %s152 = sphi 0, %s138
      %s156 = sphi 0, %s156
      %s158 = sphi 0, %s156
      %s159 = sphi 0, %s158
      %s173 = sphi 0, %s159
      %s177 = sphi 0, %s177
      %s179 = sphi 0, %s177
      %s180 = sphi 0, %s179
      %s194 = sphi 0, %s180
      %s198 = sphi 0, %s198
      %s200 = sphi 0, %s198
      %s201 = sphi 0, %s200
      %s215 = sphi 0, %s201
      %s219 = sphi 0, %s219
      %s221 = sphi 0, %s219
      %s222 = sphi 0, %s221
      %s236 = sphi 0, %s222
      %s240 = sphi 0, %s240
      %s242 = sphi 0, %s240
      %s243 = sphi 0, %s242
      %s257 = sphi 0, %s243
      %s261 = sphi 0, %s261
      %s263 = sphi 0, %s261
      %s264 = sphi 0, %s263
      %s278 = sphi 0, %s264
      %s282 = sphi 0, %s282
      %s284 = sphi 0, %s282
      %s285 = sphi 0, %s284
      %s299 = sphi 0, %s285
      %s303 = sphi 0, %s303
      %s305 = sphi 0, %s303
      %s306 = sphi 0, %s305
      %s320 = sphi 0, %s306
      %s326 = sphi 0, %s328
      %s329 = sphi 0, %s326
      %s330 = sphi 0, %s329
      %s346 = sphi 0, %s330
    $region4: #{tpu_custom_call.1} parent=1 // loop_header_branch
      %31 = sbr.rel (%p29) target = $region8
    $region5: #{tpu_custom_call.1} parent=1 // loop_body
      %s33 = ssub.s32 %s28, 1
      %s34 = ssub.s32 %s28, 2
      %s35 = sadd.s32 %s28, 1
      %s36 = ssub.s32 %s28, %s35
      %p37 = scmp.eq.s32.totalorder %s36, 0
      %s39 = sadd.s32 %s38, 1
      %s40 = scalar_select %p37, %s38, %s39
      %p43 = pneg %p37
      %p44 = scmp.eq.s32.totalorder %s28, 1
      %p45 = por %p43, %p44
      %p46 = scmp.ne.s32.totalorder %s38, %s41
      %p47 = scmp.eq.s32.totalorder %s28, 0
      %p48 = por %p46, %p47
      %p49 = scmp.ne.s32.totalorder %s38, %s41
      %p50 = scmp.eq.s32.totalorder %s33, 1
      %p51 = por %p49, %p50
      %p52 = scmp.ne.s32.totalorder %s41, %s42
      %p53 = scmp.eq.s32.totalorder %s33, 0
      %p54 = por %p52, %p53
      %p55 = scmp.ne.s32.totalorder %s41, %s42
      %p56 = scmp.eq.s32.totalorder %s34, 1
      %p57 = por %p55, %p56
      %p59 = scmp.ne.s32.totalorder %s42, %s58
      %p60 = scmp.eq.s32.totalorder %s34, 0
      %p61 = por %p59, %p60
      %s62 = ssub.s32 %s28, %s35
      %p63 = scmp.eq.s32.totalorder %s62, 0
      %s65 = sadd.s32 %s64, 1
      %s66 = scalar_select %p63, %s64, %s65
      %p69 = pneg %p63
      %p70 = scmp.eq.s32.totalorder %s28, 1
      %p71 = por %p69, %p70
      %p72 = scmp.ne.s32.totalorder %s64, %s67
      %p73 = scmp.eq.s32.totalorder %s28, 0
      %p74 = por %p72, %p73
      %p75 = scmp.ne.s32.totalorder %s64, %s67
      %p76 = scmp.eq.s32.totalorder %s33, 1
      %p77 = por %p75, %p76
      %p78 = scmp.ne.s32.totalorder %s67, %s68
      %p79 = scmp.eq.s32.totalorder %s33, 0
      %p80 = por %p78, %p79
      %p81 = scmp.ne.s32.totalorder %s67, %s68
      %p82 = scmp.eq.s32.totalorder %s34, 1
      %p83 = por %p81, %p82
      %p85 = scmp.ne.s32.totalorder %s68, %s84
      %p86 = scmp.eq.s32.totalorder %s34, 0
      %p87 = por %p85, %p86
      %s88 = ssub.s32 %s28, %s35
      %p89 = scmp.eq.s32.totalorder %s88, 0
      %s91 = sadd.s32 %s90, 1
      %s92 = scalar_select %p89, %s90, %s91
      %p95 = pneg %p89
      %p96 = scmp.eq.s32.totalorder %s28, 1
      %p97 = por %p95, %p96
      %p98 = scmp.ne.s32.totalorder %s90, %s93
      %p99 = scmp.eq.s32.totalorder %s28, 0
      %p100 = por %p98, %p99
      %p101 = scmp.ne.s32.totalorder %s90, %s93
      %p102 = scmp.eq.s32.totalorder %s33, 1
      %p103 = por %p101, %p102
      %p104 = scmp.ne.s32.totalorder %s93, %s94
      %p105 = scmp.eq.s32.totalorder %s33, 0
      %p106 = por %p104, %p105
      %p107 = scmp.ne.s32.totalorder %s93, %s94
      %p108 = scmp.eq.s32.totalorder %s34, 1
      %p109 = por %p107, %p108
      %p111 = scmp.ne.s32.totalorder %s94, %s110
      %p112 = scmp.eq.s32.totalorder %s34, 0
      %p113 = por %p111, %p112
      %s115 = sadd.s32 %s114, 1
      %p118 = scmp.eq.s32.totalorder %s28, 1
      %p119 = scmp.ne.s32.totalorder %s114, %s116
      %p120 = scmp.eq.s32.totalorder %s28, 0
      %p121 = por %p119, %p120
      %p122 = scmp.ne.s32.totalorder %s114, %s116
      %p123 = scmp.eq.s32.totalorder %s33, 1
      %p124 = por %p122, %p123
      %p125 = scmp.ne.s32.totalorder %s116, %s117
      %p126 = scmp.eq.s32.totalorder %s33, 0
      %p127 = por %p125, %p126
      %p128 = scmp.ne.s32.totalorder %s116, %s117
      %p129 = scmp.eq.s32.totalorder %s34, 1
      %p130 = por %p128, %p129
      %p132 = scmp.ne.s32.totalorder %s117, %s131
      %p133 = scmp.eq.s32.totalorder %s34, 0
      %p134 = por %p132, %p133
      %s136 = sadd.s32 %s135, 1
      %p139 = scmp.eq.s32.totalorder %s28, 1
      %p140 = scmp.ne.s32.totalorder %s135, %s137
      %p141 = scmp.eq.s32.totalorder %s28, 0
      %p142 = por %p140, %p141
      %p143 = scmp.ne.s32.totalorder %s135, %s137
      %p144 = scmp.eq.s32.totalorder %s33, 1
      %p145 = por %p143, %p144
      %p146 = scmp.ne.s32.totalorder %s137, %s138
      %p147 = scmp.eq.s32.totalorder %s33, 0
      %p148 = por %p146, %p147
      %p149 = scmp.ne.s32.totalorder %s137, %s138
      %p150 = scmp.eq.s32.totalorder %s34, 1
      %p151 = por %p149, %p150
      %p153 = scmp.ne.s32.totalorder %s138, %s152
      %p154 = scmp.eq.s32.totalorder %s34, 0
      %p155 = por %p153, %p154
      %s157 = sadd.s32 %s156, 1
      %p160 = scmp.eq.s32.totalorder %s28, 1
      %p161 = scmp.ne.s32.totalorder %s156, %s158
      %p162 = scmp.eq.s32.totalorder %s28, 0
      %p163 = por %p161, %p162
      %p164 = scmp.ne.s32.totalorder %s156, %s158
      %p165 = scmp.eq.s32.totalorder %s33, 1
      %p166 = por %p164, %p165
      %p167 = scmp.ne.s32.totalorder %s158, %s159
      %p168 = scmp.eq.s32.totalorder %s33, 0
      %p169 = por %p167, %p168
      %p170 = scmp.ne.s32.totalorder %s158, %s159
      %p171 = scmp.eq.s32.totalorder %s34, 1
      %p172 = por %p170, %p171
      %p174 = scmp.ne.s32.totalorder %s159, %s173
      %p175 = scmp.eq.s32.totalorder %s34, 0
      %p176 = por %p174, %p175
      %s178 = sadd.s32 %s177, 1
      %p181 = scmp.eq.s32.totalorder %s28, 1
      %p182 = scmp.ne.s32.totalorder %s177, %s179
      %p183 = scmp.eq.s32.totalorder %s28, 0
      %p184 = por %p182, %p183
      %p185 = scmp.ne.s32.totalorder %s177, %s179
      %p186 = scmp.eq.s32.totalorder %s33, 1
      %p187 = por %p185, %p186
      %p188 = scmp.ne.s32.totalorder %s179, %s180
      %p189 = scmp.eq.s32.totalorder %s33, 0
      %p190 = por %p188, %p189
      %p191 = scmp.ne.s32.totalorder %s179, %s180
      %p192 = scmp.eq.s32.totalorder %s34, 1
      %p193 = por %p191, %p192
      %p195 = scmp.ne.s32.totalorder %s180, %s194
      %p196 = scmp.eq.s32.totalorder %s34, 0
      %p197 = por %p195, %p196
      %s199 = sadd.s32 %s198, 1
      %p202 = scmp.eq.s32.totalorder %s28, 1
      %p203 = scmp.ne.s32.totalorder %s198, %s200
      %p204 = scmp.eq.s32.totalorder %s28, 0
      %p205 = por %p203, %p204
      %p206 = scmp.ne.s32.totalorder %s198, %s200
      %p207 = scmp.eq.s32.totalorder %s33, 1
      %p208 = por %p206, %p207
      %p209 = scmp.ne.s32.totalorder %s200, %s201
      %p210 = scmp.eq.s32.totalorder %s33, 0
      %p211 = por %p209, %p210
      %p212 = scmp.ne.s32.totalorder %s200, %s201
      %p213 = scmp.eq.s32.totalorder %s34, 1
      %p214 = por %p212, %p213
      %p216 = scmp.ne.s32.totalorder %s201, %s215
      %p217 = scmp.eq.s32.totalorder %s34, 0
      %p218 = por %p216, %p217
      %s220 = sadd.s32 %s219, 1
      %p223 = scmp.eq.s32.totalorder %s28, 1
      %p224 = scmp.ne.s32.totalorder %s219, %s221
      %p225 = scmp.eq.s32.totalorder %s28, 0
      %p226 = por %p224, %p225
      %p227 = scmp.ne.s32.totalorder %s219, %s221
      %p228 = scmp.eq.s32.totalorder %s33, 1
      %p229 = por %p227, %p228
      %p230 = scmp.ne.s32.totalorder %s221, %s222
      %p231 = scmp.eq.s32.totalorder %s33, 0
      %p232 = por %p230, %p231
      %p233 = scmp.ne.s32.totalorder %s221, %s222
      %p234 = scmp.eq.s32.totalorder %s34, 1
      %p235 = por %p233, %p234
      %p237 = scmp.ne.s32.totalorder %s222, %s236
      %p238 = scmp.eq.s32.totalorder %s34, 0
      %p239 = por %p237, %p238
      %s241 = sadd.s32 %s240, 1
      %p244 = scmp.eq.s32.totalorder %s28, 1
      %p245 = scmp.ne.s32.totalorder %s240, %s242
      %p246 = scmp.eq.s32.totalorder %s28, 0
      %p247 = por %p245, %p246
      %p248 = scmp.ne.s32.totalorder %s240, %s242
      %p249 = scmp.eq.s32.totalorder %s33, 1
      %p250 = por %p248, %p249
      %p251 = scmp.ne.s32.totalorder %s242, %s243
      %p252 = scmp.eq.s32.totalorder %s33, 0
      %p253 = por %p251, %p252
      %p254 = scmp.ne.s32.totalorder %s242, %s243
      %p255 = scmp.eq.s32.totalorder %s34, 1
      %p256 = por %p254, %p255
      %p258 = scmp.ne.s32.totalorder %s243, %s257
      %p259 = scmp.eq.s32.totalorder %s34, 0
      %p260 = por %p258, %p259
      %s262 = sadd.s32 %s261, 1
      %p265 = scmp.eq.s32.totalorder %s28, 1
      %p266 = scmp.ne.s32.totalorder %s261, %s263
      %p267 = scmp.eq.s32.totalorder %s28, 0
      %p268 = por %p266, %p267
      %p269 = scmp.ne.s32.totalorder %s261, %s263
      %p270 = scmp.eq.s32.totalorder %s33, 1
      %p271 = por %p269, %p270
      %p272 = scmp.ne.s32.totalorder %s263, %s264
      %p273 = scmp.eq.s32.totalorder %s33, 0
      %p274 = por %p272, %p273
      %p275 = scmp.ne.s32.totalorder %s263, %s264
      %p276 = scmp.eq.s32.totalorder %s34, 1
      %p277 = por %p275, %p276
      %p279 = scmp.ne.s32.totalorder %s264, %s278
      %p280 = scmp.eq.s32.totalorder %s34, 0
      %p281 = por %p279, %p280
      %s283 = sadd.s32 %s282, 1
      %p286 = scmp.eq.s32.totalorder %s28, 1
      %p287 = scmp.ne.s32.totalorder %s282, %s284
      %p288 = scmp.eq.s32.totalorder %s28, 0
      %p289 = por %p287, %p288
      %p290 = scmp.ne.s32.totalorder %s282, %s284
      %p291 = scmp.eq.s32.totalorder %s33, 1
      %p292 = por %p290, %p291
      %p293 = scmp.ne.s32.totalorder %s284, %s285
      %p294 = scmp.eq.s32.totalorder %s33, 0
      %p295 = por %p293, %p294
      %p296 = scmp.ne.s32.totalorder %s284, %s285
      %p297 = scmp.eq.s32.totalorder %s34, 1
      %p298 = por %p296, %p297
      %p300 = scmp.ne.s32.totalorder %s285, %s299
      %p301 = scmp.eq.s32.totalorder %s34, 0
      %p302 = por %p300, %p301
      %s304 = sadd.s32 %s303, 1
      %p307 = scmp.eq.s32.totalorder %s28, 1
      %p308 = scmp.ne.s32.totalorder %s303, %s305
      %p309 = scmp.eq.s32.totalorder %s28, 0
      %p310 = por %p308, %p309
      %p311 = scmp.ne.s32.totalorder %s303, %s305
      %p312 = scmp.eq.s32.totalorder %s33, 1
      %p313 = por %p311, %p312
      %p314 = scmp.ne.s32.totalorder %s305, %s306
      %p315 = scmp.eq.s32.totalorder %s33, 0
      %p316 = por %p314, %p315
      %p317 = scmp.ne.s32.totalorder %s305, %s306
      %p318 = scmp.eq.s32.totalorder %s34, 1
      %p319 = por %p317, %p318
      %p321 = scmp.ne.s32.totalorder %s306, %s320
      %p322 = scmp.eq.s32.totalorder %s34, 0
      %p323 = por %p321, %p322
      %s324 = ssub.s32 %s28, %s35
      %p325 = scmp.eq.s32.totalorder %s324, 0
      %s327 = sadd.s32 %s326, 1
      %s328 = scalar_select %p325, %s326, %s327
      %p331 = pneg %p325
      %p332 = scmp.eq.s32.totalorder %s28, 1
      %p333 = por %p331, %p332
      %p334 = scmp.ne.s32.totalorder %s326, %s329
      %p335 = scmp.eq.s32.totalorder %s28, 0
      %p336 = por %p334, %p335
      %p337 = scmp.ne.s32.totalorder %s326, %s329
      %p338 = scmp.eq.s32.totalorder %s33, 1
      %p339 = por %p337, %p338
      %p340 = scmp.ne.s32.totalorder %s329, %s330
      %p341 = scmp.eq.s32.totalorder %s33, 0
      %p342 = por %p340, %p341
      %p343 = scmp.ne.s32.totalorder %s329, %s330
      %p344 = scmp.eq.s32.totalorder %s34, 1
      %p345 = por %p343, %p344
      %p347 = scmp.ne.s32.totalorder %s330, %s346
      %p348 = scmp.eq.s32.totalorder %s34, 0
      %p349 = por %p347, %p348
      %p350 = scmp.le.s32.totalorder 1, %s28
      %p351 = scmp.lt.s32.totalorder %s28, 3
      %p352 = pnand %p350, %p351
      %p353 = pneg %p352
      // Predicated region
      $region9: #{tpu_custom_call.1} parent=5 // pred_check
        _
      $region10: #{tpu_custom_call.1} parent=5 // pred_check_branch
        %355 = sbr.rel (%p352) target = $region12
      $region11: #{tpu_custom_call.1} parent=5 // pred_region
        %s356 = ssub.s32 %s28, 1
        // Predicated region
        $region13: #{tpu_custom_call.1} parent=11 // pred_check
          %p357 = pneg %p127
        $region14: #{tpu_custom_call.1} parent=11 // pred_check_branch
          %359 = sbr.rel (%p357) target = $region16
        $region15: #{tpu_custom_call.1} parent=11 // pred_region
          _
        $region16: #{tpu_custom_call.1} parent=11 // pred_fallthru
          _
        // Predicated region
        $region17: #{tpu_custom_call.1} parent=11 // pred_check
          %p360 = pneg %p148
        $region18: #{tpu_custom_call.1} parent=11 // pred_check_branch
          %362 = sbr.rel (%p360) target = $region20
        $region19: #{tpu_custom_call.1} parent=11 // pred_region
          _
        $region20: #{tpu_custom_call.1} parent=11 // pred_fallthru
          _
        // Predicated region
        $region21: #{tpu_custom_call.1} parent=11 // pred_check
          %p363 = pneg %p169
        $region22: #{tpu_custom_call.1} parent=11 // pred_check_branch
          %365 = sbr.rel (%p363) target = $region24
        $region23: #{tpu_custom_call.1} parent=11 // pred_region
          _
        $region24: #{tpu_custom_call.1} parent=11 // pred_fallthru
          _
        // Predicated region
        $region25: #{tpu_custom_call.1} parent=11 // pred_check
          %p366 = pneg %p190
        $region26: #{tpu_custom_call.1} parent=11 // pred_check_branch
          %368 = sbr.rel (%p366) target = $region28
        $region27: #{tpu_custom_call.1} parent=11 // pred_region
          _
        $region28: #{tpu_custom_call.1} parent=11 // pred_fallthru
          _
        // Predicated region
        $region29: #{tpu_custom_call.1} parent=11 // pred_check
          %p369 = pneg %p211
        $region30: #{tpu_custom_call.1} parent=11 // pred_check_branch
          %371 = sbr.rel (%p369) target = $region32
        $region31: #{tpu_custom_call.1} parent=11 // pred_region
          _
        $region32: #{tpu_custom_call.1} parent=11 // pred_fallthru
          _
        // Predicated region
        $region33: #{tpu_custom_call.1} parent=11 // pred_check
          %p372 = pneg %p232
        $region34: #{tpu_custom_call.1} parent=11 // pred_check_branch
          %374 = sbr.rel (%p372) target = $region36
        $region35: #{tpu_custom_call.1} parent=11 // pred_region
          _
        $region36: #{tpu_custom_call.1} parent=11 // pred_fallthru
          _
        // Predicated region
        $region37: #{tpu_custom_call.1} parent=11 // pred_check
          %p375 = pneg %p253
        $region38: #{tpu_custom_call.1} parent=11 // pred_check_branch
          %377 = sbr.rel (%p375) target = $region40
        $region39: #{tpu_custom_call.1} parent=11 // pred_region
          _
        $region40: #{tpu_custom_call.1} parent=11 // pred_fallthru
          _
        // Predicated region
        $region41: #{tpu_custom_call.1} parent=11 // pred_check
          %p378 = pneg %p274
        $region42: #{tpu_custom_call.1} parent=11 // pred_check_branch
          %380 = sbr.rel (%p378) target = $region44
        $region43: #{tpu_custom_call.1} parent=11 // pred_region
          _
        $region44: #{tpu_custom_call.1} parent=11 // pred_fallthru
          _
        // Predicated region
        $region45: #{tpu_custom_call.1} parent=11 // pred_check
          %p381 = pneg %p295
        $region46: #{tpu_custom_call.1} parent=11 // pred_check_branch
          %383 = sbr.rel (%p381) target = $region48
        $region47: #{tpu_custom_call.1} parent=11 // pred_region
          _
        $region48: #{tpu_custom_call.1} parent=11 // pred_fallthru
          _
        // Predicated region
        $region49: #{tpu_custom_call.1} parent=11 // pred_check
          %p384 = pneg %p316
        $region50: #{tpu_custom_call.1} parent=11 // pred_check_branch
          %386 = sbr.rel (%p384) target = $region52
        $region51: #{tpu_custom_call.1} parent=11 // pred_region
          _
        $region52: #{tpu_custom_call.1} parent=11 // pred_fallthru
          _
      $region12: #{tpu_custom_call.1} parent=5 // pred_fallthru
        _
      %p387 = scmp.lt.s32.totalorder %s28, 2
      // Predicated region
      $region53: #{tpu_custom_call.1} parent=5 // pred_check
        %p388 = pneg %p387
      $region54: #{tpu_custom_call.1} parent=5 // pred_check_branch
        %390 = sbr.rel (%p388) target = $region56
      $region55: #{tpu_custom_call.1} parent=5 // pred_region
        // Predicated region
        $region57: #{tpu_custom_call.1} parent=55 // pred_check
          %p391 = pneg %p48
        $region58: #{tpu_custom_call.1} parent=55 // pred_check_branch
          %393 = sbr.rel (%p391) target = $region60
        $region59: #{tpu_custom_call.1} parent=55 // pred_region
          %s394 = sand.u32 %s38, 1
          %s395 = scalar_lea.sflag [#allocation3], %s394
          %s396 = sand.u32 %s38, 1
          %s397 = smul.addr %s396, 4
          %s398 = scalar_lea.vmem [#allocation2], %s397
          %s400 = ssub.s32 64, 64
          %401 = vsyncadd %s395, %s400
          %s402 = smul.addr %s28, 64
          %s403 = scalar_lea.hbm %s0, %s402
          %s405 = sshll.u32 %s398, 4
          %s406 = int_to_ptr.vmem [resolvable:$true] %s405
          %408 = dma.hbm_to_vmem [thread:$0]  %s403, 64, %s406, %s395
        $region60: #{tpu_custom_call.1} parent=55 // pred_fallthru
          _
        // Predicated region
        $region61: #{tpu_custom_call.1} parent=55 // pred_check
          %p409 = pneg %p74
        $region62: #{tpu_custom_call.1} parent=55 // pred_check_branch
          %411 = sbr.rel (%p409) target = $region64
        $region63: #{tpu_custom_call.1} parent=55 // pred_region
          %s412 = sand.u32 %s28, 1
          %s413 = scalar_lea.sflag [#allocation6], %s412
          %s414 = sand.u32 %s64, 1
          %s415 = smul.addr %s414, 4
          %s416 = scalar_lea.vmem [#allocation5], %s415
          %s418 = ssub.s32 64, 64
          %419 = vsyncadd %s413, %s418
          %s420 = smul.addr %s28, 64
          %s421 = scalar_lea.hbm %s1, %s420
          %s423 = sshll.u32 %s416, 4
          %s424 = int_to_ptr.vmem [resolvable:$true] %s423
          %426 = dma.hbm_to_vmem [thread:$0]  %s421, 64, %s424, %s413
        $region64: #{tpu_custom_call.1} parent=55 // pred_fallthru
          _
        // Predicated region
        $region65: #{tpu_custom_call.1} parent=55 // pred_check
          %p427 = pneg %p100
        $region66: #{tpu_custom_call.1} parent=55 // pred_check_branch
          %429 = sbr.rel (%p427) target = $region68
        $region67: #{tpu_custom_call.1} parent=55 // pred_region
          %s430 = sand.u32 %s28, 1
          %s431 = scalar_lea.sflag [#allocation6], %s430
          %s432 = sand.u32 %s90, 1
          %s433 = smul.addr %s432, 4
          %s434 = scalar_lea.vmem [#allocation7], %s433
          %s436 = ssub.s32 64, 64
          %437 = vsyncadd %s431, %s436
          %s438 = smul.addr %s28, 64
          %s439 = scalar_lea.hbm %s2, %s438
          %s441 = sshll.u32 %s434, 4
          %s442 = int_to_ptr.vmem [resolvable:$true] %s441
          %444 = dma.hbm_to_vmem [thread:$0]  %s439, 64, %s442, %s431
        $region68: #{tpu_custom_call.1} parent=55 // pred_fallthru
          _
      $region56: #{tpu_custom_call.1} parent=5 // pred_fallthru
        _
      %p445 = scmp.le.s32.totalorder 1, %s28
      %p446 = scmp.lt.s32.totalorder %s28, 3
      %p447 = pnand %p445, %p446
      %p448 = pneg %p447
      // Predicated region
      $region69: #{tpu_custom_call.1} parent=5 // pred_check
        _
      $region70: #{tpu_custom_call.1} parent=5 // pred_check_branch
        %450 = sbr.rel (%p447) target = $region72
      $region71: #{tpu_custom_call.1} parent=5 // pred_region
        %s451 = ssub.s32 %s28, 1
        %s452 = sand.u32 %s41, 1
        %s453 = scalar_lea.sflag [#allocation3], %s452
        %s454 = sand.u32 %s41, 1
        %s455 = smul.addr %s454, 4
        %s456 = scalar_lea.vmem [#allocation2], %s455
        // Predicated region
        $region73: #{tpu_custom_call.1} parent=71 // pred_check
          %p457 = pneg %p54
        $region74: #{tpu_custom_call.1} parent=71 // pred_check_branch
          %459 = sbr.rel (%p457) target = $region76
        $region75: #{tpu_custom_call.1} parent=71 // pred_region
          %460 = dma.done %s453, 64
        $region76: #{tpu_custom_call.1} parent=71 // pred_fallthru
          _
        %s461 = sand.u32 %s33, 1
        %s462 = scalar_lea.sflag [#allocation6], %s461
        %s463 = sand.u32 %s67, 1
        %s464 = smul.addr %s463, 4
        %s465 = scalar_lea.vmem [#allocation5], %s464
        // Predicated region
        $region77: #{tpu_custom_call.1} parent=71 // pred_check
          %p466 = pneg %p80
        $region78: #{tpu_custom_call.1} parent=71 // pred_check_branch
          %468 = sbr.rel (%p466) target = $region80
        $region79: #{tpu_custom_call.1} parent=71 // pred_region
          %469 = dma.done %s462, 64
        $region80: #{tpu_custom_call.1} parent=71 // pred_fallthru
          _
        %s470 = sand.u32 %s33, 1
        %s471 = scalar_lea.sflag [#allocation6], %s470
        %s472 = sand.u32 %s93, 1
        %s473 = smul.addr %s472, 4
        %s474 = scalar_lea.vmem [#allocation7], %s473
        // Predicated region
        $region81: #{tpu_custom_call.1} parent=71 // pred_check
          %p475 = pneg %p106
        $region82: #{tpu_custom_call.1} parent=71 // pred_check_branch
          %477 = sbr.rel (%p475) target = $region84
        $region83: #{tpu_custom_call.1} parent=71 // pred_region
          %478 = dma.done %s471, 64
        $region84: #{tpu_custom_call.1} parent=71 // pred_fallthru
          _
        %s479 = sand.u32 %s41, 1
        %s480 = scalar_lea.sflag [#allocation3], %s479
        %s481 = sand.u32 %s41, 1
        %s482 = smul.addr %s481, 4
        %s483 = scalar_lea.vmem [#allocation2], %s482
        %p484 = pneg %p54
        %p485 = pneg %p51
        %s486 = sand.u32 %s33, 1
        %s487 = scalar_lea.sflag [#allocation6], %s486
        %s488 = sand.u32 %s67, 1
        %s489 = smul.addr %s488, 4
        %s490 = scalar_lea.vmem [#allocation5], %s489
        %p491 = pneg %p80
        %p492 = pneg %p77
        %s493 = sand.u32 %s33, 1
        %s494 = scalar_lea.sflag [#allocation6], %s493
        %s495 = sand.u32 %s93, 1
        %s496 = smul.addr %s495, 4
        %s497 = scalar_lea.vmem [#allocation7], %s496
        %p498 = pneg %p106
        %p499 = pneg %p103
        %p500 = pneg %p127
        %p501 = pneg %p124
        %p502 = pneg %p148
        %p503 = pneg %p145
        %p504 = pneg %p169
        %p505 = pneg %p166
        %p506 = pneg %p190
        %p507 = pneg %p187
        %p508 = pneg %p211
        %p509 = pneg %p208
        %p510 = pneg %p232
        %p511 = pneg %p229
        %p512 = pneg %p253
        %p513 = pneg %p250
        %p514 = pneg %p274
        %p515 = pneg %p271
        %p516 = pneg %p295
        %p517 = pneg %p292
        %p518 = pneg %p316
        %p519 = pneg %p313
        %p520 = pneg %p342
        %p521 = pneg %p339
        %s522 = sand.u32 %s329, 1
        %s523 = scalar_lea.sflag [#allocation4], %s522
        %s524 = sand.u32 %s329, 1
        %s525 = smul.addr %s524, 8
        %s526 = scalar_lea.vmem [#allocation8], %s525
        %v528 = vld [vmem:[%s456] sm:$0xf]
        %v529 = vld [vmem:[%s465] sm:$0xf]
        %v530 = vld [vmem:[%s474] sm:$0xf]
        %v531 = vld [vmem:[%s3] sm:$0xf]
        %v532 = vld [vmem:[%s3 + $0x4] sm:$0xf]
        %v533 = vld [vmem:[%s3 + $0x8] sm:$0xf]
        %v534 = vld [vmem:[%s3 + $0xc] sm:$0xf]
        %v535 = vld [vmem:[%s6] sm:$0x1]
        %v537 = vlaneseq
        %v538 = vshrl.u32 %v537, 7
        %v539 = vsub.s32 0, %v538
        %v540 = vrot.slane %v535, %v539
        %v546 = vunpack.c.l.b16 %v531
        %v547 = vunpack.c.l.b16 %v532
        %v548 = vunpack.c.l.b16 %v533
        %v549 = vunpack.c.l.b16 %v534
        %v550 = vpack.c.b16 %v547, %v546
        %v551 = vpack.c.b16 %v549, %v548
        %vm554 = vcmask 261120
        %v556 = vsel %vm554, %v528, 0
        %558 = vmatprep.subr.bf16.mxu0 0
        %559 = vmatpush1.bf16.msra.mxu0 %v550
        %560 = vmatprep.subr.bf16.mxu0 0
        %561 = vmatpush1.bf16.msra.mxu0 %v551
        %562 = vmatprep.subr.bf16.mxu0 0
        %563 = vmatpush1.bf16.msra.mxu0 0
        %564 = vmatprep.subr.bf16.mxu0 0
        %565 = vmatpush1.bf16.msra.mxu0 0
        %566 = vmatprep.subr.bf16.mxu0 0
        %567 = vmatpush1.bf16.msra.mxu0 0
        %568 = vmatprep.subr.bf16.mxu0 0
        %569 = vmatpush1.bf16.msra.mxu0 0
        %570 = vmatprep.subr.bf16.mxu0 0
        %571 = vmatpush1.bf16.msra.mxu0 0
        %572 = vmatprep.subr.bf16.mxu0 0
        %573 = vmatpush1.bf16.msra.mxu0 0
        %574 = vmatprep.subr.bf16.mxu0 0
        %575 = vmatpush1.bf16.msra.mxu0 0
        %576 = vmatprep.subr.bf16.mxu0 0
        %577 = vmatpush1.bf16.msra.mxu0 0
        %578 = vmatprep.subr.bf16.mxu0 0
        %579 = vmatpush1.bf16.msra.mxu0 0
        %580 = vmatprep.subr.bf16.mxu0 0
        %581 = vmatpush1.bf16.msra.mxu0 0
        %582 = vmatprep.subr.bf16.mxu0 0
        %583 = vmatpush1.bf16.msra.mxu0 0
        %584 = vmatprep.subr.bf16.mxu0 0
        %585 = vmatpush1.bf16.msra.mxu0 0
        %586 = vmatprep.subr.bf16.mxu0 0
        %587 = vmatpush1.bf16.msra.mxu0 0
        %588 = vmatprep.subr.bf16.mxu0 0
        %589 = vmatpush1.bf16.msra.mxu0 0
        %590 = vmatprep.mubr.bf16.mxu0 0
        %591 = vmatmul.mubr.bf16.gmra.mrb[0].mxu0 %v556
        %v592 = vpop.f32.mrb[0].mxu0
        %v593 = vadd.f32 %v540, %v592
        %v594 = vpop.f32.mrb[0].mxu0
        %v595 = vpop.f32.mrb[0].mxu0
        %v596 = vpop.f32.mrb[0].mxu0
        %597 = vdwg.mxu0
        %v598 = vld [vmem:[%s4] sm:$0xf]
        %v599 = vld [vmem:[%s4 + $0x4] sm:$0xf]
        %v600 = vld [vmem:[%s4 + $0x8] sm:$0xf]
        %v601 = vld [vmem:[%s4 + $0xc] sm:$0xf]
        %v602 = vld [vmem:[%s7] sm:$0x1]
        %v604 = vlaneseq
        %v605 = vshrl.u32 %v604, 7
        %v606 = vsub.s32 0, %v605
        %v607 = vrot.slane %v602, %v606
        %v613 = vunpack.c.l.b16 %v598
        %v614 = vunpack.c.l.b16 %v599
        %v615 = vunpack.c.l.b16 %v600
        %v616 = vunpack.c.l.b16 %v601
        %v617 = vpack.c.b16 %v614, %v613
        %v618 = vpack.c.b16 %v616, %v615
        %v622 = vsel %vm554, %v529, 0
        %624 = vmatprep.subr.bf16.mxu0 0
        %625 = vmatpush1.bf16.msra.mxu0 %v617
        %626 = vmatprep.subr.bf16.mxu0 0
        %627 = vmatpush1.bf16.msra.mxu0 %v618
        %628 = vmatprep.subr.bf16.mxu0 0
        %629 = vmatpush1.bf16.msra.mxu0 0
        %630 = vmatprep.subr.bf16.mxu0 0
        %631 = vmatpush1.bf16.msra.mxu0 0
        %632 = vmatprep.subr.bf16.mxu0 0
        %633 = vmatpush1.bf16.msra.mxu0 0
        %634 = vmatprep.subr.bf16.mxu0 0
        %635 = vmatpush1.bf16.msra.mxu0 0
        %636 = vmatprep.subr.bf16.mxu0 0
        %637 = vmatpush1.bf16.msra.mxu0 0
        %638 = vmatprep.subr.bf16.mxu0 0
        %639 = vmatpush1.bf16.msra.mxu0 0
        %640 = vmatprep.subr.bf16.mxu0 0
        %641 = vmatpush1.bf16.msra.mxu0 0
        %642 = vmatprep.subr.bf16.mxu0 0
        %643 = vmatpush1.bf16.msra.mxu0 0
        %644 = vmatprep.subr.bf16.mxu0 0
        %645 = vmatpush1.bf16.msra.mxu0 0
        %646 = vmatprep.subr.bf16.mxu0 0
        %647 = vmatpush1.bf16.msra.mxu0 0
        %648 = vmatprep.subr.bf16.mxu0 0
        %649 = vmatpush1.bf16.msra.mxu0 0
        %650 = vmatprep.subr.bf16.mxu0 0
        %651 = vmatpush1.bf16.msra.mxu0 0
        %652 = vmatprep.subr.bf16.mxu0 0
        %653 = vmatpush1.bf16.msra.mxu0 0
        %654 = vmatprep.subr.bf16.mxu0 0
        %655 = vmatpush1.bf16.msra.mxu0 0
        %656 = vmatprep.mubr.bf16.mxu0 0
        %657 = vmatmul.mubr.bf16.gmra.mrb[0].mxu0 %v622
        %v658 = vpop.f32.mrb[0].mxu0
        %v659 = vadd.f32 %v607, %v658
        %v660 = vpop.f32.mrb[0].mxu0
        %v661 = vpop.f32.mrb[0].mxu0
        %v662 = vpop.f32.mrb[0].mxu0
        %663 = vdwg.mxu0
        %v664 = vld [vmem:[%s5] sm:$0xff]
        %v665 = vld [vmem:[%s5 + $0x8] sm:$0xff]
        %v666 = vld [vmem:[%s5 + $0x10] sm:$0xff]
        %v667 = vld [vmem:[%s5 + $0x18] sm:$0xff]
        %v668 = vld [vmem:[%s8] sm:$0x3]
        %v670 = vlaneseq
        %v671 = vshrl.u32 %v670, 7
        %v672 = vsub.s32 0, %v671
        %v673 = vrot.slane %v668, %v672
        %v674 = vlaneseq
        %v675 = vshrl.u32 %v674, 7
        %v676 = vsub.s32 1, %v675
        %v677 = vrot.slane %v668, %v676
        %v684 = vunpack.c.l.b16 %v664
        %v685 = vunpack.c.h.b16 %v664
        %v686 = vunpack.c.l.b16 %v665
        %v687 = vunpack.c.h.b16 %v665
        %v688 = vunpack.c.l.b16 %v666
        %v689 = vunpack.c.h.b16 %v666
        %v690 = vunpack.c.l.b16 %v667
        %v691 = vunpack.c.h.b16 %v667
        %v692 = vpack.c.b16 %v686, %v684
        %v693 = vpack.c.b16 %v687, %v685
        %v694 = vpack.c.b16 %v690, %v688
        %v695 = vpack.c.b16 %v691, %v689
        %v701 = vsel %vm554, %v530, 0
        %703 = vmatprep.subr.bf16.mxu0 %v693
        %704 = vmatpush1.bf16.msra.mxu0 %v692
        %705 = vmatprep.subr.bf16.mxu0 %v695
        %706 = vmatpush1.bf16.msra.mxu0 %v694
        %707 = vmatprep.subr.bf16.mxu0 0
        %708 = vmatpush1.bf16.msra.mxu0 0
        %709 = vmatprep.subr.bf16.mxu0 0
        %710 = vmatpush1.bf16.msra.mxu0 0
        %711 = vmatprep.subr.bf16.mxu0 0
        %712 = vmatpush1.bf16.msra.mxu0 0
        %713 = vmatprep.subr.bf16.mxu0 0
        %714 = vmatpush1.bf16.msra.mxu0 0
        %715 = vmatprep.subr.bf16.mxu0 0
        %716 = vmatpush1.bf16.msra.mxu0 0
        %717 = vmatprep.subr.bf16.mxu0 0
        %718 = vmatpush1.bf16.msra.mxu0 0
        %719 = vmatprep.subr.bf16.mxu0 0
        %720 = vmatpush1.bf16.msra.mxu0 0
        %721 = vmatprep.subr.bf16.mxu0 0
        %722 = vmatpush1.bf16.msra.mxu0 0
        %723 = vmatprep.subr.bf16.mxu0 0
        %724 = vmatpush1.bf16.msra.mxu0 0
        %725 = vmatprep.subr.bf16.mxu0 0
        %726 = vmatpush1.bf16.msra.mxu0 0
        %727 = vmatprep.subr.bf16.mxu0 0
        %728 = vmatpush1.bf16.msra.mxu0 0
        %729 = vmatprep.subr.bf16.mxu0 0
        %730 = vmatpush1.bf16.msra.mxu0 0
        %731 = vmatprep.subr.bf16.mxu0 0
        %732 = vmatpush1.bf16.msra.mxu0 0
        %733 = vmatprep.subr.bf16.mxu0 0
        %734 = vmatpush1.bf16.msra.mxu0 0
        %735 = vmatprep.mubr.bf16.mxu0 0
        %736 = vmatmul.mubr.bf16.gmra.mrb[0].mxu0 %v701
        %v737 = vpop.f32.mrb[0].mxu0
        %v738 = vadd.f32 %v673, %v737
        %v739 = vpop.f32.mrb[0].mxu0
        %v740 = vadd.f32 %v677, %v739
        %v741 = vpop.f32.mrb[0].mxu0
        %v742 = vpop.f32.mrb[0].mxu0
        %743 = vdwg.mxu0
        %v744 = vxor.u32 %v738, 2147483648
        %v745 = vmul.f32 %v744, 1.442695
        %v746 = vpow.pop %v745
        %v747 = vadd.f32 %v746, 1.0
        %v748 = vrcp.pop %v747
        %v749 = vmul.f32 1.0, %v748
        %v750 = vunpack.c.l.bf16 %v528
        %752 = vrot.lane.b32.xlu0 %v750, 64
        %v753 = vpop.permute.xlu0 %752
        %v755 = vmul.f32 %v749, %v753
        %v756 = vunpack.c.l.bf16 %v529
        %758 = vrot.lane.b32.xlu0 %v756, 96
        %v759 = vpop.permute.xlu0 %758
        %v761 = vmul.f32 %v749, %v759
        %763 = vrot.lane.b32.xlu0 %v761, 96
        %v764 = vpop.permute.xlu0 %763
        %v766 = vadd.f32 %v755, %v764
        %v767 = vxor.u32 %v740, 2147483648
        %v768 = vmul.f32 %v767, 1.442695
        %v769 = vpow.pop %v768
        %v770 = vadd.f32 %v769, 1.0
        %v771 = vrcp.pop %v770
        %v772 = vmul.f32 1.0, %v771
        %v773 = vunpack.c.l.bf16 %v530
        %v774 = vmul.f32 %v772, %v773
        %776 = vrot.lane.b32.xlu0 %v774, 64
        %v777 = vpop.permute.xlu0 %776
        %v779 = vadd.f32 %v766, %v777
        %v780 = vxor.u32 %v593, 2147483648
        %v781 = vmul.f32 %v780, 1.442695
        %v782 = vpow.pop %v781
        %v783 = vadd.f32 %v782, 1.0
        %v784 = vrcp.pop %v783
        %v785 = vmul.f32 1.0, %v784
        %787 = vrot.lane.b32.xlu0 %v593, 96
        %v788 = vpop.permute.xlu0 %787
        %v790 = vmul.f32 %v785, %v788
        %v791 = vxor.u32 %v659, 2147483648
        %v792 = vmul.f32 %v791, 1.442695
        %v793 = vpow.pop %v792
        %v794 = vadd.f32 %v793, 1.0
        %v795 = vrcp.pop %v794
        %v796 = vmul.f32 1.0, %v795
        %798 = vrot.lane.b32.xlu0 %v659, 96
        %v799 = vpop.permute.xlu0 %798
        %v801 = vmul.f32 %v796, %v799
        %803 = vrot.lane.b32.xlu0 %v738, 96
        %v804 = vpop.permute.xlu0 %803
        %v806 = vmul.f32 %v749, %v804
        %v807 = vld [vmem:[%s11] sm:$0x1]
        %v808 = vld [vmem:[%s11 + $0x1] sm:$0x1]
        %v809 = vld [vmem:[%s11 + $0x2] sm:$0x1]
        %v810 = vld [vmem:[%s11 + $0x3] sm:$0x1]
        %v811 = vld [vmem:[%s11 + $0x4] sm:$0x1]
        %v812 = vld [vmem:[%s12] sm:$0x1]
        %v813 = vld [vmem:[%s12 + $0x1] sm:$0x1]
        %v814 = vld [vmem:[%s12 + $0x2] sm:$0x1]
        %816 = vrot.lane.b32.xlu0 %v801, 32
        %v817 = vpop.permute.xlu0 %816
        %820 = vrot.lane.b32.xlu0 %v806, 64
        %v821 = vpop.permute.xlu0 %820
        %v823 = vsel %vm554, %v790, %v817
        %vm824 = vcmask 523264
        %v825 = vsel %vm824, %v823, %v821
        %vm826 = vcmask 785408
        %v827 = vsel %vm826, %v825, 0.0
        %828 = vadd.xlane.f32.xlu0 %v827
        %v829 = vpop.xlane.xlu0 %828
        %v830 = vrcp.pop 96.0
        %v831 = vmul.f32 %v829, %v830
        %v832 = vsub.f32 %v825, %v831
        %v833 = vmul.f32 %v832, %v832
        %v834 = vsel %vm826, %v833, 0.0
        %835 = vadd.xlane.f32.xlu0 %v834
        %v836 = vpop.xlane.xlu0 %835
        %v837 = vmul.f32 %v836, %v830
        %v838 = vadd.f32 %v837, 1e-05
        %v839 = vrsqrt.pop %v838
        %v840 = vmul.f32 %v832, %v839
        %v841 = vlaneseq
        %v842 = vshrl.u32 %v841, 7
        %v843 = vsub.s32 0, %v842
        %v844 = vrot.slane %v807, %v843
        %v845 = vmul.f32 %v840, %v844
        %v846 = vlaneseq
        %v847 = vshrl.u32 %v846, 7
        %v848 = vsub.s32 0, %v847
        %v849 = vrot.slane %v808, %v848
        %v850 = vadd.f32 %v845, %v849
        %v851 = vpack.c.bf16 %v850, %v850
        %v852 = vld [vmem:[%s9] sm:$0xf]
        %v853 = vld [vmem:[%s9 + $0x4] sm:$0xf]
        %v854 = vld [vmem:[%s9 + $0x8] sm:$0xf]
        %v855 = vld [vmem:[%s9 + $0xc] sm:$0xf]
        %v856 = vld [vmem:[%s9 + $0x10] sm:$0xf]
        %v857 = vld [vmem:[%s9 + $0x14] sm:$0xf]
        %v858 = vld [vmem:[%s9 + $0x18] sm:$0xf]
        %v859 = vld [vmem:[%s9 + $0x1c] sm:$0xf]
        %v860 = vld [vmem:[%s9 + $0x20] sm:$0xf]
        %v861 = vld [vmem:[%s9 + $0x24] sm:$0xf]
        %v862 = vld [vmem:[%s9 + $0x28] sm:$0xf]
        %v863 = vld [vmem:[%s9 + $0x2c] sm:$0xf]
        %v864 = vlaneseq
        %v865 = vshrl.u32 %v864, 7
        %v866 = vsub.s32 0, %v865
        %v867 = vrot.slane %v814, %v866
        %v880 = vunpack.c.l.b16 %v852
        %v881 = vunpack.c.l.b16 %v853
        %v882 = vunpack.c.l.b16 %v854
        %v883 = vunpack.c.l.b16 %v855
        %v884 = vunpack.c.l.b16 %v856
        %v885 = vunpack.c.l.b16 %v857
        %v886 = vunpack.c.l.b16 %v858
        %v887 = vunpack.c.l.b16 %v859
        %v888 = vunpack.c.l.b16 %v860
        %v889 = vunpack.c.l.b16 %v861
        %v890 = vunpack.c.l.b16 %v862
        %v891 = vunpack.c.l.b16 %v863
        %v892 = vpack.c.b16 %v881, %v880
        %v893 = vpack.c.b16 %v883, %v882
        %v894 = vpack.c.b16 %v885, %v884
        %v895 = vpack.c.b16 %v887, %v886
        %v896 = vpack.c.b16 %v889, %v888
        %v897 = vpack.c.b16 %v891, %v890
        %v905 = vsel %vm826, %v851, 0
        %907 = vmatprep.subr.bf16.mxu0 0
        %908 = vmatpush1.bf16.msra.mxu0 %v892
        %909 = vmatprep.subr.bf16.mxu0 0
        %910 = vmatpush1.bf16.msra.mxu0 %v893
        %911 = vmatprep.subr.bf16.mxu0 0
        %912 = vmatpush1.bf16.msra.mxu0 %v894
        %913 = vmatprep.subr.bf16.mxu0 0
        %914 = vmatpush1.bf16.msra.mxu0 %v895
        %915 = vmatprep.subr.bf16.mxu0 0
        %916 = vmatpush1.bf16.msra.mxu0 %v896
        %917 = vmatprep.subr.bf16.mxu0 0
        %918 = vmatpush1.bf16.msra.mxu0 %v897
        %919 = vmatprep.subr.bf16.mxu0 0
        %920 = vmatpush1.bf16.msra.mxu0 0
        %921 = vmatprep.subr.bf16.mxu0 0
        %922 = vmatpush1.bf16.msra.mxu0 0
        %923 = vmatprep.subr.bf16.mxu0 0
        %924 = vmatpush1.bf16.msra.mxu0 0
        %925 = vmatprep.subr.bf16.mxu0 0
        %926 = vmatpush1.bf16.msra.mxu0 0
        %927 = vmatprep.subr.bf16.mxu0 0
        %928 = vmatpush1.bf16.msra.mxu0 0
        %929 = vmatprep.subr.bf16.mxu0 0
        %930 = vmatpush1.bf16.msra.mxu0 0
        %931 = vmatprep.subr.bf16.mxu0 0
        %932 = vmatpush1.bf16.msra.mxu0 0
        %933 = vmatprep.subr.bf16.mxu0 0
        %934 = vmatpush1.bf16.msra.mxu0 0
        %935 = vmatprep.subr.bf16.mxu0 0
        %936 = vmatpush1.bf16.msra.mxu0 0
        %937 = vmatprep.subr.bf16.mxu0 0
        %938 = vmatpush1.bf16.msra.mxu0 0
        %939 = vmatprep.mubr.bf16.mxu0 0
        %940 = vmatmul.mubr.bf16.gmra.mrb[0].mxu0 %v905
        %v941 = vpop.f32.mrb[0].mxu0
        %v942 = vadd.f32 %v867, %v941
        %v943 = vpop.f32.mrb[0].mxu0
        %v944 = vpop.f32.mrb[0].mxu0
        %v945 = vpop.f32.mrb[0].mxu0
        %946 = vdwg.mxu0
        %947 = vadd.xlane.f32.xlu0 %v942
        %v948 = vpop.xlane.xlu0 %947
        %v949 = vrcp.pop 128.0
        %v950 = vmul.f32 %v948, %v949
        %v951 = vsub.f32 %v942, %v950
        %v952 = vmul.f32 %v951, %v951
        %953 = vadd.xlane.f32.xlu0 %v952
        %v954 = vpop.xlane.xlu0 %953
        %v955 = vmul.f32 %v954, %v949
        %v956 = vadd.f32 %v955, 1e-05
        %v957 = vrsqrt.pop %v956
        %v958 = vmul.f32 %v951, %v957
        %v959 = vlaneseq
        %v960 = vshrl.u32 %v959, 7
        %v961 = vsub.s32 0, %v960
        %v962 = vrot.slane %v812, %v961
        %v963 = vmul.f32 %v958, %v962
        %v964 = vlaneseq
        %v965 = vshrl.u32 %v964, 7
        %v966 = vsub.s32 0, %v965
        %v967 = vrot.slane %v813, %v966
        %v968 = vadd.f32 %v963, %v967
        %v969 = vmax.f32 %v968, 0.0
        %v970 = vpack.c.bf16 %v969, %v969
        %v971 = vld [vmem:[%s10] sm:$0xf]
        %v972 = vld [vmem:[%s10 + $0x4] sm:$0xf]
        %v973 = vld [vmem:[%s10 + $0x8] sm:$0xf]
        %v974 = vld [vmem:[%s10 + $0xc] sm:$0xf]
        %v975 = vld [vmem:[%s10 + $0x10] sm:$0xf]
        %v976 = vld [vmem:[%s10 + $0x14] sm:$0xf]
        %v977 = vld [vmem:[%s10 + $0x18] sm:$0xf]
        %v978 = vld [vmem:[%s10 + $0x1c] sm:$0xf]
        %v979 = vld [vmem:[%s10 + $0x20] sm:$0xf]
        %v980 = vld [vmem:[%s10 + $0x24] sm:$0xf]
        %v981 = vld [vmem:[%s10 + $0x28] sm:$0xf]
        %v982 = vld [vmem:[%s10 + $0x2c] sm:$0xf]
        %v983 = vld [vmem:[%s10 + $0x30] sm:$0xf]
        %v984 = vld [vmem:[%s10 + $0x34] sm:$0xf]
        %v985 = vld [vmem:[%s10 + $0x38] sm:$0xf]
        %v986 = vld [vmem:[%s10 + $0x3c] sm:$0xf]
        %v987 = vlaneseq
        %v988 = vshrl.u32 %v987, 7
        %v989 = vsub.s32 0, %v988
        %v990 = vrot.slane %v811, %v989
        %v1007 = vunpack.c.l.b16 %v971
        %v1008 = vunpack.c.l.b16 %v972
        %v1009 = vunpack.c.l.b16 %v973
        %v1010 = vunpack.c.l.b16 %v974
        %v1011 = vunpack.c.l.b16 %v975
        %v1012 = vunpack.c.l.b16 %v976
        %v1013 = vunpack.c.l.b16 %v977
        %v1014 = vunpack.c.l.b16 %v978
        %v1015 = vunpack.c.l.b16 %v979
        %v1016 = vunpack.c.l.b16 %v980
        %v1017 = vunpack.c.l.b16 %v981
        %v1018 = vunpack.c.l.b16 %v982
        %v1019 = vunpack.c.l.b16 %v983
        %v1020 = vunpack.c.l.b16 %v984
        %v1021 = vunpack.c.l.b16 %v985
        %v1022 = vunpack.c.l.b16 %v986
        %v1023 = vpack.c.b16 %v1008, %v1007
        %v1024 = vpack.c.b16 %v1010, %v1009
        %v1025 = vpack.c.b16 %v1012, %v1011
        %v1026 = vpack.c.b16 %v1014, %v1013
        %v1027 = vpack.c.b16 %v1016, %v1015
        %v1028 = vpack.c.b16 %v1018, %v1017
        %v1029 = vpack.c.b16 %v1020, %v1019
        %v1030 = vpack.c.b16 %v1022, %v1021
        %1039 = vmatprep.subr.bf16.mxu0 0
        %1040 = vmatpush1.bf16.msra.mxu0 %v1023
        %1041 = vmatprep.subr.bf16.mxu0 0
        %1042 = vmatpush1.bf16.msra.mxu0 %v1024
        %1043 = vmatprep.subr.bf16.mxu0 0
        %1044 = vmatpush1.bf16.msra.mxu0 %v1025
        %1045 = vmatprep.subr.bf16.mxu0 0
        %1046 = vmatpush1.bf16.msra.mxu0 %v1026
        %1047 = vmatprep.subr.bf16.mxu0 0
        %1048 = vmatpush1.bf16.msra.mxu0 %v1027
        %1049 = vmatprep.subr.bf16.mxu0 0
        %1050 = vmatpush1.bf16.msra.mxu0 %v1028
        %1051 = vmatprep.subr.bf16.mxu0 0
        %1052 = vmatpush1.bf16.msra.mxu0 %v1029
        %1053 = vmatprep.subr.bf16.mxu0 0
        %1054 = vmatpush1.bf16.msra.mxu0 %v1030
        %1055 = vmatprep.subr.bf16.mxu0 0
        %1056 = vmatpush1.bf16.msra.mxu0 0
        %1057 = vmatprep.subr.bf16.mxu0 0
        %1058 = vmatpush1.bf16.msra.mxu0 0
        %1059 = vmatprep.subr.bf16.mxu0 0
        %1060 = vmatpush1.bf16.msra.mxu0 0
        %1061 = vmatprep.subr.bf16.mxu0 0
        %1062 = vmatpush1.bf16.msra.mxu0 0
        %1063 = vmatprep.subr.bf16.mxu0 0
        %1064 = vmatpush1.bf16.msra.mxu0 0
        %1065 = vmatprep.subr.bf16.mxu0 0
        %1066 = vmatpush1.bf16.msra.mxu0 0
        %1067 = vmatprep.subr.bf16.mxu0 0
        %1068 = vmatpush1.bf16.msra.mxu0 0
        %1069 = vmatprep.subr.bf16.mxu0 0
        %1070 = vmatpush1.bf16.msra.mxu0 0
        %1071 = vmatprep.mubr.bf16.mxu0 0
        %1072 = vmatmul.mubr.bf16.gmra.mrb[0].mxu0 %v970
        %v1073 = vpop.f32.mrb[0].mxu0
        %v1074 = vadd.f32 %v990, %v1073
        %v1075 = vpop.f32.mrb[0].mxu0
        %v1076 = vpop.f32.mrb[0].mxu0
        %v1077 = vpop.f32.mrb[0].mxu0
        %1078 = vdwg.mxu0
        %v1079 = vsel %vm826, %v1074, 0.0
        %1080 = vadd.xlane.f32.xlu0 %v1079
        %v1081 = vpop.xlane.xlu0 %1080
        %v1082 = vmul.f32 %v1081, %v830
        %v1083 = vsub.f32 %v1074, %v1082
        %v1084 = vmul.f32 %v1083, %v1083
        %v1085 = vsel %vm826, %v1084, 0.0
        %1086 = vadd.xlane.f32.xlu0 %v1085
        %v1087 = vpop.xlane.xlu0 %1086
        %v1088 = vmul.f32 %v1087, %v830
        %v1089 = vadd.f32 %v1088, 1e-05
        %v1090 = vrsqrt.pop %v1089
        %v1091 = vmul.f32 %v1083, %v1090
        %v1092 = vlaneseq
        %v1093 = vshrl.u32 %v1092, 7
        %v1094 = vsub.s32 0, %v1093
        %v1095 = vrot.slane %v809, %v1094
        %v1096 = vmul.f32 %v1091, %v1095
        %v1097 = vlaneseq
        %v1098 = vshrl.u32 %v1097, 7
        %v1099 = vsub.s32 0, %v1098
        %v1100 = vrot.slane %v810, %v1099
        %v1101 = vadd.f32 %v1096, %v1100
        %1103 = vrot.lane.b32.xlu0 %v779, 32
        %v1104 = vpop.permute.xlu0 %1103
        %v1106 = vsel %vm826, %v1101, %v1104
        %1107 = vadd.xlane.f32.xlu0 %v1106
        %v1108 = vpop.xlane.xlu0 %1107
        %v1109 = vmul.f32 %v1108, %v949
        %v1110 = vsub.f32 %v1106, %v1109
        %v1111 = vmul.f32 %v1110, %v1110
        %1112 = vadd.xlane.f32.xlu0 %v1111
        %v1113 = vpop.xlane.xlu0 %1112
        %v1114 = vmul.f32 %v1113, %v949
        %v1115 = vadd.f32 %v1114, 1e-05
        %v1116 = vrsqrt.pop %v1115
        %v1117 = vmul.f32 %v1110, %v1116
        %v1118 = vmul.f32 %v1117, %v962
        %v1119 = vadd.f32 %v1118, %v967
        %v1120 = vmax.f32 %v1119, 0.0
        %v1121 = vpack.c.bf16 %v1120, %v1120
        %1122 = vmatprep.subr.bf16.mxu0 0
        %1123 = vmatpush1.bf16.msra.mxu0 %v1023
        %1124 = vmatprep.subr.bf16.mxu0 0
        %1125 = vmatpush1.bf16.msra.mxu0 %v1024
        %1126 = vmatprep.subr.bf16.mxu0 0
        %1127 = vmatpush1.bf16.msra.mxu0 %v1025
        %1128 = vmatprep.subr.bf16.mxu0 0
        %1129 = vmatpush1.bf16.msra.mxu0 %v1026
        %1130 = vmatprep.subr.bf16.mxu0 0
        %1131 = vmatpush1.bf16.msra.mxu0 %v1027
        %1132 = vmatprep.subr.bf16.mxu0 0
        %1133 = vmatpush1.bf16.msra.mxu0 %v1028
        %1134 = vmatprep.subr.bf16.mxu0 0
        %1135 = vmatpush1.bf16.msra.mxu0 %v1029
        %1136 = vmatprep.subr.bf16.mxu0 0
        %1137 = vmatpush1.bf16.msra.mxu0 %v1030
        %1138 = vmatprep.subr.bf16.mxu0 0
        %1139 = vmatpush1.bf16.msra.mxu0 0
        %1140 = vmatprep.subr.bf16.mxu0 0
        %1141 = vmatpush1.bf16.msra.mxu0 0
        %1142 = vmatprep.subr.bf16.mxu0 0
        %1143 = vmatpush1.bf16.msra.mxu0 0
        %1144 = vmatprep.subr.bf16.mxu0 0
        %1145 = vmatpush1.bf16.msra.mxu0 0
        %1146 = vmatprep.subr.bf16.mxu0 0
        %1147 = vmatpush1.bf16.msra.mxu0 0
        %1148 = vmatprep.subr.bf16.mxu0 0
        %1149 = vmatpush1.bf16.msra.mxu0 0
        %1150 = vmatprep.subr.bf16.mxu0 0
        %1151 = vmatpush1.bf16.msra.mxu0 0
        %1152 = vmatprep.subr.bf16.mxu0 0
        %1153 = vmatpush1.bf16.msra.mxu0 0
        %1154 = vmatprep.mubr.bf16.mxu0 0
        %1155 = vmatmul.mubr.bf16.gmra.mrb[0].mxu0 %v1121
        %v1156 = vpop.f32.mrb[0].mxu0
        %v1157 = vadd.f32 %v990, %v1156
        %v1158 = vpop.f32.mrb[0].mxu0
        %v1159 = vpop.f32.mrb[0].mxu0
        %v1160 = vpop.f32.mrb[0].mxu0
        %1161 = vdwg.mxu0
        %v1162 = vsel %vm826, %v1157, 0.0
        %1163 = vadd.xlane.f32.xlu0 %v1162
        %v1164 = vpop.xlane.xlu0 %1163
        %v1165 = vmul.f32 %v1164, %v830
        %v1166 = vsub.f32 %v1157, %v1165
        %v1167 = vmul.f32 %v1166, %v1166
        %v1168 = vsel %vm826, %v1167, 0.0
        %1169 = vadd.xlane.f32.xlu0 %v1168
        %v1170 = vpop.xlane.xlu0 %1169
        %v1171 = vmul.f32 %v1170, %v830
        %v1172 = vadd.f32 %v1171, 1e-05
        %v1173 = vrsqrt.pop %v1172
        %v1174 = vmul.f32 %v1166, %v1173
        %v1175 = vmul.f32 %v1174, %v1095
        %v1176 = vadd.f32 %v1175, %v1100
        %1177 = vst.msk [vmem:[%s526] sm:$0xff] %vm826, %v1176
        %s1178 = sand.u32 %s329, 1
        %s1179 = scalar_lea.sflag [#allocation4], %s1178
        %s1180 = sand.u32 %s329, 1
        %s1181 = smul.addr %s1180, 8
        %s1182 = scalar_lea.vmem [#allocation8], %s1181
        // Predicated region
        $region85: #{tpu_custom_call.1} parent=71 // pred_check
          %p1183 = pneg %p339
        $region86: #{tpu_custom_call.1} parent=71 // pred_check_branch
          %1185 = sbr.rel (%p1183) target = $region88
        $region87: #{tpu_custom_call.1} parent=71 // pred_region
          %s1187 = ssub.s32 128, 128
          %1188 = vsyncadd %s1179, %s1187
          %s1189 = smul.addr %s33, 128
          %s1190 = scalar_lea.hbm %s13, %s1189
          %s1192 = sshll.u32 %s1182, 4
          %s1193 = int_to_ptr.vmem [resolvable:$true] %s1192
          %1195 = dma.vmem_to_hbm [thread:$0]  %s1193, 128, %s1190, %s1179
        $region88: #{tpu_custom_call.1} parent=71 // pred_fallthru
          _
      $region72: #{tpu_custom_call.1} parent=5 // pred_fallthru
        _
      %p1196 = scmp.le.s32.totalorder 2, %s28
      // Predicated region
      $region89: #{tpu_custom_call.1} parent=5 // pred_check
        %p1197 = pneg %p1196
      $region90: #{tpu_custom_call.1} parent=5 // pred_check_branch
        %1199 = sbr.rel (%p1197) target = $region92
      $region91: #{tpu_custom_call.1} parent=5 // pred_region
        %s1200 = ssub.s32 %s28, 2
        // Predicated region
        $region93: #{tpu_custom_call.1} parent=91 // pred_check
          %p1201 = pneg %p345
        $region94: #{tpu_custom_call.1} parent=91 // pred_check_branch
          %1203 = sbr.rel (%p1201) target = $region96
        $region95: #{tpu_custom_call.1} parent=91 // pred_region
          %s1204 = sand.u32 %s330, 1
          %s1205 = scalar_lea.sflag [#allocation4], %s1204
          %s1206 = sand.u32 %s330, 1
          %s1207 = smul.addr %s1206, 8
          %s1208 = scalar_lea.vmem [#allocation8], %s1207
          %1209 = dma.done %s1205, 128
        $region96: #{tpu_custom_call.1} parent=91 // pred_fallthru
          _
      $region92: #{tpu_custom_call.1} parent=5 // pred_fallthru
        _
    $region6: #{tpu_custom_call.1} parent=1 // loop_footer
      %s32 = sadd.s32 1, %s28
    $region7: #{tpu_custom_call.1} parent=1 // loop_footer_branch
      %27 = sbr.rel target = $region3
    $region8: #{tpu_custom_call.1} parent=1 // loop_exit
      _
    %1210 = vsyncpa [#allocation3], 1
    %s1211 = scalar_lea.sflag [#allocation3], 1
    %1212 = vsyncpa %s1211, 1
    %1213 = vsyncpa [#allocation6], 1
    %s1214 = scalar_lea.sflag [#allocation6], 1
    %1215 = vsyncpa %s1214, 1
    %1216 = vsyncpa [#allocation4], 1
    %s1217 = scalar_lea.sflag [#allocation4], 1
    %1218 = vsyncpa %s1217, 1

// kernel: tpu_custom_call.1
$region0: #{tpu_custom_call.1}
  #allocation0 [shape = 'u32[]', space=smem, size = 0x4, offset = 0x4, fixed_abs, tag = 'smem constant byte address 0x4 - core index']
  #allocation1 [shape = 'u32[144,128]{1,0:T(1,128)}', space=vmem, size = 0x12000, scoped, tag = 'internal scratch']
  %s0 = inlined_call_operand.hbm [shape: bf16[16,32], index: 0, kind: input, shape index: {}]
  %s1 = inlined_call_operand.hbm [shape: bf16[16,32], index: 1, kind: input, shape index: {}]
  %s2 = inlined_call_operand.hbm [shape: bf16[16,32], index: 2, kind: input, shape index: {}]
  %s3 = inlined_call_operand.vmem [shape: bf16[32,64], index: 3, kind: input, shape index: {}]
  %s4 = inlined_call_operand.vmem [shape: bf16[32,64], index: 4, kind: input, shape index: {}]
  %s5 = inlined_call_operand.vmem [shape: bf16[32,160], index: 5, kind: input, shape index: {}]
  %s6 = inlined_call_operand.vmem [shape: f32[1,64], index: 6, kind: input, shape index: {}]
  %s7 = inlined_call_operand.vmem [shape: f32[1,64], index: 7, kind: input, shape index: {}]
  %s8 = inlined_call_operand.vmem [shape: f32[1,160], index: 8, kind: input, shape index: {}]
  %s9 = inlined_call_operand.vmem [shape: bf16[96,128], index: 9, kind: input, shape index: {}]
  %s10 = inlined_call_operand.vmem [shape: bf16[128,96], index: 10, kind: input, shape index: {}]
  %s11 = inlined_call_operand.vmem [shape: f32[5,96], index: 11, kind: input, shape index: {}]
  %s12 = inlined_call_operand.vmem [shape: f32[3,128], index: 12, kind: input, shape index: {}]
  %s13 = inlined_call_operand.hbm [shape: f32[16,96], index: 13, kind: output, shape index: {}]
  %s14 = sld [smem:[#allocation0]]
  $region97: #{tpu_custom_call.1} parent=0
    _
  %s16 = ssub.s32 1, %s14
  %s17 = scalar_select 0, %s16, %s14
  $region1: #{tpu_custom_call.1} parent=0
    #allocation2 [shape = 'u8[4096]{0}', space=vmem, size = 0x1000, scoped, tag = 'input window, operand 0']
    #allocation3 [shape = 's32[2]{0}', space=sflag, size = 0x8, scoped, tag = 'scoped memory for tpu_custom_call.1']
    #allocation4 [shape = 's32[2]{0}', space=sflag, size = 0x8, scoped, tag = 'scoped memory for tpu_custom_call.1']
    #allocation5 [shape = 'u8[4096]{0}', space=vmem, size = 0x1000, scoped, tag = 'input window, operand 1']
    #allocation6 [shape = 's32[2]{0}', space=sflag, size = 0x8, scoped, tag = 'scoped memory for tpu_custom_call.1']
    #allocation7 [shape = 'u8[4096]{0}', space=vmem, size = 0x1000, scoped, tag = 'input window, operand 2']
    #allocation8 [shape = 'u8[8192]{0}', space=vmem, size = 0x2000, scoped, tag = 'output window, operand 0']
    %18 = vsyncpa [#allocation3], 0
    %s19 = scalar_lea.sflag [#allocation3], 1
    %20 = vsyncpa %s19, 0
    %21 = vsyncpa [#allocation6], 0
    %s22 = scalar_lea.sflag [#allocation6], 1
    %23 = vsyncpa %s22, 0
    %24 = vsyncpa [#allocation4], 0
    %s25 = scalar_lea.sflag [#allocation4], 1
    %26 = vsyncpa %s25, 0
    loop: start=0, step=1, limit=4
    $region2: #{tpu_custom_call.1} parent=1 // loop_pre_header
      _
    $region3: #{tpu_custom_call.1} parent=1 // loop_header
      %s28 = sphi 0, %s32
      %p29 = scmp.ge.s32.totalorder %s28, 4
      %s38 = sphi 0, %s40
      %s41 = sphi 0, %s38
      %s42 = sphi 0, %s41
      %s58 = sphi 0, %s42
      %s64 = sphi 0, %s66
      %s67 = sphi 0, %s64
      %s68 = sphi 0, %s67
      %s84 = sphi 0, %s68
      %s90 = sphi 0, %s92
      %s93 = sphi 0, %s90
      %s94 = sphi 0, %s93
      %s110 = sphi 0, %s94
      %s114 = sphi 0, %s114
      %s116 = sphi 0, %s114
      %s117 = sphi 0, %s116
      %s131 = sphi 0, %s117
      %s135 = sphi 0, %s135
      %s137 = sphi 0, %s135
      %s138 = sphi 0, %s137
      %s152 = sphi 0, %s138
      %s156 = sphi 0, %s156
      %s158 = sphi 0, %s156
      %s159 = sphi 0, %s158
      %s173 = sphi 0, %s159
      %s177 = sphi 0, %s177
      %s179 = sphi 0, %s177
      %s180 = sphi 0, %s179
      %s194 = sphi 0, %s180
      %s198 = sphi 0, %s198
      %s200 = sphi 0, %s198
      %s201 = sphi 0, %s200
      %s215 = sphi 0, %s201
      %s219 = sphi 0, %s219
      %s221 = sphi 0, %s219
      %s222 = sphi 0, %s221
      %s236 = sphi 0, %s222
      %s240 = sphi 0, %s240
      %s242 = sphi 0, %s240
      %s243 = sphi 0, %s242
      %s257 = sphi 0, %s243
      %s261 = sphi 0, %s261
      %s263 = sphi 0, %s261
      %s264 = sphi 0, %s263
      %s278 = sphi 0, %s264
      %s282 = sphi 0, %s282
      %s284 = sphi 0, %s282
      %s285 = sphi 0, %s284
      %s299 = sphi 0, %s285
      %s303 = sphi 0, %s303
      %s305 = sphi 0, %s303
      %s306 = sphi 0, %s305
      %s320 = sphi 0, %s306
      %s326 = sphi 0, %s328
      %s329 = sphi 0, %s326
      %s330 = sphi 0, %s329
      %s346 = sphi 0, %s330
    $region4: #{tpu_custom_call.1} parent=1 // loop_header_branch
      %31 = sbr.rel (%p29) target = $region8
    $region5: #{tpu_custom_call.1} parent=1 // loop_body
      %s33 = ssub.s32 %s28, 1
      %s34 = ssub.s32 %s28, 2
      %s35 = sadd.s32 %s28, 1
      %s36 = ssub.s32 %s28, %s35
      %p37 = scmp.eq.s32.totalorder %s36, 0
      %s39 = sadd.s32 %s38, 1
      %s40 = scalar_select %p37, %s38, %s39
      %p43 = pneg %p37
      %p44 = scmp.eq.s32.totalorder %s28, 1
      %p45 = por %p43, %p44
      %p46 = scmp.ne.s32.totalorder %s38, %s41
      %p47 = scmp.eq.s32.totalorder %s28, 0
      %p48 = por %p46, %p47
      %p49 = scmp.ne.s32.totalorder %s38, %s41
      %p50 = scmp.eq.s32.totalorder %s33, 1
      %p51 = por %p49, %p50
      %p52 = scmp.ne.s32.totalorder %s41, %s42
      %p53 = scmp.eq.s32.totalorder %s33, 0
      %p54 = por %p52, %p53
      %p55 = scmp.ne.s32.totalorder %s41, %s42
      %p56 = scmp.eq.s32.totalorder %s34, 1
      %p57 = por %p55, %p56
      %p59 = scmp.ne.s32.totalorder %s42, %s58
      %p60 = scmp.eq.s32.totalorder %s34, 0
      %p61 = por %p59, %p60
      %s62 = ssub.s32 %s28, %s35
      %p63 = scmp.eq.s32.totalorder %s62, 0
      %s65 = sadd.s32 %s64, 1
      %s66 = scalar_select %p63, %s64, %s65
      %p69 = pneg %p63
      %p70 = scmp.eq.s32.totalorder %s28, 1
      %p71 = por %p69, %p70
      %p72 = scmp.ne.s32.totalorder %s64, %s67
      %p73 = scmp.eq.s32.totalorder %s28, 0
      %p74 = por %p72, %p73
      %p75 = scmp.ne.s32.totalorder %s64, %s67
      %p76 = scmp.eq.s32.totalorder %s33, 1
      %p77 = por %p75, %p76
      %p78 = scmp.ne.s32.totalorder %s67, %s68
      %p79 = scmp.eq.s32.totalorder %s33, 0
      %p80 = por %p78, %p79
      %p81 = scmp.ne.s32.totalorder %s67, %s68
      %p82 = scmp.eq.s32.totalorder %s34, 1
      %p83 = por %p81, %p82
      %p85 = scmp.ne.s32.totalorder %s68, %s84
      %p86 = scmp.eq.s32.totalorder %s34, 0
      %p87 = por %p85, %p86
      %s88 = ssub.s32 %s28, %s35
      %p89 = scmp.eq.s32.totalorder %s88, 0
      %s91 = sadd.s32 %s90, 1
      %s92 = scalar_select %p89, %s90, %s91
      %p95 = pneg %p89
      %p96 = scmp.eq.s32.totalorder %s28, 1
      %p97 = por %p95, %p96
      %p98 = scmp.ne.s32.totalorder %s90, %s93
      %p99 = scmp.eq.s32.totalorder %s28, 0
      %p100 = por %p98, %p99
      %p101 = scmp.ne.s32.totalorder %s90, %s93
      %p102 = scmp.eq.s32.totalorder %s33, 1
      %p103 = por %p101, %p102
      %p104 = scmp.ne.s32.totalorder %s93, %s94
      %p105 = scmp.eq.s32.totalorder %s33, 0
      %p106 = por %p104, %p105
      %p107 = scmp.ne.s32.totalorder %s93, %s94
      %p108 = scmp.eq.s32.totalorder %s34, 1
      %p109 = por %p107, %p108
      %p111 = scmp.ne.s32.totalorder %s94, %s110
      %p112 = scmp.eq.s32.totalorder %s34, 0
      %p113 = por %p111, %p112
      %s115 = sadd.s32 %s114, 1
      %p118 = scmp.eq.s32.totalorder %s28, 1
      %p119 = scmp.ne.s32.totalorder %s114, %s116
      %p120 = scmp.eq.s32.totalorder %s28, 0
      %p121 = por %p119, %p120
      %p122 = scmp.ne.s32.totalorder %s114, %s116
      %p123 = scmp.eq.s32.totalorder %s33, 1
      %p124 = por %p122, %p123
      %p125 = scmp.ne.s32.totalorder %s116, %s117
      %p126 = scmp.eq.s32.totalorder %s33, 0
      %p127 = por %p125, %p126
      %p128 = scmp.ne.s32.totalorder %s116, %s117
      %p129 = scmp.eq.s32.totalorder %s34, 1
      %p130 = por %p128, %p129
      %p132 = scmp.ne.s32.totalorder %s117, %s131
      %p133 = scmp.eq.s32.totalorder %s34, 0
      %p134 = por %p132, %p133
      %s136 = sadd.s32 %s135, 1
      %p139 = scmp.eq.s32.totalorder %s28, 1
      %p140 = scmp.ne.s32.totalorder %s135, %s137
      %p141 = scmp.eq.s32.totalorder %s28, 0
      %p142 = por %p140, %p141
      %p143 = scmp.ne.s32.totalorder %s135, %s137
      %p144 = scmp.eq.s32.totalorder %s33, 1
      %p145 = por %p143, %p144
      %p146 = scmp.ne.s32.totalorder %s137, %s138
      %p147 = scmp.eq.s32.totalorder %s33, 0
      %p148 = por %p146, %p147
      %p149 = scmp.ne.s32.totalorder %s137, %s138
      %p150 = scmp.eq.s32.totalorder %s34, 1
      %p151 = por %p149, %p150
      %p153 = scmp.ne.s32.totalorder %s138, %s152
      %p154 = scmp.eq.s32.totalorder %s34, 0
      %p155 = por %p153, %p154
      %s157 = sadd.s32 %s156, 1
      %p160 = scmp.eq.s32.totalorder %s28, 1
      %p161 = scmp.ne.s32.totalorder %s156, %s158
      %p162 = scmp.eq.s32.totalorder %s28, 0
      %p163 = por %p161, %p162
      %p164 = scmp.ne.s32.totalorder %s156, %s158
      %p165 = scmp.eq.s32.totalorder %s33, 1
      %p166 = por %p164, %p165
      %p167 = scmp.ne.s32.totalorder %s158, %s159
      %p168 = scmp.eq.s32.totalorder %s33, 0
      %p169 = por %p167, %p168
      %p170 = scmp.ne.s32.totalorder %s158, %s159
      %p171 = scmp.eq.s32.totalorder %s34, 1
      %p172 = por %p170, %p171
      %p174 = scmp.ne.s32.totalorder %s159, %s173
      %p175 = scmp.eq.s32.totalorder %s34, 0
      %p176 = por %p174, %p175
      %s178 = sadd.s32 %s177, 1
      %p181 = scmp.eq.s32.totalorder %s28, 1
      %p182 = scmp.ne.s32.totalorder %s177, %s179
      %p183 = scmp.eq.s32.totalorder %s28, 0
      %p184 = por %p182, %p183
      %p185 = scmp.ne.s32.totalorder %s177, %s179
      %p186 = scmp.eq.s32.totalorder %s33, 1
      %p187 = por %p185, %p186
      %p188 = scmp.ne.s32.totalorder %s179, %s180
      %p189 = scmp.eq.s32.totalorder %s33, 0
      %p190 = por %p188, %p189
      %p191 = scmp.ne.s32.totalorder %s179, %s180
      %p192 = scmp.eq.s32.totalorder %s34, 1
      %p193 = por %p191, %p192
      %p195 = scmp.ne.s32.totalorder %s180, %s194
      %p196 = scmp.eq.s32.totalorder %s34, 0
      %p197 = por %p195, %p196
      %s199 = sadd.s32 %s198, 1
      %p202 = scmp.eq.s32.totalorder %s28, 1
      %p203 = scmp.ne.s32.totalorder %s198, %s200
      %p204 = scmp.eq.s32.totalorder %s28, 0
      %p205 = por %p203, %p204
      %p206 = scmp.ne.s32.totalorder %s198, %s200
      %p207 = scmp.eq.s32.totalorder %s33, 1
      %p208 = por %p206, %p207
      %p209 = scmp.ne.s32.totalorder %s200, %s201
      %p210 = scmp.eq.s32.totalorder %s33, 0
      %p211 = por %p209, %p210
      %p212 = scmp.ne.s32.totalorder %s200, %s201
      %p213 = scmp.eq.s32.totalorder %s34, 1
      %p214 = por %p212, %p213
      %p216 = scmp.ne.s32.totalorder %s201, %s215
      %p217 = scmp.eq.s32.totalorder %s34, 0
      %p218 = por %p216, %p217
      %s220 = sadd.s32 %s219, 1
      %p223 = scmp.eq.s32.totalorder %s28, 1
      %p224 = scmp.ne.s32.totalorder %s219, %s221
      %p225 = scmp.eq.s32.totalorder %s28, 0
      %p226 = por %p224, %p225
      %p227 = scmp.ne.s32.totalorder %s219, %s221
      %p228 = scmp.eq.s32.totalorder %s33, 1
      %p229 = por %p227, %p228
      %p230 = scmp.ne.s32.totalorder %s221, %s222
      %p231 = scmp.eq.s32.totalorder %s33, 0
      %p232 = por %p230, %p231
      %p233 = scmp.ne.s32.totalorder %s221, %s222
      %p234 = scmp.eq.s32.totalorder %s34, 1
      %p235 = por %p233, %p234
      %p237 = scmp.ne.s32.totalorder %s222, %s236
      %p238 = scmp.eq.s32.totalorder %s34, 0
      %p239 = por %p237, %p238
      %s241 = sadd.s32 %s240, 1
      %p244 = scmp.eq.s32.totalorder %s28, 1
      %p245 = scmp.ne.s32.totalorder %s240, %s242
      %p246 = scmp.eq.s32.totalorder %s28, 0
      %p247 = por %p245, %p246
      %p248 = scmp.ne.s32.totalorder %s240, %s242
      %p249 = scmp.eq.s32.totalorder %s33, 1
      %p250 = por %p248, %p249
      %p251 = scmp.ne.s32.totalorder %s242, %s243
      %p252 = scmp.eq.s32.totalorder %s33, 0
      %p253 = por %p251, %p252
      %p254 = scmp.ne.s32.totalorder %s242, %s243
      %p255 = scmp.eq.s32.totalorder %s34, 1
      %p256 = por %p254, %p255
      %p258 = scmp.ne.s32.totalorder %s243, %s257
      %p259 = scmp.eq.s32.totalorder %s34, 0
      %p260 = por %p258, %p259
      %s262 = sadd.s32 %s261, 1
      %p265 = scmp.eq.s32.totalorder %s28, 1
      %p266 = scmp.ne.s32.totalorder %s261, %s263
      %p267 = scmp.eq.s32.totalorder %s28, 0
      %p268 = por %p266, %p267
      %p269 = scmp.ne.s32.totalorder %s261, %s263
      %p270 = scmp.eq.s32.totalorder %s33, 1
      %p271 = por %p269, %p270
      %p272 = scmp.ne.s32.totalorder %s263, %s264
      %p273 = scmp.eq.s32.totalorder %s33, 0
      %p274 = por %p272, %p273
      %p275 = scmp.ne.s32.totalorder %s263, %s264
      %p276 = scmp.eq.s32.totalorder %s34, 1
      %p277 = por %p275, %p276
      %p279 = scmp.ne.s32.totalorder %s264, %s278
      %p280 = scmp.eq.s32.totalorder %s34, 0
      %p281 = por %p279, %p280
      %s283 = sadd.s32 %s282, 1
      %p286 = scmp.eq.s32.totalorder %s28, 1
      %p287 = scmp.ne.s32.totalorder %s282, %s284
      %p288 = scmp.eq.s32.totalorder %s28, 0
      %p289 = por %p287, %p288
      %p290 = scmp.ne.s32.totalorder %s282, %s284
      %p291 = scmp.eq.s32.totalorder %s33, 1
      %p292 = por %p290, %p291
      %p293 = scmp.ne.s32.totalorder %s284, %s285
      %p294 = scmp.eq.s32.totalorder %s33, 0
      %p295 = por %p293, %p294
      %p296 = scmp.ne.s32.totalorder %s284, %s285
      %p297 = scmp.eq.s32.totalorder %s34, 1
      %p298 = por %p296, %p297
      %p300 = scmp.ne.s32.totalorder %s285, %s299
      %p301 = scmp.eq.s32.totalorder %s34, 0
      %p302 = por %p300, %p301
      %s304 = sadd.s32 %s303, 1
      %p307 = scmp.eq.s32.totalorder %s28, 1
      %p308 = scmp.ne.s32.totalorder %s303, %s305
      %p309 = scmp.eq.s32.totalorder %s28, 0
      %p310 = por %p308, %p309
      %p311 = scmp.ne.s32.totalorder %s303, %s305
      %p312 = scmp.eq.s32.totalorder %s33, 1
      %p313 = por %p311, %p312
      %p314 = scmp.ne.s32.totalorder %s305, %s306
      %p315 = scmp.eq.s32.totalorder %s33, 0
      %p316 = por %p314, %p315
      %p317 = scmp.ne.s32.totalorder %s305, %s306
      %p318 = scmp.eq.s32.totalorder %s34, 1
      %p319 = por %p317, %p318
      %p321 = scmp.ne.s32.totalorder %s306, %s320
      %p322 = scmp.eq.s32.totalorder %s34, 0
      %p323 = por %p321, %p322
      %s324 = ssub.s32 %s28, %s35
      %p325 = scmp.eq.s32.totalorder %s324, 0
      %s327 = sadd.s32 %s326, 1
      %s328 = scalar_select %p325, %s326, %s327
      %p331 = pneg %p325
      %p332 = scmp.eq.s32.totalorder %s28, 1
      %p333 = por %p331, %p332
      %p334 = scmp.ne.s32.totalorder %s326, %s329
      %p335 = scmp.eq.s32.totalorder %s28, 0
      %p336 = por %p334, %p335
      %p337 = scmp.ne.s32.totalorder %s326, %s329
      %p338 = scmp.eq.s32.totalorder %s33, 1
      %p339 = por %p337, %p338
      %p340 = scmp.ne.s32.totalorder %s329, %s330
      %p341 = scmp.eq.s32.totalorder %s33, 0
      %p342 = por %p340, %p341
      %p343 = scmp.ne.s32.totalorder %s329, %s330
      %p344 = scmp.eq.s32.totalorder %s34, 1
      %p345 = por %p343, %p344
      %p347 = scmp.ne.s32.totalorder %s330, %s346
      %p348 = scmp.eq.s32.totalorder %s34, 0
      %p349 = por %p347, %p348
      %p350 = scmp.le.s32.totalorder 1, %s28
      %p351 = scmp.lt.s32.totalorder %s28, 3
      %p352 = pnand %p350, %p351
      %p353 = pneg %p352
      // Predicated region
      $region9: #{tpu_custom_call.1} parent=5 // pred_check
        _
      $region10: #{tpu_custom_call.1} parent=5 // pred_check_branch
        %355 = sbr.rel (%p352) target = $region12
      $region11: #{tpu_custom_call.1} parent=5 // pred_region
        %s356 = ssub.s32 %s28, 1
        // Predicated region
        $region13: #{tpu_custom_call.1} parent=11 // pred_check
          %p357 = pneg %p127
        $region14: #{tpu_custom_call.1} parent=11 // pred_check_branch
          %359 = sbr.rel (%p357) target = $region16
        $region15: #{tpu_custom_call.1} parent=11 // pred_region
          _
        $region16: #{tpu_custom_call.1} parent=11 // pred_fallthru
          _
        // Predicated region
        $region17: #{tpu_custom_call.1} parent=11 // pred_check
          %p360 = pneg %p148
        $region18: #{tpu_custom_call.1} parent=11 // pred_check_branch
          %362 = sbr.rel (%p360) target = $region20
        $region19: #{tpu_custom_call.1} parent=11 // pred_region
          _
        $region20: #{tpu_custom_call.1} parent=11 // pred_fallthru
          _
        // Predicated region
        $region21: #{tpu_custom_call.1} parent=11 // pred_check
          %p363 = pneg %p169
        $region22: #{tpu_custom_call.1} parent=11 // pred_check_branch
          %365 = sbr.rel (%p363) target = $region24
        $region23: #{tpu_custom_call.1} parent=11 // pred_region
          _
        $region24: #{tpu_custom_call.1} parent=11 // pred_fallthru
          _
        // Predicated region
        $region25: #{tpu_custom_call.1} parent=11 // pred_check
          %p366 = pneg %p190
        $region26: #{tpu_custom_call.1} parent=11 // pred_check_branch
          %368 = sbr.rel (%p366) target = $region28
        $region27: #{tpu_custom_call.1} parent=11 // pred_region
          _
        $region28: #{tpu_custom_call.1} parent=11 // pred_fallthru
          _
        // Predicated region
        $region29: #{tpu_custom_call.1} parent=11 // pred_check
          %p369 = pneg %p211
        $region30: #{tpu_custom_call.1} parent=11 // pred_check_branch
          %371 = sbr.rel (%p369) target = $region32
        $region31: #{tpu_custom_call.1} parent=11 // pred_region
          _
        $region32: #{tpu_custom_call.1} parent=11 // pred_fallthru
          _
        // Predicated region
        $region33: #{tpu_custom_call.1} parent=11 // pred_check
          %p372 = pneg %p232
        $region34: #{tpu_custom_call.1} parent=11 // pred_check_branch
          %374 = sbr.rel (%p372) target = $region36
        $region35: #{tpu_custom_call.1} parent=11 // pred_region
          _
        $region36: #{tpu_custom_call.1} parent=11 // pred_fallthru
          _
        // Predicated region
        $region37: #{tpu_custom_call.1} parent=11 // pred_check
          %p375 = pneg %p253
        $region38: #{tpu_custom_call.1} parent=11 // pred_check_branch
          %377 = sbr.rel (%p375) target = $region40
        $region39: #{tpu_custom_call.1} parent=11 // pred_region
          _
        $region40: #{tpu_custom_call.1} parent=11 // pred_fallthru
          _
        // Predicated region
        $region41: #{tpu_custom_call.1} parent=11 // pred_check
          %p378 = pneg %p274
        $region42: #{tpu_custom_call.1} parent=11 // pred_check_branch
          %380 = sbr.rel (%p378) target = $region44
        $region43: #{tpu_custom_call.1} parent=11 // pred_region
          _
        $region44: #{tpu_custom_call.1} parent=11 // pred_fallthru
          _
        // Predicated region
        $region45: #{tpu_custom_call.1} parent=11 // pred_check
          %p381 = pneg %p295
        $region46: #{tpu_custom_call.1} parent=11 // pred_check_branch
          %383 = sbr.rel (%p381) target = $region48
        $region47: #{tpu_custom_call.1} parent=11 // pred_region
          _
        $region48: #{tpu_custom_call.1} parent=11 // pred_fallthru
          _
        // Predicated region
        $region49: #{tpu_custom_call.1} parent=11 // pred_check
          %p384 = pneg %p316
        $region50: #{tpu_custom_call.1} parent=11 // pred_check_branch
          %386 = sbr.rel (%p384) target = $region52
        $region51: #{tpu_custom_call.1} parent=11 // pred_region
          _
        $region52: #{tpu_custom_call.1} parent=11 // pred_fallthru
          _
      $region12: #{tpu_custom_call.1} parent=5 // pred_fallthru
        _
      %p387 = scmp.lt.s32.totalorder %s28, 2
      // Predicated region
      $region53: #{tpu_custom_call.1} parent=5 // pred_check
        %p388 = pneg %p387
      $region54: #{tpu_custom_call.1} parent=5 // pred_check_branch
        %390 = sbr.rel (%p388) target = $region56
      $region55: #{tpu_custom_call.1} parent=5 // pred_region
        // Predicated region
        $region57: #{tpu_custom_call.1} parent=55 // pred_check
          %p391 = pneg %p48
        $region58: #{tpu_custom_call.1} parent=55 // pred_check_branch
          %393 = sbr.rel (%p391) target = $region60
        $region59: #{tpu_custom_call.1} parent=55 // pred_region
          %s394 = sand.u32 %s38, 1
          %s395 = scalar_lea.sflag [#allocation3], %s394
          %s396 = sand.u32 %s38, 1
          %s397 = smul.addr %s396, 4
          %s398 = scalar_lea.vmem [#allocation2], %s397
          %s400 = ssub.s32 64, 64
          %401 = vsyncadd %s395, %s400
          %s402 = smul.addr %s28, 64
          %s403 = scalar_lea.hbm %s0, %s402
          %s405 = sshll.u32 %s398, 4
          %s406 = int_to_ptr.vmem [resolvable:$true] %s405
          %408 = dma.hbm_to_vmem [thread:$0]  %s403, 64, %s406, %s395
        $region60: #{tpu_custom_call.1} parent=55 // pred_fallthru
          _
        // Predicated region
        $region61: #{tpu_custom_call.1} parent=55 // pred_check
          %p409 = pneg %p74
        $region62: #{tpu_custom_call.1} parent=55 // pred_check_branch
          %411 = sbr.rel (%p409) target = $region64
        $region63: #{tpu_custom_call.1} parent=55 // pred_region
          %s412 = sand.u32 %s28, 1
          %s413 = scalar_lea.sflag [#allocation6], %s412
          %s414 = sand.u32 %s64, 1
          %s415 = smul.addr %s414, 4
          %s416 = scalar_lea.vmem [#allocation5], %s415
          %s418 = ssub.s32 64, 64
          %419 = vsyncadd %s413, %s418
          %s420 = smul.addr %s28, 64
          %s421 = scalar_lea.hbm %s1, %s420
          %s423 = sshll.u32 %s416, 4
          %s424 = int_to_ptr.vmem [resolvable:$true] %s423
          %426 = dma.hbm_to_vmem [thread:$0]  %s421, 64, %s424, %s413
        $region64: #{tpu_custom_call.1} parent=55 // pred_fallthru
          _
        // Predicated region
        $region65: #{tpu_custom_call.1} parent=55 // pred_check
          %p427 = pneg %p100
        $region66: #{tpu_custom_call.1} parent=55 // pred_check_branch
          %429 = sbr.rel (%p427) target = $region68
        $region67: #{tpu_custom_call.1} parent=55 // pred_region
          %s430 = sand.u32 %s28, 1
          %s431 = scalar_lea.sflag [#allocation6], %s430
          %s432 = sand.u32 %s90, 1
          %s433 = smul.addr %s432, 4
          %s434 = scalar_lea.vmem [#allocation7], %s433
          %s436 = ssub.s32 64, 64
          %437 = vsyncadd %s431, %s436
          %s438 = smul.addr %s28, 64
          %s439 = scalar_lea.hbm %s2, %s438
          %s441 = sshll.u32 %s434, 4
          %s442 = int_to_ptr.vmem [resolvable:$true] %s441
          %444 = dma.hbm_to_vmem [thread:$0]  %s439, 64, %s442, %s431
        $region68: #{tpu_custom_call.1} parent=55 // pred_fallthru
          _
      $region56: #{tpu_custom_call.1} parent=5 // pred_fallthru
        _
      %p445 = scmp.le.s32.totalorder 1, %s28
      %p446 = scmp.lt.s32.totalorder %s28, 3
      %p447 = pnand %p445, %p446
      %p448 = pneg %p447
      // Predicated region
      $region69: #{tpu_custom_call.1} parent=5 // pred_check
        _
      $region70: #{tpu_custom_call.1} parent=5 // pred_check_branch
        %450 = sbr.rel (%p447) target = $region72
      $region71: #{tpu_custom_call.1} parent=5 // pred_region
        %s451 = ssub.s32 %s28, 1
        %s452 = sand.u32 %s41, 1
        %s453 = scalar_lea.sflag [#allocation3], %s452
        %s454 = sand.u32 %s41, 1
        %s455 = smul.addr %s454, 4
        %s456 = scalar_lea.vmem [#allocation2], %s455
        // Predicated region
        $region73: #{tpu_custom_call.1} parent=71 // pred_check
          %p457 = pneg %p54
        $region74: #{tpu_custom_call.1} parent=71 // pred_check_branch
          %459 = sbr.rel (%p457) target = $region76
        $region75: #{tpu_custom_call.1} parent=71 // pred_region
          %460 = dma.done %s453, 64
        $region76: #{tpu_custom_call.1} parent=71 // pred_fallthru
          _
        %s461 = sand.u32 %s33, 1
        %s462 = scalar_lea.sflag [#allocation6], %s461
        %s463 = sand.u32 %s67, 1
        %s464 = smul.addr %s463, 4
        %s465 = scalar_lea.vmem [#allocation5], %s464
        // Predicated region
        $region77: #{tpu_custom_call.1} parent=71 // pred_check
          %p466 = pneg %p80
        $region78: #{tpu_custom_call.1} parent=71 // pred_check_branch
          %468 = sbr.rel (%p466) target = $region80
        $region79: #{tpu_custom_call.1} parent=71 // pred_region
          %469 = dma.done %s462, 64
        $region80: #{tpu_custom_call.1} parent=71 // pred_fallthru
          _
        %s470 = sand.u32 %s33, 1
        %s471 = scalar_lea.sflag [#allocation6], %s470
        %s472 = sand.u32 %s93, 1
        %s473 = smul.addr %s472, 4
        %s474 = scalar_lea.vmem [#allocation7], %s473
        // Predicated region
        $region81: #{tpu_custom_call.1} parent=71 // pred_check
          %p475 = pneg %p106
        $region82: #{tpu_custom_call.1} parent=71 // pred_check_branch
          %477 = sbr.rel (%p475) target = $region84
        $region83: #{tpu_custom_call.1} parent=71 // pred_region
          %478 = dma.done %s471, 64
        $region84: #{tpu_custom_call.1} parent=71 // pred_fallthru
          _
        %s479 = sand.u32 %s41, 1
        %s480 = scalar_lea.sflag [#allocation3], %s479
        %s481 = sand.u32 %s41, 1
        %s482 = smul.addr %s481, 4
        %s483 = scalar_lea.vmem [#allocation2], %s482
        %p484 = pneg %p54
        %p485 = pneg %p51
        %s486 = sand.u32 %s33, 1
        %s487 = scalar_lea.sflag [#allocation6], %s486
        %s488 = sand.u32 %s67, 1
        %s489 = smul.addr %s488, 4
        %s490 = scalar_lea.vmem [#allocation5], %s489
        %p491 = pneg %p80
        %p492 = pneg %p77
        %s493 = sand.u32 %s33, 1
        %s494 = scalar_lea.sflag [#allocation6], %s493
        %s495 = sand.u32 %s93, 1
        %s496 = smul.addr %s495, 4
        %s497 = scalar_lea.vmem [#allocation7], %s496
        %p498 = pneg %p106
        %p499 = pneg %p103
        %p500 = pneg %p127
        %p501 = pneg %p124
        %p502 = pneg %p148
        %p503 = pneg %p145
        %p504 = pneg %p169
        %p505 = pneg %p166
        %p506 = pneg %p190
        %p507 = pneg %p187
        %p508 = pneg %p211
        %p509 = pneg %p208
        %p510 = pneg %p232
        %p511 = pneg %p229
        %p512 = pneg %p253
        %p513 = pneg %p250
        %p514 = pneg %p274
        %p515 = pneg %p271
        %p516 = pneg %p295
        %p517 = pneg %p292
        %p518 = pneg %p316
        %p519 = pneg %p313
        %p520 = pneg %p342
        %p521 = pneg %p339
        %s522 = sand.u32 %s329, 1
        %s523 = scalar_lea.sflag [#allocation4], %s522
        %s524 = sand.u32 %s329, 1
        %s525 = smul.addr %s524, 8
        %s526 = scalar_lea.vmem [#allocation8], %s525
        %v528 = vld [vmem:[%s456] sm:$0xf]
        %v529 = vld [vmem:[%s465] sm:$0xf]
        %v530 = vld [vmem:[%s474] sm:$0xf]
        %v531 = vld [vmem:[%s3] sm:$0xf]
        %v532 = vld [vmem:[%s3 + $0x4] sm:$0xf]
        %v533 = vld [vmem:[%s3 + $0x8] sm:$0xf]
        %v534 = vld [vmem:[%s3 + $0xc] sm:$0xf]
        %v535 = vld [vmem:[%s6] sm:$0x1]
        %v537 = vlaneseq
        %v538 = vshrl.u32 %v537, 7
        %v539 = vsub.s32 0, %v538
        %v540 = vrot.slane %v535, %v539
        %v546 = vunpack.c.l.b16 %v531
        %v547 = vunpack.c.l.b16 %v532
        %v548 = vunpack.c.l.b16 %v533
        %v549 = vunpack.c.l.b16 %v534
        %v550 = vpack.c.b16 %v547, %v546
        %v551 = vpack.c.b16 %v549, %v548
        %vm554 = vcmask 261120
        %v556 = vsel %vm554, %v528, 0
        %558 = vmatprep.subr.bf16.mxu0 0
        %559 = vmatpush1.bf16.msra.mxu0 %v550
        %560 = vmatprep.subr.bf16.mxu0 0
        %561 = vmatpush1.bf16.msra.mxu0 %v551
        %562 = vmatprep.subr.bf16.mxu0 0
        %563 = vmatpush1.bf16.msra.mxu0 0
        %564 = vmatprep.subr.bf16.mxu0 0
        %565 = vmatpush1.bf16.msra.mxu0 0
        %566 = vmatprep.subr.bf16.mxu0 0
        %567 = vmatpush1.bf16.msra.mxu0 0
        %568 = vmatprep.subr.bf16.mxu0 0
        %569 = vmatpush1.bf16.msra.mxu0 0
        %570 = vmatprep.subr.bf16.mxu0 0
        %571 = vmatpush1.bf16.msra.mxu0 0
        %572 = vmatprep.subr.bf16.mxu0 0
        %573 = vmatpush1.bf16.msra.mxu0 0
        %574 = vmatprep.subr.bf16.mxu0 0
        %575 = vmatpush1.bf16.msra.mxu0 0
        %576 = vmatprep.subr.bf16.mxu0 0
        %577 = vmatpush1.bf16.msra.mxu0 0
        %578 = vmatprep.subr.bf16.mxu0 0
        %579 = vmatpush1.bf16.msra.mxu0 0
        %580 = vmatprep.subr.bf16.mxu0 0
        %581 = vmatpush1.bf16.msra.mxu0 0
        %582 = vmatprep.subr.bf16.mxu0 0
        %583 = vmatpush1.bf16.msra.mxu0 0
        %584 = vmatprep.subr.bf16.mxu0 0
        %585 = vmatpush1.bf16.msra.mxu0 0
        %586 = vmatprep.subr.bf16.mxu0 0
        %587 = vmatpush1.bf16.msra.mxu0 0
        %588 = vmatprep.subr.bf16.mxu0 0
        %589 = vmatpush1.bf16.msra.mxu0 0
        %590 = vmatprep.mubr.bf16.mxu0 0
        %591 = vmatmul.mubr.bf16.gmra.mrb[0].mxu0 %v556
        %v592 = vpop.f32.mrb[0].mxu0
        %v593 = vadd.f32 %v540, %v592
        %v594 = vpop.f32.mrb[0].mxu0
        %v595 = vpop.f32.mrb[0].mxu0
        %v596 = vpop.f32.mrb[0].mxu0
        %597 = vdwg.mxu0
        %v598 = vld [vmem:[%s4] sm:$0xf]
        %v599 = vld [vmem:[%s4 + $0x4] sm:$0xf]
        %v600 = vld [vmem:[%s4 + $0x8] sm:$0xf]
        %v601 = vld [vmem:[%s4 + $0xc] sm:$0xf]
        %v602 = vld [vmem:[%s7] sm:$0x1]
        %v604 = vlaneseq
        %v605 = vshrl.u32 %v604, 7
        %v606 = vsub.s32 0, %v605
        %v607 = vrot.slane %v602, %v606
        %v613 = vunpack.c.l.b16 %v598
        %v614 = vunpack.c.l.b16 %v599
        %v615 = vunpack.c.l.b16 %v600
        %v616 = vunpack.c.l.b16 %v601
        %v617 = vpack.c.b16 %v614, %v613
        %v618 = vpack.c.b16 %v616, %v615
        %v622 = vsel %vm554, %v529, 0
        %624 = vmatprep.subr.bf16.mxu0 0
        %625 = vmatpush1.bf16.msra.mxu0 %v617
        %626 = vmatprep.subr.bf16.mxu0 0
        %627 = vmatpush1.bf16.msra.mxu0 %v618
        %628 = vmatprep.subr.bf16.mxu0 0
        %629 = vmatpush1.bf16.msra.mxu0 0
        %630 = vmatprep.subr.bf16.mxu0 0
        %631 = vmatpush1.bf16.msra.mxu0 0
        %632 = vmatprep.subr.bf16.mxu0 0
        %633 = vmatpush1.bf16.msra.mxu0 0
        %634 = vmatprep.subr.bf16.mxu0 0
        %635 = vmatpush1.bf16.msra.mxu0 0
        %636 = vmatprep.subr.bf16.mxu0 0
        %637 = vmatpush1.bf16.msra.mxu0 0
        %638 = vmatprep.subr.bf16.mxu0 0
        %639 = vmatpush1.bf16.msra.mxu0 0
        %640 = vmatprep.subr.bf16.mxu0 0
        %641 = vmatpush1.bf16.msra.mxu0 0
        %642 = vmatprep.subr.bf16.mxu0 0
        %643 = vmatpush1.bf16.msra.mxu0 0
        %644 = vmatprep.subr.bf16.mxu0 0
        %645 = vmatpush1.bf16.msra.mxu0 0
        %646 = vmatprep.subr.bf16.mxu0 0
        %647 = vmatpush1.bf16.msra.mxu0 0
        %648 = vmatprep.subr.bf16.mxu0 0
        %649 = vmatpush1.bf16.msra.mxu0 0
        %650 = vmatprep.subr.bf16.mxu0 0
        %651 = vmatpush1.bf16.msra.mxu0 0
        %652 = vmatprep.subr.bf16.mxu0 0
        %653 = vmatpush1.bf16.msra.mxu0 0
        %654 = vmatprep.subr.bf16.mxu0 0
        %655 = vmatpush1.bf16.msra.mxu0 0
        %656 = vmatprep.mubr.bf16.mxu0 0
        %657 = vmatmul.mubr.bf16.gmra.mrb[0].mxu0 %v622
        %v658 = vpop.f32.mrb[0].mxu0
        %v659 = vadd.f32 %v607, %v658
        %v660 = vpop.f32.mrb[0].mxu0
        %v661 = vpop.f32.mrb[0].mxu0
        %v662 = vpop.f32.mrb[0].mxu0
        %663 = vdwg.mxu0
        %v664 = vld [vmem:[%s5] sm:$0xff]
        %v665 = vld [vmem:[%s5 + $0x8] sm:$0xff]
        %v666 = vld [vmem:[%s5 + $0x10] sm:$0xff]
        %v667 = vld [vmem:[%s5 + $0x18] sm:$0xff]
        %v668 = vld [vmem:[%s8] sm:$0x3]
        %v670 = vlaneseq
        %v671 = vshrl.u32 %v670, 7
        %v672 = vsub.s32 0, %v671
        %v673 = vrot.slane %v668, %v672
        %v674 = vlaneseq
        %v675 = vshrl.u32 %v674, 7
        %v676 = vsub.s32 1, %v675
        %v677 = vrot.slane %v668, %v676
        %v684 = vunpack.c.l.b16 %v664
        %v685 = vunpack.c.h.b16 %v664
        %v686 = vunpack.c.l.b16 %v665
        %v687 = vunpack.c.h.b16 %v665
        %v688 = vunpack.c.l.b16 %v666
        %v689 = vunpack.c.h.b16 %v666
        %v690 = vunpack.c.l.b16 %v667
        %v691 = vunpack.c.h.b16 %v667
        %v692 = vpack.c.b16 %v686, %v684
        %v693 = vpack.c.b16 %v687, %v685
        %v694 = vpack.c.b16 %v690, %v688
        %v695 = vpack.c.b16 %v691, %v689
        %v701 = vsel %vm554, %v530, 0
        %703 = vmatprep.subr.bf16.mxu0 %v693
        %704 = vmatpush1.bf16.msra.mxu0 %v692
        %705 = vmatprep.subr.bf16.mxu0 %v695
        %706 = vmatpush1.bf16.msra.mxu0 %v694
        %707 = vmatprep.subr.bf16.mxu0 0
        %708 = vmatpush1.bf16.msra.mxu0 0
        %709 = vmatprep.subr.bf16.mxu0 0
        %710 = vmatpush1.bf16.msra.mxu0 0
        %711 = vmatprep.subr.bf16.mxu0 0
        %712 = vmatpush1.bf16.msra.mxu0 0
        %713 = vmatprep.subr.bf16.mxu0 0
        %714 = vmatpush1.bf16.msra.mxu0 0
        %715 = vmatprep.subr.bf16.mxu0 0
        %716 = vmatpush1.bf16.msra.mxu0 0
        %717 = vmatprep.subr.bf16.mxu0 0
        %718 = vmatpush1.bf16.msra.mxu0 0
        %719 = vmatprep.subr.bf16.mxu0 0
        %720 = vmatpush1.bf16.msra.mxu0 0
        %721 = vmatprep.subr.bf16.mxu0 0
        %722 = vmatpush1.bf16.msra.mxu0 0
        %723 = vmatprep.subr.bf16.mxu0 0
        %724 = vmatpush1.bf16.msra.mxu0 0
        %725 = vmatprep.subr.bf16.mxu0 0
        %726 = vmatpush1.bf16.msra.mxu0 0
        %727 = vmatprep.subr.bf16.mxu0 0
        %728 = vmatpush1.bf16.msra.mxu0 0
        %729 = vmatprep.subr.bf16.mxu0 0
        %730 = vmatpush1.bf16.msra.mxu0 0
        %731 = vmatprep.subr.bf16.mxu0 0
        %732 = vmatpush1.bf16.msra.mxu0 0
        %733 = vmatprep.subr.bf16.mxu0 0
        %734 = vmatpush1.bf16.msra.mxu0 0
        %735 = vmatprep.mubr.bf16.mxu0 0
        %736 = vmatmul.mubr.bf16.gmra.mrb[0].mxu0 %v701
        %v737 = vpop.f32.mrb[0].mxu0
        %v738 = vadd.f32 %v673, %v737
        %v739 = vpop.f32.mrb[0].mxu0
        %v740 = vadd.f32 %v677, %v739
        %v741 = vpop.f32.mrb[0].mxu0
        %v742 = vpop.f32.mrb[0].mxu0
        %743 = vdwg.mxu0
        %v744 = vxor.u32 %v738, 2147483648
        %v745 = vmul.f32 %v744, 1.442695
        %v746 = vpow.pop %v745
        %v747 = vadd.f32 %v746, 1.0
        %v748 = vrcp.pop %v747
        %v749 = vmul.f32 1.0, %v748
        %v750 = vunpack.c.l.bf16 %v528
        %752 = vrot.lane.b32.xlu0 %v750, 64
        %v753 = vpop.permute.xlu0 %752
        %v755 = vmul.f32 %v749, %v753
        %v756 = vunpack.c.l.bf16 %v529
        %758 = vrot.lane.b32.xlu0 %v756, 96
        %v759 = vpop.permute.xlu0 %758
        %v761 = vmul.f32 %v749, %v759
        %763 = vrot.lane.b32.xlu0 %v761, 96
        %v764 = vpop.permute.xlu0 %763
        %v766 = vadd.f32 %v755, %v764
        %v767 = vxor.u32 %v740, 2147483648
        %v768 = vmul.f32 %v767, 1.442695
        %v769 = vpow.pop %v768
        %v770 = vadd.f32 %v769, 1.0
        %v771 = vrcp.pop %v770
        %v772 = vmul.f32 1.0, %v771
        %v773 = vunpack.c.l.bf16 %v530
        %v774 = vmul.f32 %v772, %v773
        %776 = vrot.lane.b32.xlu0 %v774, 64
        %v777 = vpop.permute.xlu0 %776
        %v779 = vadd.f32 %v766, %v777
        %v780 = vxor.u32 %v593, 2147483648
        %v781 = vmul.f32 %v780, 1.442695
        %v782 = vpow.pop %v781
        %v783 = vadd.f32 %v782, 1.0
        %v784 = vrcp.pop %v783
        %v785 = vmul.f32 1.0, %v784
        %787 = vrot.lane.b32.xlu0 %v593, 96
        %v788 = vpop.permute.xlu0 %787
        %v790 = vmul.f32 %v785, %v788
        %v791 = vxor.u32 %v659, 2147483648
        %v792 = vmul.f32 %v791, 1.442695
        %v793 = vpow.pop %v792
        %v794 = vadd.f32 %v793, 1.0
        %v795 = vrcp.pop %v794
        %v796 = vmul.f32 1.0, %v795
        %798 = vrot.lane.b32.xlu0 %v659, 96
        %v799 = vpop.permute.xlu0 %798
        %v801 = vmul.f32 %v796, %v799
        %803 = vrot.lane.b32.xlu0 %v738, 96
        %v804 = vpop.permute.xlu0 %803
        %v806 = vmul.f32 %v749, %v804
        %v807 = vld [vmem:[%s11] sm:$0x1]
        %v808 = vld [vmem:[%s11 + $0x1] sm:$0x1]
        %v809 = vld [vmem:[%s11 + $0x2] sm:$0x1]
        %v810 = vld [vmem:[%s11 + $0x3] sm:$0x1]
        %v811 = vld [vmem:[%s11 + $0x4] sm:$0x1]
        %v812 = vld [vmem:[%s12] sm:$0x1]
        %v813 = vld [vmem:[%s12 + $0x1] sm:$0x1]
        %v814 = vld [vmem:[%s12 + $0x2] sm:$0x1]
        %816 = vrot.lane.b32.xlu0 %v801, 32
        %v817 = vpop.permute.xlu0 %816
        %820 = vrot.lane.b32.xlu0 %v806, 64
        %v821 = vpop.permute.xlu0 %820
        %v823 = vsel %vm554, %v790, %v817
        %vm824 = vcmask 523264
        %v825 = vsel %vm824, %v823, %v821
        %vm826 = vcmask 785408
        %v827 = vsel %vm826, %v825, 0.0
        %828 = vadd.xlane.f32.xlu0 %v827
        %v829 = vpop.xlane.xlu0 %828
        %v830 = vrcp.pop 96.0
        %v831 = vmul.f32 %v829, %v830
        %v832 = vsub.f32 %v825, %v831
        %v833 = vmul.f32 %v832, %v832
        %v834 = vsel %vm826, %v833, 0.0
        %835 = vadd.xlane.f32.xlu0 %v834
        %v836 = vpop.xlane.xlu0 %835
        %v837 = vmul.f32 %v836, %v830
        %v838 = vadd.f32 %v837, 1e-05
        %v839 = vrsqrt.pop %v838
        %v840 = vmul.f32 %v832, %v839
        %v841 = vlaneseq
        %v842 = vshrl.u32 %v841, 7
        %v843 = vsub.s32 0, %v842
        %v844 = vrot.slane %v807, %v843
        %v845 = vmul.f32 %v840, %v844
        %v846 = vlaneseq
        %v847 = vshrl.u32 %v846, 7
        %v848 = vsub.s32 0, %v847
        %v849 = vrot.slane %v808, %v848
        %v850 = vadd.f32 %v845, %v849
        %v851 = vpack.c.bf16 %v850, %v850
        %v852 = vld [vmem:[%s9] sm:$0xf]
        %v853 = vld [vmem:[%s9 + $0x4] sm:$0xf]
        %v854 = vld [vmem:[%s9 + $0x8] sm:$0xf]
        %v855 = vld [vmem:[%s9 + $0xc] sm:$0xf]
        %v856 = vld [vmem:[%s9 + $0x10] sm:$0xf]
        %v857 = vld [vmem:[%s9 + $0x14] sm:$0xf]
        %v858 = vld [vmem:[%s9 + $0x18] sm:$0xf]
        %v859 = vld [vmem:[%s9 + $0x1c] sm:$0xf]
        %v860 = vld [vmem:[%s9 + $0x20] sm:$0xf]
        %v861 = vld [vmem:[%s9 + $0x24] sm:$0xf]
        %v862 = vld [vmem:[%s9 + $0x28] sm:$0xf]
        %v863 = vld [vmem:[%s9 + $0x2c] sm:$0xf]
        %v864 = vlaneseq
        %v865 = vshrl.u32 %v864, 7
        %v866 = vsub.s32 0, %v865
        %v867 = vrot.slane %v814, %v866
        %v880 = vunpack.c.l.b16 %v852
        %v881 = vunpack.c.l.b16 %v853
        %v882 = vunpack.c.l.b16 %v854
        %v883 = vunpack.c.l.b16 %v855
        %v884 = vunpack.c.l.b16 %v856
        %v885 = vunpack.c.l.b16 %v857
        %v886 = vunpack.c.l.b16 %v858
        %v887 = vunpack.c.l.b16 %v859
        %v888 = vunpack.c.l.b16 %v860
        %v889 = vunpack.c.l.b16 %v861
        %v890 = vunpack.c.l.b16 %v862
        %v891 = vunpack.c.l.b16 %v863
        %v892 = vpack.c.b16 %v881, %v880
        %v893 = vpack.c.b16 %v883, %v882
        %v894 = vpack.c.b16 %v885, %v884
        %v895 = vpack.c.b16 %v887, %v886
        %v896 = vpack.c.b16 %v889, %v888
        %v897 = vpack.c.b16 %v891, %v890
        %v905 = vsel %vm826, %v851, 0
        %907 = vmatprep.subr.bf16.mxu0 0
        %908 = vmatpush1.bf16.msra.mxu0 %v892
        %909 = vmatprep.subr.bf16.mxu0 0
        %910 = vmatpush1.bf16.msra.mxu0 %v893
        %911 = vmatprep.subr.bf16.mxu0 0
        %912 = vmatpush1.bf16.msra.mxu0 %v894
        %913 = vmatprep.subr.bf16.mxu0 0
        %914 = vmatpush1.bf16.msra.mxu0 %v895
        %915 = vmatprep.subr.bf16.mxu0 0
        %916 = vmatpush1.bf16.msra.mxu0 %v896
        %917 = vmatprep.subr.bf16.mxu0 0
        %918 = vmatpush1.bf16.msra.mxu0 %v897
        %919 = vmatprep.subr.bf16.mxu0 0
        %920 = vmatpush1.bf16.msra.mxu0 0
        %921 = vmatprep.subr.bf16.mxu0 0
        %922 = vmatpush1.bf16.msra.mxu0 0
        %923 = vmatprep.subr.bf16.mxu0 0
        %924 = vmatpush1.bf16.msra.mxu0 0
        %925 = vmatprep.subr.bf16.mxu0 0
        %926 = vmatpush1.bf16.msra.mxu0 0
        %927 = vmatprep.subr.bf16.mxu0 0
        %928 = vmatpush1.bf16.msra.mxu0 0
        %929 = vmatprep.subr.bf16.mxu0 0
        %930 = vmatpush1.bf16.msra.mxu0 0
        %931 = vmatprep.subr.bf16.mxu0 0
        %932 = vmatpush1.bf16.msra.mxu0 0
        %933 = vmatprep.subr.bf16.mxu0 0
        %934 = vmatpush1.bf16.msra.mxu0 0
        %935 = vmatprep.subr.bf16.mxu0 0
        %936 = vmatpush1.bf16.msra.mxu0 0
        %937 = vmatprep.subr.bf16.mxu0 0
        %938 = vmatpush1.bf16.msra.mxu0 0
        %939 = vmatprep.mubr.bf16.mxu0 0
        %940 = vmatmul.mubr.bf16.gmra.mrb[0].mxu0 %v905
        %v941 = vpop.f32.mrb[0].mxu0
        %v942 = vadd.f32 %v867, %v941
        %v943 = vpop.f32.mrb[0].mxu0
        %v944 = vpop.f32.mrb[0].mxu0
        %v945 = vpop.f32.mrb[0].mxu0
        %946 = vdwg.mxu0
        %947 = vadd.xlane.f32.xlu0 %v942
        %v948 = vpop.xlane.xlu0 %947
        %v949 = vrcp.pop 128.0
        %v950 = vmul.f32 %v948, %v949
        %v951 = vsub.f32 %v942, %v950
        %v952 = vmul.f32 %v951, %v951
        %953 = vadd.xlane.f32.xlu0 %v952
        %v954 = vpop.xlane.xlu0 %953
        %v955 = vmul.f32 %v954, %v949
        %v956 = vadd.f32 %v955, 1e-05
        %v957 = vrsqrt.pop %v956
        %v958 = vmul.f32 %v951, %v957
        %v959 = vlaneseq
        %v960 = vshrl.u32 %v959, 7
        %v961 = vsub.s32 0, %v960
        %v962 = vrot.slane %v812, %v961
        %v963 = vmul.f32 %v958, %v962
        %v964 = vlaneseq
        %v965 = vshrl.u32 %v964, 7
        %v966 = vsub.s32 0, %v965
        %v967 = vrot.slane %v813, %v966
        %v968 = vadd.f32 %v963, %v967
        %v969 = vmax.f32 %v968, 0.0
        %v970 = vpack.c.bf16 %v969, %v969
        %v971 = vld [vmem:[%s10] sm:$0xf]
        %v972 = vld [vmem:[%s10 + $0x4] sm:$0xf]
        %v973 = vld [vmem:[%s10 + $0x8] sm:$0xf]
        %v974 = vld [vmem:[%s10 + $0xc] sm:$0xf]
        %v975 = vld [vmem:[%s10 + $0x10] sm:$0xf]
        %v976 = vld [vmem:[%s10 + $0x14] sm:$0xf]
        %v977 = vld [vmem:[%s10 + $0x18] sm:$0xf]
        %v978 = vld [vmem:[%s10 + $0x1c] sm:$0xf]
        %v979 = vld [vmem:[%s10 + $0x20] sm:$0xf]
        %v980 = vld [vmem:[%s10 + $0x24] sm:$0xf]
        %v981 = vld [vmem:[%s10 + $0x28] sm:$0xf]
        %v982 = vld [vmem:[%s10 + $0x2c] sm:$0xf]
        %v983 = vld [vmem:[%s10 + $0x30] sm:$0xf]
        %v984 = vld [vmem:[%s10 + $0x34] sm:$0xf]
        %v985 = vld [vmem:[%s10 + $0x38] sm:$0xf]
        %v986 = vld [vmem:[%s10 + $0x3c] sm:$0xf]
        %v987 = vlaneseq
        %v988 = vshrl.u32 %v987, 7
        %v989 = vsub.s32 0, %v988
        %v990 = vrot.slane %v811, %v989
        %v1007 = vunpack.c.l.b16 %v971
        %v1008 = vunpack.c.l.b16 %v972
        %v1009 = vunpack.c.l.b16 %v973
        %v1010 = vunpack.c.l.b16 %v974
        %v1011 = vunpack.c.l.b16 %v975
        %v1012 = vunpack.c.l.b16 %v976
        %v1013 = vunpack.c.l.b16 %v977
        %v1014 = vunpack.c.l.b16 %v978
        %v1015 = vunpack.c.l.b16 %v979
        %v1016 = vunpack.c.l.b16 %v980
        %v1017 = vunpack.c.l.b16 %v981
        %v1018 = vunpack.c.l.b16 %v982
        %v1019 = vunpack.c.l.b16 %v983
        %v1020 = vunpack.c.l.b16 %v984
        %v1021 = vunpack.c.l.b16 %v985
        %v1022 = vunpack.c.l.b16 %v986
        %v1023 = vpack.c.b16 %v1008, %v1007
        %v1024 = vpack.c.b16 %v1010, %v1009
        %v1025 = vpack.c.b16 %v1012, %v1011
        %v1026 = vpack.c.b16 %v1014, %v1013
        %v1027 = vpack.c.b16 %v1016, %v1015
        %v1028 = vpack.c.b16 %v1018, %v1017
        %v1029 = vpack.c.b16 %v1020, %v1019
        %v1030 = vpack.c.b16 %v1022, %v1021
        %1039 = vmatprep.subr.bf16.mxu0 0
        %1040 = vmatpush1.bf16.msra.mxu0 %v1023
        %1041 = vmatprep.subr.bf16.mxu0 0
        %1042 = vmatpush1.bf16.msra.mxu0 %v1024
        %1043 = vmatprep.subr.bf16.mxu0 0
        %1044 = vmatpush1.bf16.msra.mxu0 %v1025
        %1045 = vmatprep.subr.bf16.mxu0 0
        %1046 = vmatpush1.bf16.msra.mxu0 %v1026
        %1047 = vmatprep.subr.bf16.mxu0 0
        %1048 = vmatpush1.bf16.msra.mxu0 %v1027
        %1049 = vmatprep.subr.bf16.mxu0 0
        %1050 = vmatpush1.bf16.msra.mxu0 %v1028
        %1051 = vmatprep.subr.bf16.mxu0 0
        %1052 = vmatpush1.bf16.msra.mxu0 %v1029
        %1053 = vmatprep.subr.bf16.mxu0 0
        %1054 = vmatpush1.bf16.msra.mxu0 %v1030
        %1055 = vmatprep.subr.bf16.mxu0 0
        %1056 = vmatpush1.bf16.msra.mxu0 0
        %1057 = vmatprep.subr.bf16.mxu0 0
        %1058 = vmatpush1.bf16.msra.mxu0 0
        %1059 = vmatprep.subr.bf16.mxu0 0
        %1060 = vmatpush1.bf16.msra.mxu0 0
        %1061 = vmatprep.subr.bf16.mxu0 0
        %1062 = vmatpush1.bf16.msra.mxu0 0
        %1063 = vmatprep.subr.bf16.mxu0 0
        %1064 = vmatpush1.bf16.msra.mxu0 0
        %1065 = vmatprep.subr.bf16.mxu0 0
        %1066 = vmatpush1.bf16.msra.mxu0 0
        %1067 = vmatprep.subr.bf16.mxu0 0
        %1068 = vmatpush1.bf16.msra.mxu0 0
        %1069 = vmatprep.subr.bf16.mxu0 0
        %1070 = vmatpush1.bf16.msra.mxu0 0
        %1071 = vmatprep.mubr.bf16.mxu0 0
        %1072 = vmatmul.mubr.bf16.gmra.mrb[0].mxu0 %v970
        %v1073 = vpop.f32.mrb[0].mxu0
        %v1074 = vadd.f32 %v990, %v1073
        %v1075 = vpop.f32.mrb[0].mxu0
        %v1076 = vpop.f32.mrb[0].mxu0
        %v1077 = vpop.f32.mrb[0].mxu0
        %1078 = vdwg.mxu0
        %v1079 = vsel %vm826, %v1074, 0.0
        %1080 = vadd.xlane.f32.xlu0 %v1079
        %v1081 = vpop.xlane.xlu0 %1080
        %v1082 = vmul.f32 %v1081, %v830
        %v1083 = vsub.f32 %v1074, %v1082
        %v1084 = vmul.f32 %v1083, %v1083
        %v1085 = vsel %vm826, %v1084, 0.0
        %1086 = vadd.xlane.f32.xlu0 %v1085
        %v1087 = vpop.xlane.xlu0 %1086
        %v1088 = vmul.f32 %v1087, %v830
        %v1089 = vadd.f32 %v1088, 1e-05
        %v1090 = vrsqrt.pop %v1089
        %v1091 = vmul.f32 %v1083, %v1090
        %v1092 = vlaneseq
        %v1093 = vshrl.u32 %v1092, 7
        %v1094 = vsub.s32 0, %v1093
        %v1095 = vrot.slane %v809, %v1094
        %v1096 = vmul.f32 %v1091, %v1095
        %v1097 = vlaneseq
        %v1098 = vshrl.u32 %v1097, 7
        %v1099 = vsub.s32 0, %v1098
        %v1100 = vrot.slane %v810, %v1099
        %v1101 = vadd.f32 %v1096, %v1100
        %1103 = vrot.lane.b32.xlu0 %v779, 32
        %v1104 = vpop.permute.xlu0 %1103
        %v1106 = vsel %vm826, %v1101, %v1104
        %1107 = vadd.xlane.f32.xlu0 %v1106
        %v1108 = vpop.xlane.xlu0 %1107
        %v1109 = vmul.f32 %v1108, %v949
        %v1110 = vsub.f32 %v1106, %v1109
        %v1111 = vmul.f32 %v1110, %v1110
        %1112 = vadd.xlane.f32.xlu0 %v1111
        %v1113 = vpop.xlane.xlu0 %1112
        %v1114 = vmul.f32 %v1113, %v949
        %v1115 = vadd.f32 %v1114, 1e-05
        %v1116 = vrsqrt.pop %v1115
        %v1117 = vmul.f32 %v1110, %v1116
        %v1118 = vmul.f32 %v1117, %v962
        %v1119 = vadd.f32 %v1118, %v967
        %v1120 = vmax.f32 %v1119, 0.0
        %v1121 = vpack.c.bf16 %v1120, %v1120
        %1122 = vmatprep.subr.bf16.mxu0 0
        %1123 = vmatpush1.bf16.msra.mxu0 %v1023
        %1124 = vmatprep.subr.bf16.mxu0 0
        %1125 = vmatpush1.bf16.msra.mxu0 %v1024
        %1126 = vmatprep.subr.bf16.mxu0 0
        %1127 = vmatpush1.bf16.msra.mxu0 %v1025
        %1128 = vmatprep.subr.bf16.mxu0 0
        %1129 = vmatpush1.bf16.msra.mxu0 %v1026
        %1130 = vmatprep.subr.bf16.mxu0 0
        %1131 = vmatpush1.bf16.msra.mxu0 %v1027
        %1132 = vmatprep.subr.bf16.mxu0 0
        %1133 = vmatpush1.bf16.msra.mxu0 %v1028
        %1134 = vmatprep.subr.bf16.mxu0 0
        %1135 = vmatpush1.bf16.msra.mxu0 %v1029
        %1136 = vmatprep.subr.bf16.mxu0 0
        %1137 = vmatpush1.bf16.msra.mxu0 %v1030
        %1138 = vmatprep.subr.bf16.mxu0 0
        %1139 = vmatpush1.bf16.msra.mxu0 0
        %1140 = vmatprep.subr.bf16.mxu0 0
        %1141 = vmatpush1.bf16.msra.mxu0 0
        %1142 = vmatprep.subr.bf16.mxu0 0
        %1143 = vmatpush1.bf16.msra.mxu0 0
        %1144 = vmatprep.subr.bf16.mxu0 0
        %1145 = vmatpush1.bf16.msra.mxu0 0
        %1146 = vmatprep.subr.bf16.mxu0 0
        %1147 = vmatpush1.bf16.msra.mxu0 0
        %1148 = vmatprep.subr.bf16.mxu0 0
        %1149 = vmatpush1.bf16.msra.mxu0 0
        %1150 = vmatprep.subr.bf16.mxu0 0
        %1151 = vmatpush1.bf16.msra.mxu0 0
        %1152 = vmatprep.subr.bf16.mxu0 0
        %1153 = vmatpush1.bf16.msra.mxu0 0
        %1154 = vmatprep.mubr.bf16.mxu0 0
        %1155 = vmatmul.mubr.bf16.gmra.mrb[0].mxu0 %v1121
        %v1156 = vpop.f32.mrb[0].mxu0
        %v1157 = vadd.f32 %v990, %v1156
        %v1158 = vpop.f32.mrb[0].mxu0
        %v1159 = vpop.f32.mrb[0].mxu0
        %v1160 = vpop.f32.mrb[0].mxu0
        %1161 = vdwg.mxu0
        %v1162 = vsel %vm826, %v1157, 0.0
        %1163 = vadd.xlane.f32.xlu0 %v1162
        %v1164 = vpop.xlane.xlu0 %1163
        %v1165 = vmul.f32 %v1164, %v830
        %v1166 = vsub.f32 %v1157, %v1165
        %v1167 = vmul.f32 %v1166, %v1166
        %v1168 = vsel %vm826, %v1167, 0.0
        %1169 = vadd.xlane.f32.xlu0 %v1168
        %v1170 = vpop.xlane.xlu0 %1169
        %v1171 = vmul.f32 %v1170, %v830
        %v1172 = vadd.f32 %v1171, 1e-05
        %v1173 = vrsqrt.pop %v1172
        %v1174 = vmul.f32 %v1166, %v1173
        %v1175 = vmul.f32 %v1174, %v1095
        %v1176 = vadd.f32 %v1175, %v1100
        %1177 = vst.msk [vmem:[%s526] sm:$0xff] %vm826, %v1176
        %s1178 = sand.u32 %s329, 1
        %s1179 = scalar_lea.sflag [#allocation4], %s1178
        %s1180 = sand.u32 %s329, 1
        %s1181 = smul.addr %s1180, 8
        %s1182 = scalar_lea.vmem [#allocation8], %s1181
        // Predicated region
        $region85: #{tpu_custom_call.1} parent=71 // pred_check
          %p1183 = pneg %p339
        $region86: #{tpu_custom_call.1} parent=71 // pred_check_branch
          %1185 = sbr.rel (%p1183) target = $region88
        $region87: #{tpu_custom_call.1} parent=71 // pred_region
          %s1187 = ssub.s32 128, 128
          %1188 = vsyncadd %s1179, %s1187
          %s1189 = smul.addr %s33, 128
          %s1190 = scalar_lea.hbm %s13, %s1189
          %s1192 = sshll.u32 %s1182, 4
          %s1193 = int_to_ptr.vmem [resolvable:$true] %s1192
          %1195 = dma.vmem_to_hbm [thread:$0]  %s1193, 128, %s1190, %s1179
        $region88: #{tpu_custom_call.1} parent=71 // pred_fallthru
          _
      $region72: #{tpu_custom_call.1} parent=5 // pred_fallthru
        _
      %p1196 = scmp.le.s32.totalorder 2, %s28
      // Predicated region
      $region89: #{tpu_custom_call.1} parent=5 // pred_check
        %p1197 = pneg %p1196
      $region90: #{tpu_custom_call.1} parent=5 // pred_check_branch
        %1199 = sbr.rel (%p1197) target = $region92
      $region91: #{tpu_custom_call.1} parent=5 // pred_region
        %s1200 = ssub.s32 %s28, 2
        // Predicated region
        $region93: #{tpu_custom_call.1} parent=91 // pred_check
          %p1201 = pneg %p345
        $region94: #{tpu_custom_call.1} parent=91 // pred_check_branch
          %1203 = sbr.rel (%p1201) target = $region96
        $region95: #{tpu_custom_call.1} parent=91 // pred_region
          %s1204 = sand.u32 %s330, 1
          %s1205 = scalar_lea.sflag [#allocation4], %s1204
          %s1206 = sand.u32 %s330, 1
          %s1207 = smul.addr %s1206, 8
          %s1208 = scalar_lea.vmem [#allocation8], %s1207
          %1209 = dma.done %s1205, 128
        $region96: #{tpu_custom_call.1} parent=91 // pred_fallthru
          _
      $region92: #{tpu_custom_call.1} parent=5 // pred_fallthru
        _
    $region6: #{tpu_custom_call.1} parent=1 // loop_footer
      %s32 = sadd.s32 1, %s28
    $region7: #{tpu_custom_call.1} parent=1 // loop_footer_branch
      %27 = sbr.rel target = $region3
    $region8: #{tpu_custom_call.1} parent=1 // loop_exit
      _
    %1210 = vsyncpa [#allocation3], 1
    %s1211 = scalar_lea.sflag [#allocation3], 1
    %1212 = vsyncpa %s1211, 1
    %1213 = vsyncpa [#allocation6], 1
    %s1214 = scalar_lea.sflag [#allocation6], 1
    %1215 = vsyncpa %s1214, 1
    %1216 = vsyncpa [#allocation4], 1
    %s1217 = scalar_lea.sflag [#allocation4], 1
    %1218 = vsyncpa %s1217, 1

</llo_original>
